<compile_context>
chip_gen: v6e
topology: v6e:2x2x1
jax: 0.10.0
libtpu: 0.0.40
codegen_flags: <defaults>
</compile_context>

<pallas_src>
import string

import jax
import jax.numpy as jnp
from jax.experimental import pallas as pl
from jax.experimental.pallas import tpu as pltpu

# ---------------- model hyper-parameters (small, TPU-tile friendly) --------
VOCAB = 256
D_MODEL = 128
N_HEADS = 2
HEAD_DIM = D_MODEL // N_HEADS
N_LAYERS = 2
FFN = 256
S_MAX = 16
TILE = 8          # sequences decoded per kernel step (f32 sublane width)
LN_EPS = 1e-5


# ---------------------------- Pallas kernel --------------------------------
def _decode_kernel(minplen_ref,                        # scalar prefetch (SMEM) [T]
                   tokens_ref, plens_ref, gumbel_ref,  # [8,S] i32, [8,1] i32, [S,8,V] f32
                   tok_emb_ref, pos_emb_ref,           # [V,D] bf16, [S,D] f32
                   wqkv_ref, wo_ref,                   # [L,D,3D] bf16, [L,D,D] bf16
                   ln1g_ref, ln1b_ref,                 # [L,1,D] f32
                   w1_ref, b1_ref,                     # [L,D,F] bf16, [L,1,F] f32
                   w2_ref, b2_ref,                     # [L,F,D] bf16, [L,1,D] f32
                   ln2g_ref, ln2b_ref,                 # [L,1,D] f32
                   lnfg_ref, lnfb_ref,                 # [1,D] f32
                   wlm_ref,                            # [D,V] bf16
                   out_ref,                            # [8,S] i32
                   kcache, vcache, samp_ref):          # VMEM scratch
    t = pl.program_id(0)
    min_plen = minplen_ref[t]

    # Stale VMEM from a previous kernel may hold Inf/NaN that would leak
    # through the masked attention (0 * Inf = NaN); zero caches once.
    @pl.when(t == 0)
    def _():
        kcache[...] = jnp.zeros_like(kcache)
        vcache[...] = jnp.zeros_like(vcache)

    scale = jnp.float32(1.0 / (HEAD_DIM ** 0.5))
    neg_inf = jnp.float32(-1e30)
    lane_s = jax.lax.broadcasted_iota(jnp.int32, (TILE, S_MAX), 1)   # [8,16]
    lane_v = jax.lax.broadcasted_iota(jnp.int32, (1, VOCAB), 1)      # [1,256]
    lane_vf = lane_v.astype(jnp.float32)
    sub_s = jax.lax.broadcasted_iota(jnp.int32, (S_MAX, 1), 0)       # [16,1]

    tok_tile = tokens_ref[...]     # [8,16] prompt tokens (0-padded)
    plen_col = plens_ref[...]      # [8,1]  per-sequence prompt lengths

    def layernorm(h, g, beta):
        mu = jnp.mean(h, axis=-1, keepdims=True)
        var = jnp.mean((h - mu) * (h - mu), axis=-1, keepdims=True)
        return (h - mu) * jax.lax.rsqrt(var + LN_EPS) * g + beta

    def step(pos, carry):
        cur_tok, outvec = carry                    # [8,1] i32, [8,16] i32
        outvec = jnp.where(lane_s == pos, cur_tok, outvec)

        # embedding gather via one-hot matmul -- M=8 so the MXU is used sanely
        onehot = (lane_v == cur_tok).astype(jnp.bfloat16)            # [8,256]
        x = jnp.dot(onehot, tok_emb_ref[...],
                    preferred_element_type=jnp.float32)              # [8,128]
        x = x + pos_emb_ref[pl.ds(pos, 1), :]

        for l in range(N_LAYERS):
            # ---- attention block (fused QKV, KV cache, new row only) ----
            h = layernorm(x, ln1g_ref[l], ln1b_ref[l])
            qkv = jnp.dot(h.astype(jnp.bfloat16), wqkv_ref[l],
                          preferred_element_type=jnp.float32)        # [8,384]
            q = qkv[:, 0:D_MODEL] * scale
            k = qkv[:, D_MODEL:2 * D_MODEL]
            v = qkv[:, 2 * D_MODEL:3 * D_MODEL]

            row = l * S_MAX
            kcache[pl.ds(row + pos, 1)] = k[None]                    # [1,8,128]
            vcache[pl.ds(row + pos, 1)] = v[None]
            kfull = kcache[row:row + S_MAX]                          # [16,8,128]
            vfull = vcache[row:row + S_MAX]
            valid = sub_s <= pos                                     # [16,1]

            heads = []
            for hd in range(N_HEADS):
                lo = hd * HEAD_DIM
                hi = lo + HEAD_DIM
                qh = q[:, lo:hi]                                     # [8,64]
                kh = kfull[:, :, lo:hi]                              # [16,8,64]
                vh = vfull[:, :, lo:hi]
                s = jnp.sum(qh[None, :, :] * kh, axis=-1)            # [16,8]
                s = jnp.where(valid, s, neg_inf)
                s = s - jnp.max(s, axis=0, keepdims=True)
                p = jnp.exp(s)
                p = p / jnp.sum(p, axis=0, keepdims=True)
                heads.append(jnp.sum(p[:, :, None] * vh, axis=0))    # [8,64]
            ctx = jnp.concatenate(heads, axis=-1)                    # [8,128]
            x = x + jnp.dot(ctx.astype(jnp.bfloat16), wo_ref[l],
                            preferred_element_type=jnp.float32)

            # ---- MLP block ----
            h2 = layernorm(x, ln2g_ref[l], ln2b_ref[l])
            ff = jnp.dot(h2.astype(jnp.bfloat16), w1_ref[l],
                         preferred_element_type=jnp.float32) + b1_ref[l]
            ff = jax.nn.gelu(ff, approximate=True)
            x = x + jnp.dot(ff.astype(jnp.bfloat16), w2_ref[l],
                            preferred_element_type=jnp.float32) + b2_ref[l]

        # ---- LM head + Gumbel-max sampling: skipped while every sequence
        #      in the tile is still inside its prompt ----
        @pl.when(pos + 1 >= min_plen)
        def _():
            xf = layernorm(x, lnfg_ref[...], lnfb_ref[...])
            logits = jnp.dot(xf.astype(jnp.bfloat16), wlm_ref[...],
                             preferred_element_type=jnp.float32)     # [8,256]
            y = logits + gumbel_ref[pos]                             # [8,256]
            ymax = jnp.max(y, axis=-1, keepdims=True)
            samp = jnp.max(jnp.where(y >= ymax, lane_vf, jnp.float32(-1.0)),
                           axis=-1, keepdims=True)                   # [8,1]
            samp_ref[...] = samp.astype(jnp.int32)

        sampled = samp_ref[...]                                      # [8,1]
        nxt_prompt = jnp.sum(jnp.where(lane_s == pos + 1, tok_tile, 0),
                             axis=-1, keepdims=True)                 # [8,1]
        nxt = jnp.where(pos + 1 < plen_col, nxt_prompt, sampled)
        return nxt.astype(jnp.int32), outvec

    cur0 = tok_tile[:, 0:1]
    out0 = jnp.zeros((TILE, S_MAX), jnp.int32)
    # Loop over S_MAX-1 positions; the final carried token is written directly
    # (no wasted transformer pass whose sampled output would be discarded).
    cur, outvec = jax.lax.fori_loop(0, S_MAX - 1, step, (cur0, out0))
    out_ref[...] = jnp.where(lane_s == S_MAX - 1, cur, outvec)


def _const_spec(shape):
    nd = len(shape)
    return pl.BlockSpec(shape, lambda *_: (0,) * nd)


@jax.jit
def _decode_batch(tokens, plens, gumbel, params):
    """tokens [B_pad,S] i32, plens [B_pad] i32, gumbel [S,B_pad,V] f32."""
    B_pad = tokens.shape[0]
    num_tiles = B_pad // TILE
    tile_min_plens = jnp.min(plens.reshape(num_tiles, TILE), axis=1).astype(jnp.int32)
    plens2d = plens.reshape(B_pad, 1).astype(jnp.int32)

    grid_spec = pltpu.PrefetchScalarGridSpec(
        num_scalar_prefetch=1,
        grid=(num_tiles,),
        in_specs=[
            pl.BlockSpec((TILE, S_MAX), lambda t, *_: (t, 0)),            # tokens
            pl.BlockSpec((TILE, 1), lambda t, *_: (t, 0)),                # plens
            pl.BlockSpec((S_MAX, TILE, VOCAB), lambda t, *_: (0, t, 0)),  # gumbel
            _const_spec((VOCAB, D_MODEL)),                                # tok_emb
            _const_spec((S_MAX, D_MODEL)),                                # pos_emb
            _const_spec((N_LAYERS, D_MODEL, 3 * D_MODEL)),                # wqkv
            _const_spec((N_LAYERS, D_MODEL, D_MODEL)),                    # wo
            _const_spec((N_LAYERS, 1, D_MODEL)),                          # ln1g
            _const_spec((N_LAYERS, 1, D_MODEL)),                          # ln1b
            _const_spec((N_LAYERS, D_MODEL, FFN)),                        # w1
            _const_spec((N_LAYERS, 1, FFN)),                              # b1
            _const_spec((N_LAYERS, FFN, D_MODEL)),                        # w2
            _const_spec((N_LAYERS, 1, D_MODEL)),                          # b2
            _const_spec((N_LAYERS, 1, D_MODEL)),                          # ln2g
            _const_spec((N_LAYERS, 1, D_MODEL)),                          # ln2b
            _const_spec((1, D_MODEL)),                                    # lnfg
            _const_spec((1, D_MODEL)),                                    # lnfb
            _const_spec((D_MODEL, VOCAB)),                                # wlm
        ],
        out_specs=pl.BlockSpec((TILE, S_MAX), lambda t, *_: (t, 0)),
        scratch_shapes=[
            pltpu.VMEM((N_LAYERS * S_MAX, TILE, D_MODEL), jnp.float32),   # K cache
            pltpu.VMEM((N_LAYERS * S_MAX, TILE, D_MODEL), jnp.float32),   # V cache
            pltpu.VMEM((TILE, 1), jnp.int32),                             # sampled tok
        ],
    )
    return pl.pallas_call(
        _decode_kernel,
        out_shape=jax.ShapeDtypeStruct((B_pad, S_MAX), jnp.int32),
        grid_spec=grid_spec,
        compiler_params=pltpu.CompilerParams(
            dimension_semantics=("parallel",)),
    )(tile_min_plens, tokens, plens2d, gumbel,
      params["tok_emb"], params["pos_emb"],
      params["wqkv"], params["wo"],
      params["ln1g"], params["ln1b"],
      params["w1"], params["b1"], params["w2"], params["b2"],
      params["ln2g"], params["ln2b"],
      params["lnfg"], params["lnfb"], params["wlm"])


# ---------------------------- parameters ------------------------------------
def init_params(key):
    ks = jax.random.split(key, 8)
    std = 0.02

    def nrm(k, shape, dtype=jnp.bfloat16):
        return (std * jax.random.normal(k, shape, dtype=jnp.float32)).astype(dtype)

    return {
        "tok_emb": nrm(ks[0], (VOCAB, D_MODEL)),
        "pos_emb": nrm(ks[1], (S_MAX, D_MODEL), jnp.float32),
        "wqkv": nrm(ks[2], (N_LAYERS, D_MODEL, 3 * D_MODEL)),
        "wo": nrm(ks[3], (N_LAYERS, D_MODEL, D_MODEL)),
        "ln1g": jnp.ones((N_LAYERS, 1, D_MODEL), jnp.float32),
        "ln1b": jnp.zeros((N_LAYERS, 1, D_MODEL), jnp.float32),
        "w1": nrm(ks[4], (N_LAYERS, D_MODEL, FFN)),
        "b1": jnp.zeros((N_LAYERS, 1, FFN), jnp.float32),
        "w2": nrm(ks[5], (N_LAYERS, FFN, D_MODEL)),
        "b2": jnp.zeros((N_LAYERS, 1, D_MODEL), jnp.float32),
        "ln2g": jnp.ones((N_LAYERS, 1, D_MODEL), jnp.float32),
        "ln2b": jnp.zeros((N_LAYERS, 1, D_MODEL), jnp.float32),
        "lnfg": jnp.ones((1, D_MODEL), jnp.float32),
        "lnfb": jnp.zeros((1, D_MODEL), jnp.float32),
        "wlm": nrm(ks[6], (D_MODEL, VOCAB)),
    }


# ---------------------------- MLM.generate_direct ---------------------------
def _tokenize(text):
    ids = [ord(c) % VOCAB for c in text][: S_MAX // 2]
    if not ids:
        ids = [1]
    return ids


def _detokenize(ids):
    alphabet = string.ascii_lowercase + string.ascii_uppercase + string.digits + " .,"
    return "".join(alphabet[int(i) % len(alphabet)] for i in ids)


def generate_direct(texts, params, key, do_sample=True):
    prompts = [_tokenize(t) for t in texts]
    B = len(prompts)
    B_pad = max(TILE, ((B + TILE - 1) // TILE) * TILE)

    tok_rows, plen_rows = [], []
    for p in prompts:
        tok_rows.append(p + [0] * (S_MAX - len(p)))
        plen_rows.append(len(p))
    # padding sequences: full-length zero "prompt" so they never sample and
    # never drag the per-tile min prompt length (the LM-head gate) down.
    for _ in range(B_pad - B):
        tok_rows.append([0] * S_MAX)
        plen_rows.append(S_MAX)

    tokens = jnp.asarray(tok_rows, dtype=jnp.int32)
    plens = jnp.asarray(plen_rows, dtype=jnp.int32)
    # Gumbel noise precomputed on host (in-kernel pltpu PRNG has no
    # CPU/interpret lowering); argmax sampling still happens in-kernel.
    gumbel = jax.random.gumbel(key, (S_MAX, B_pad, VOCAB), dtype=jnp.float32)

    out_tokens = _decode_batch(tokens, plens, gumbel, params)   # [B_pad, S_MAX]
    out_np = jax.device_get(out_tokens)

    token_arrays = [out_tokens[i] for i in range(B)]
    output_texts = [_detokenize(out_np[i, len(prompts[i]):]) for i in range(B)]
    return token_arrays, output_texts


# ---------------------------- VagueMotionGPT --------------------------------
class VagueMotionGPT:
    def __init__(self, key):
        self.params = init_params(key)   # "lm" parameters
        self._sample_key = jax.random.fold_in(key, 12345)

    def forward(self, batch, task="t2m"):
        texts = batch["text"]
        token_arrays, output_texts = generate_direct(
            texts, self.params, self._sample_key, do_sample=True)
        outputs = {"texts": output_texts, "_tokens": token_arrays}
        return outputs


# ---------------------------- main -------------------------------------------
if __name__ == "__main__":
    key = jax.random.PRNGKey(0)
    model = VagueMotionGPT(key)

    batch = {"text": ["a person walks forward slowly", "jump"]}
    outputs = model.forward(batch, task="t2m")

    # block on the device arrays produced by the Pallas-backed generation
    for t in outputs["_tokens"]:
        jax.block_until_ready(t)

    assert isinstance(outputs["texts"], list) and len(outputs["texts"]) == 2
    assert all(isinstance(s, str) and len(s) > 0 for s in outputs["texts"])
    print("KERNEL_OK")
</pallas_src>

<mosaic_0001>
module attributes {stable_mosaic.version = 11 : i64} {
  func.func @_decode_kernel(%arg0: i32, %arg1: memref<1xi32, #tpu.memory_space<smem>>, %arg2: memref<8x16xi32, #tpu.memory_space<vmem>>, %arg3: memref<8x1xi32, #tpu.memory_space<vmem>>, %arg4: memref<16x8x256xf32, #tpu.memory_space<vmem>>, %arg5: memref<256x128xbf16, #tpu.memory_space<vmem>>, %arg6: memref<16x128xf32, #tpu.memory_space<vmem>>, %arg7: memref<2x128x384xbf16, #tpu.memory_space<vmem>>, %arg8: memref<2x128x128xbf16, #tpu.memory_space<vmem>>, %arg9: memref<2x1x128xf32, #tpu.memory_space<vmem>>, %arg10: memref<2x1x128xf32, #tpu.memory_space<vmem>>, %arg11: memref<2x128x256xbf16, #tpu.memory_space<vmem>>, %arg12: memref<2x1x256xf32, #tpu.memory_space<vmem>>, %arg13: memref<2x256x128xbf16, #tpu.memory_space<vmem>>, %arg14: memref<2x1x128xf32, #tpu.memory_space<vmem>>, %arg15: memref<2x1x128xf32, #tpu.memory_space<vmem>>, %arg16: memref<2x1x128xf32, #tpu.memory_space<vmem>>, %arg17: memref<1x128xf32, #tpu.memory_space<vmem>>, %arg18: memref<1x128xf32, #tpu.memory_space<vmem>>, %arg19: memref<128x256xbf16, #tpu.memory_space<vmem>>, %arg20: memref<8x16xi32, #tpu.memory_space<vmem>>, %arg21: memref<32x8x128xf32, #tpu.memory_space<vmem>>, %arg22: memref<32x8x128xf32, #tpu.memory_space<vmem>>, %arg23: memref<8x1xi32, #tpu.memory_space<vmem>>) attributes {dimension_semantics = [#tpu.dimension_semantics<parallel>], iteration_bounds = array<i64: 1>, scalar_prefetch = 1 : i64, scratch_operands = 3 : i64, tpu.core_type = #tpu.core_type<tc>, window_params = [{transform_indices = @transform_0, window_bounds = array<i64: 8, 16>}, {transform_indices = @transform_1, window_bounds = array<i64: 8, 1>}, {transform_indices = @transform_2, window_bounds = array<i64: 16, 8, 256>}, {pipeline_mode = #tpu.pipeline_mode<synchronous>, transform_indices = @transform_3, window_bounds = array<i64: 256, 128>}, {pipeline_mode = #tpu.pipeline_mode<synchronous>, transform_indices = @transform_4, window_bounds = array<i64: 16, 128>}, {pipeline_mode = #tpu.pipeline_mode<synchronous>, transform_indices = @transform_5, window_bounds = array<i64: 2, 128, 384>}, {pipeline_mode = #tpu.pipeline_mode<synchronous>, transform_indices = @transform_6, window_bounds = array<i64: 2, 128, 128>}, {pipeline_mode = #tpu.pipeline_mode<synchronous>, transform_indices = @transform_7, window_bounds = array<i64: 2, 1, 128>}, {pipeline_mode = #tpu.pipeline_mode<synchronous>, transform_indices = @transform_8, window_bounds = array<i64: 2, 1, 128>}, {pipeline_mode = #tpu.pipeline_mode<synchronous>, transform_indices = @transform_9, window_bounds = array<i64: 2, 128, 256>}, {pipeline_mode = #tpu.pipeline_mode<synchronous>, transform_indices = @transform_10, window_bounds = array<i64: 2, 1, 256>}, {pipeline_mode = #tpu.pipeline_mode<synchronous>, transform_indices = @transform_11, window_bounds = array<i64: 2, 256, 128>}, {pipeline_mode = #tpu.pipeline_mode<synchronous>, transform_indices = @transform_12, window_bounds = array<i64: 2, 1, 128>}, {pipeline_mode = #tpu.pipeline_mode<synchronous>, transform_indices = @transform_13, window_bounds = array<i64: 2, 1, 128>}, {pipeline_mode = #tpu.pipeline_mode<synchronous>, transform_indices = @transform_14, window_bounds = array<i64: 2, 1, 128>}, {pipeline_mode = #tpu.pipeline_mode<synchronous>, transform_indices = @transform_15, window_bounds = array<i64: 1, 128>}, {pipeline_mode = #tpu.pipeline_mode<synchronous>, transform_indices = @transform_16, window_bounds = array<i64: 1, 128>}, {pipeline_mode = #tpu.pipeline_mode<synchronous>, transform_indices = @transform_17, window_bounds = array<i64: 128, 256>}, {transform_indices = @transform_18, window_bounds = array<i64: 8, 16>}]} {
    %0 = arith.index_cast %arg0 : i32 to index
    %1 = memref.load %arg1[%0] : memref<1xi32, #tpu.memory_space<smem>>
    %c0_i32 = arith.constant 0 : i32
    %2 = arith.cmpi eq, %arg0, %c0_i32 : i32
    %3 = arith.extui %2 : i1 to i32
    %c0_i32_0 = arith.constant 0 : i32
    %4 = arith.cmpi ne, %3, %c0_i32_0 : i32
    scf.if %4 {
      %cst_11 = arith.constant 0.000000e+00 : f32
      %21 = vector.broadcast %cst_11 : f32 to vector<32x8x128xf32>
      %c0_12 = arith.constant 0 : index
      %c0_13 = arith.constant 0 : index
      %c0_14 = arith.constant 0 : index
      %22 = vector.load %arg21[%c0_12, %c0_13, %c0_14] : memref<32x8x128xf32, #tpu.memory_space<vmem>>, vector<32x8x128xf32>
      tpu.vector_store %arg21[%c0_12, %c0_13, %c0_14], %21 {strides = array<i32>} : memref<32x8x128xf32, #tpu.memory_space<vmem>>, vector<32x8x128xf32>,
      %cst_15 = arith.constant 0.000000e+00 : f32
      %23 = vector.broadcast %cst_15 : f32 to vector<32x8x128xf32>
      %c0_16 = arith.constant 0 : index
      %c0_17 = arith.constant 0 : index
      %c0_18 = arith.constant 0 : index
      %24 = vector.load %arg22[%c0_16, %c0_17, %c0_18] : memref<32x8x128xf32, #tpu.memory_space<vmem>>, vector<32x8x128xf32>
      tpu.vector_store %arg22[%c0_16, %c0_17, %c0_18], %23 {strides = array<i32>} : memref<32x8x128xf32, #tpu.memory_space<vmem>>, vector<32x8x128xf32>,
    } else {
    }
    %5 = tpu.iota {dimensions = array<i32: 1>} : vector<8x16xi32>
    %6 = tpu.iota {dimensions = array<i32: 1>} : vector<1x256xi32>
    %7 = arith.sitofp %6 : vector<1x256xi32> to vector<1x256xf32>
    %8 = tpu.iota {dimensions = array<i32: 0>} : vector<16x1xi32>
    %c0 = arith.constant 0 : index
    %c0_1 = arith.constant 0 : index
    %9 = vector.load %arg2[%c0, %c0_1] : memref<8x16xi32, #tpu.memory_space<vmem>>, vector<8x16xi32>
    %c0_2 = arith.constant 0 : index
    %c0_3 = arith.constant 0 : index
    %10 = vector.load %arg3[%c0_2, %c0_3] : memref<8x1xi32, #tpu.memory_space<vmem>>, vector<8x1xi32>
    %11 = vector.extract_strided_slice %9 {offsets = [0, 0], sizes = [8, 1], strides = [1, 1]} : vector<8x16xi32> to vector<8x1xi32>
    %c0_i32_4 = arith.constant 0 : i32
    %12 = vector.broadcast %c0_i32_4 : i32 to vector<8x16xi32>
    %cst = arith.constant 1.250000e-01 : f32
    %cst_5 = arith.constant -1.000000e+30 : f32
    %c0_i32_6 = arith.constant 0 : i32
    %c15_i32 = arith.constant 15 : i32
    %13 = arith.addi %c0_i32_6, %c15_i32 : i32
    %c1_i32 = arith.constant 1 : i32
    %14:2 = scf.for %arg24 = %c0_i32_6 to %13 step %c1_i32 iter_args(%arg25 = %11, %arg26 = %12) -> (vector<8x1xi32>, vector<8x16xi32>)  : i32 {
      %21 = vector.broadcast %arg24 : i32 to vector<8x16xi32>
      %22 = arith.cmpi eq, %5, %21 : vector<8x16xi32>
      %23 = vector.shape_cast %arg25 : vector<8x1xi32> to vector<8x1xi32>
      %24 = vector.broadcast %23 : vector<8x1xi32> to vector<8x16xi32>
      %25 = arith.select %22, %24, %arg26 : vector<8x16xi1>, vector<8x16xi32>
      %26 = vector.broadcast %6 : vector<1x256xi32> to vector<8x256xi32>
      %27 = vector.broadcast %arg25 : vector<8x1xi32> to vector<8x256xi32>
      %28 = arith.cmpi eq, %26, %27 : vector<8x256xi32>
      %29 = arith.extui %28 : vector<8x256xi1> to vector<8x256xi32>
      %30 = arith.sitofp %29 : vector<8x256xi32> to vector<8x256xf32>
      %31 = arith.truncf %30 : vector<8x256xf32> to vector<8x256xbf16>
      %c0_11 = arith.constant 0 : index
      %c0_12 = arith.constant 0 : index
      %32 = vector.load %arg5[%c0_11, %c0_12] : memref<256x128xbf16, #tpu.memory_space<vmem>>, vector<256x128xbf16>
      %cst_13 = arith.constant dense<0.000000e+00> : vector<8x128xf32>
      %33 = tpu.matmul %31, %32, %cst_13 {dimension_numbers = #tpu.dot_dimension_numbers<[1], [0], [0], [1], [0, 0, 1, 1], [], []>} : vector<8x256xbf16>, vector<256x128xbf16>, vector<8x128xf32> -> vector<8x128xf32>
      %34 = arith.index_cast %arg24 : i32 to index
      %c0_14 = arith.constant 0 : index
      %35 = vector.load %arg6[%34, %c0_14] : memref<16x128xf32, #tpu.memory_space<vmem>>, vector<1x128xf32>
      %36 = vector.broadcast %35 : vector<1x128xf32> to vector<8x128xf32>
      %37 = arith.addf %33, %36 : vector<8x128xf32>
      %c0_15 = arith.constant 0 : index
      %c0_16 = arith.constant 0 : index
      %c0_17 = arith.constant 0 : index
      %38 = vector.load %arg9[%c0_15, %c0_16, %c0_17] : memref<2x1x128xf32, #tpu.memory_space<vmem>>, vector<1x1x128xf32>
      %39 = vector.shape_cast %38 : vector<1x1x128xf32> to vector<1x128xf32>
      %c0_18 = arith.constant 0 : index
      %c0_19 = arith.constant 0 : index
      %c0_20 = arith.constant 0 : index
      %40 = vector.load %arg10[%c0_18, %c0_19, %c0_20] : memref<2x1x128xf32, #tpu.memory_space<vmem>>, vector<1x1x128xf32>
      %41 = vector.shape_cast %40 : vector<1x1x128xf32> to vector<1x128xf32>
      %cst_21 = arith.constant dense<0.000000e+00> : vector<8xf32>
      %42 = vector.multi_reduction <add>, %37, %cst_21 [1] : vector<8x128xf32> to vector<8xf32>
      %43 = vector.shape_cast %42 : vector<8xf32> to vector<8x1xf32>
      %cst_22 = arith.constant 1.280000e+02 : f32
      %44 = vector.broadcast %cst_22 : f32 to vector<8x1xf32>
      %45 = arith.divf %43, %44 : vector<8x1xf32>
      %46 = vector.broadcast %45 : vector<8x1xf32> to vector<8x128xf32>
      %47 = arith.subf %37, %46 : vector<8x128xf32>
      %48 = vector.broadcast %45 : vector<8x1xf32> to vector<8x128xf32>
      %49 = arith.subf %37, %48 : vector<8x128xf32>
      %50 = arith.mulf %47, %49 : vector<8x128xf32>
      %cst_23 = arith.constant dense<0.000000e+00> : vector<8xf32>
      %51 = vector.multi_reduction <add>, %50, %cst_23 [1] : vector<8x128xf32> to vector<8xf32>
      %52 = vector.shape_cast %51 : vector<8xf32> to vector<8x1xf32>
      %cst_24 = arith.constant 1.280000e+02 : f32
      %53 = vector.broadcast %cst_24 : f32 to vector<8x1xf32>
      %54 = arith.divf %52, %53 : vector<8x1xf32>
      %55 = vector.broadcast %45 : vector<8x1xf32> to vector<8x128xf32>
      %56 = arith.subf %37, %55 : vector<8x128xf32>
      %cst_25 = arith.constant 9.99999974E-6 : f32
      %57 = vector.broadcast %cst_25 : f32 to vector<8x1xf32>
      %58 = arith.addf %54, %57 : vector<8x1xf32>
      %59 = math.rsqrt %58 : vector<8x1xf32>
      %60 = vector.broadcast %59 : vector<8x1xf32> to vector<8x128xf32>
      %61 = arith.mulf %56, %60 : vector<8x128xf32>
      %62 = vector.broadcast %39 : vector<1x128xf32> to vector<8x128xf32>
      %63 = arith.mulf %61, %62 : vector<8x128xf32>
      %64 = vector.broadcast %41 : vector<1x128xf32> to vector<8x128xf32>
      %65 = arith.addf %63, %64 : vector<8x128xf32>
      %66 = arith.truncf %65 : vector<8x128xf32> to vector<8x128xbf16>
      %c0_26 = arith.constant 0 : index
      %c0_27 = arith.constant 0 : index
      %c0_28 = arith.constant 0 : index
      %67 = vector.load %arg7[%c0_26, %c0_27, %c0_28] : memref<2x128x384xbf16, #tpu.memory_space<vmem>>, vector<1x128x384xbf16>
      %68 = vector.shape_cast %67 : vector<1x128x384xbf16> to vector<128x384xbf16>
      %cst_29 = arith.constant dense<0.000000e+00> : vector<8x384xf32>
      %69 = tpu.matmul %66, %68, %cst_29 {dimension_numbers = #tpu.dot_dimension_numbers<[1], [0], [0], [1], [0, 0, 1, 1], [], []>} : vector<8x128xbf16>, vector<128x384xbf16>, vector<8x384xf32> -> vector<8x384xf32>
      %70 = vector.extract_strided_slice %69 {offsets = [0, 0], sizes = [8, 128], strides = [1, 1]} : vector<8x384xf32> to vector<8x128xf32>
      %71 = vector.broadcast %cst : f32 to vector<8x128xf32>
      %72 = arith.mulf %70, %71 : vector<8x128xf32>
      %73 = vector.extract_strided_slice %69 {offsets = [0, 128], sizes = [8, 128], strides = [1, 1]} : vector<8x384xf32> to vector<8x128xf32>
      %74 = vector.extract_strided_slice %69 {offsets = [0, 256], sizes = [8, 128], strides = [1, 1]} : vector<8x384xf32> to vector<8x128xf32>
      %75 = vector.shape_cast %73 : vector<8x128xf32> to vector<1x8x128xf32>
      %c0_i32_30 = arith.constant 0 : i32
      %76 = arith.addi %c0_i32_30, %arg24 : i32
      %77 = arith.index_cast %76 : i32 to index
      %c0_31 = arith.constant 0 : index
      %c0_32 = arith.constant 0 : index
      %78 = vector.load %arg21[%77, %c0_31, %c0_32] : memref<32x8x128xf32, #tpu.memory_space<vmem>>, vector<1x8x128xf32>
      tpu.vector_store %arg21[%77, %c0_31, %c0_32], %75 {strides = array<i32>} : memref<32x8x128xf32, #tpu.memory_space<vmem>>, vector<1x8x128xf32>,
      %79 = vector.shape_cast %74 : vector<8x128xf32> to vector<1x8x128xf32>
      %c0_i32_33 = arith.constant 0 : i32
      %80 = arith.addi %c0_i32_33, %arg24 : i32
      %81 = arith.index_cast %80 : i32 to index
      %c0_34 = arith.constant 0 : index
      %c0_35 = arith.constant 0 : index
      %82 = vector.load %arg22[%81, %c0_34, %c0_35] : memref<32x8x128xf32, #tpu.memory_space<vmem>>, vector<1x8x128xf32>
      tpu.vector_store %arg22[%81, %c0_34, %c0_35], %79 {strides = array<i32>} : memref<32x8x128xf32, #tpu.memory_space<vmem>>, vector<1x8x128xf32>,
      %c0_36 = arith.constant 0 : index
      %c0_37 = arith.constant 0 : index
      %c0_38 = arith.constant 0 : index
      %83 = vector.load %arg21[%c0_36, %c0_37, %c0_38] : memref<32x8x128xf32, #tpu.memory_space<vmem>>, vector<16x8x128xf32>
      %c0_39 = arith.constant 0 : index
      %c0_40 = arith.constant 0 : index
      %c0_41 = arith.constant 0 : index
      %84 = vector.load %arg22[%c0_39, %c0_40, %c0_41] : memref<32x8x128xf32, #tpu.memory_space<vmem>>, vector<16x8x128xf32>
      %85 = vector.broadcast %arg24 : i32 to vector<16x1xi32>
      %86 = arith.cmpi sle, %8, %85 : vector<16x1xi32>
      %87 = vector.extract_strided_slice %72 {offsets = [0, 0], sizes = [8, 64], strides = [1, 1]} : vector<8x128xf32> to vector<8x64xf32>
      %88 = vector.extract_strided_slice %83 {offsets = [0, 0, 0], sizes = [16, 8, 64], strides = [1, 1, 1]} : vector<16x8x128xf32> to vector<16x8x64xf32>
      %89 = vector.extract_strided_slice %84 {offsets = [0, 0, 0], sizes = [16, 8, 64], strides = [1, 1, 1]} : vector<16x8x128xf32> to vector<16x8x64xf32>
      %90 = vector.shape_cast %87 : vector<8x64xf32> to vector<1x8x64xf32>
      %91 = vector.broadcast %90 : vector<1x8x64xf32> to vector<16x8x64xf32>
      %92 = arith.mulf %91, %88 : vector<16x8x64xf32>
      %cst_42 = arith.constant dense<0.000000e+00> : vector<16x8xf32>
      %93 = vector.multi_reduction <add>, %92, %cst_42 [2] : vector<16x8x64xf32> to vector<16x8xf32>
      %94 = vector.shape_cast %86 : vector<16x1xi1> to vector<16x1xi1>
      %95 = vector.broadcast %94 : vector<16x1xi1> to vector<16x8xi1>
      %96 = vector.broadcast %cst_5 : f32 to vector<16x8xf32>
      %97 = arith.select %95, %93, %96 : vector<16x8xi1>, vector<16x8xf32>
      %cst_43 = arith.constant dense<0xFF800000> : vector<8xf32>
      %98 = vector.multi_reduction <maximumf>, %97, %cst_43 [0] : vector<16x8xf32> to vector<8xf32>
      %99 = vector.shape_cast %98 : vector<8xf32> to vector<1x8xf32>
      %100 = vector.broadcast %99 : vector<1x8xf32> to vector<16x8xf32>
      %101 = arith.subf %97, %100 : vector<16x8xf32>
      %102 = math.exp %101 : vector<16x8xf32>
      %cst_44 = arith.constant dense<0.000000e+00> : vector<8xf32>
      %103 = vector.multi_reduction <add>, %102, %cst_44 [0] : vector<16x8xf32> to vector<8xf32>
      %104 = vector.shape_cast %103 : vector<8xf32> to vector<1x8xf32>
      %105 = vector.broadcast %104 : vector<1x8xf32> to vector<16x8xf32>
      %106 = arith.divf %102, %105 : vector<16x8xf32>
      %107 = vector.shape_cast %106 : vector<16x8xf32> to vector<16x8x1xf32>
      %108 = vector.broadcast %107 : vector<16x8x1xf32> to vector<16x8x64xf32>
      %109 = arith.mulf %108, %89 : vector<16x8x64xf32>
      %cst_45 = arith.constant dense<0.000000e+00> : vector<8x64xf32>
      %110 = vector.multi_reduction <add>, %109, %cst_45 [0] : vector<16x8x64xf32> to vector<8x64xf32>
      %111 = vector.extract_strided_slice %72 {offsets = [0, 64], sizes = [8, 64], strides = [1, 1]} : vector<8x128xf32> to vector<8x64xf32>
      %112 = vector.extract_strided_slice %83 {offsets = [0, 0, 64], sizes = [16, 8, 64], strides = [1, 1, 1]} : vector<16x8x128xf32> to vector<16x8x64xf32>
      %113 = vector.extract_strided_slice %84 {offsets = [0, 0, 64], sizes = [16, 8, 64], strides = [1, 1, 1]} : vector<16x8x128xf32> to vector<16x8x64xf32>
      %114 = vector.shape_cast %111 : vector<8x64xf32> to vector<1x8x64xf32>
      %115 = vector.broadcast %114 : vector<1x8x64xf32> to vector<16x8x64xf32>
      %116 = arith.mulf %115, %112 : vector<16x8x64xf32>
      %cst_46 = arith.constant dense<0.000000e+00> : vector<16x8xf32>
      %117 = vector.multi_reduction <add>, %116, %cst_46 [2] : vector<16x8x64xf32> to vector<16x8xf32>
      %118 = vector.shape_cast %86 : vector<16x1xi1> to vector<16x1xi1>
      %119 = vector.broadcast %118 : vector<16x1xi1> to vector<16x8xi1>
      %120 = vector.broadcast %cst_5 : f32 to vector<16x8xf32>
      %121 = arith.select %119, %117, %120 : vector<16x8xi1>, vector<16x8xf32>
      %cst_47 = arith.constant dense<0xFF800000> : vector<8xf32>
      %122 = vector.multi_reduction <maximumf>, %121, %cst_47 [0] : vector<16x8xf32> to vector<8xf32>
      %123 = vector.shape_cast %122 : vector<8xf32> to vector<1x8xf32>
      %124 = vector.broadcast %123 : vector<1x8xf32> to vector<16x8xf32>
      %125 = arith.subf %121, %124 : vector<16x8xf32>
      %126 = math.exp %125 : vector<16x8xf32>
      %cst_48 = arith.constant dense<0.000000e+00> : vector<8xf32>
      %127 = vector.multi_reduction <add>, %126, %cst_48 [0] : vector<16x8xf32> to vector<8xf32>
      %128 = vector.shape_cast %127 : vector<8xf32> to vector<1x8xf32>
      %129 = vector.broadcast %128 : vector<1x8xf32> to vector<16x8xf32>
      %130 = arith.divf %126, %129 : vector<16x8xf32>
      %131 = vector.shape_cast %130 : vector<16x8xf32> to vector<16x8x1xf32>
      %132 = vector.broadcast %131 : vector<16x8x1xf32> to vector<16x8x64xf32>
      %133 = arith.mulf %132, %113 : vector<16x8x64xf32>
      %cst_49 = arith.constant dense<0.000000e+00> : vector<8x64xf32>
      %134 = vector.multi_reduction <add>, %133, %cst_49 [0] : vector<16x8x64xf32> to vector<8x64xf32>
      %135 = tpu.concatenate %110, %134 in 1 : vector<8x64xf32>, vector<8x64xf32> -> vector<8x128xf32>
      %136 = arith.truncf %135 : vector<8x128xf32> to vector<8x128xbf16>
      %c0_50 = arith.constant 0 : index
      %c0_51 = arith.constant 0 : index
      %c0_52 = arith.constant 0 : index
      %137 = vector.load %arg8[%c0_50, %c0_51, %c0_52] : memref<2x128x128xbf16, #tpu.memory_space<vmem>>, vector<1x128x128xbf16>
      %138 = vector.shape_cast %137 : vector<1x128x128xbf16> to vector<128x128xbf16>
      %cst_53 = arith.constant dense<0.000000e+00> : vector<8x128xf32>
      %139 = tpu.matmul %136, %138, %cst_53 {dimension_numbers = #tpu.dot_dimension_numbers<[1], [0], [0], [1], [0, 0, 1, 1], [], []>} : vector<8x128xbf16>, vector<128x128xbf16>, vector<8x128xf32> -> vector<8x128xf32>
      %140 = arith.addf %37, %139 : vector<8x128xf32>
      %c0_54 = arith.constant 0 : index
      %c0_55 = arith.constant 0 : index
      %c0_56 = arith.constant 0 : index
      %141 = vector.load %arg15[%c0_54, %c0_55, %c0_56] : memref<2x1x128xf32, #tpu.memory_space<vmem>>, vector<1x1x128xf32>
      %142 = vector.shape_cast %141 : vector<1x1x128xf32> to vector<1x128xf32>
      %c0_57 = arith.constant 0 : index
      %c0_58 = arith.constant 0 : index
      %c0_59 = arith.constant 0 : index
      %143 = vector.load %arg16[%c0_57, %c0_58, %c0_59] : memref<2x1x128xf32, #tpu.memory_space<vmem>>, vector<1x1x128xf32>
      %144 = vector.shape_cast %143 : vector<1x1x128xf32> to vector<1x128xf32>
      %cst_60 = arith.constant dense<0.000000e+00> : vector<8xf32>
      %145 = vector.multi_reduction <add>, %140, %cst_60 [1] : vector<8x128xf32> to vector<8xf32>
      %146 = vector.shape_cast %145 : vector<8xf32> to vector<8x1xf32>
      %cst_61 = arith.constant 1.280000e+02 : f32
      %147 = vector.broadcast %cst_61 : f32 to vector<8x1xf32>
      %148 = arith.divf %146, %147 : vector<8x1xf32>
      %149 = vector.broadcast %148 : vector<8x1xf32> to vector<8x128xf32>
      %150 = arith.subf %140, %149 : vector<8x128xf32>
      %151 = vector.broadcast %148 : vector<8x1xf32> to vector<8x128xf32>
      %152 = arith.subf %140, %151 : vector<8x128xf32>
      %153 = arith.mulf %150, %152 : vector<8x128xf32>
      %cst_62 = arith.constant dense<0.000000e+00> : vector<8xf32>
      %154 = vector.multi_reduction <add>, %153, %cst_62 [1] : vector<8x128xf32> to vector<8xf32>
      %155 = vector.shape_cast %154 : vector<8xf32> to vector<8x1xf32>
      %cst_63 = arith.constant 1.280000e+02 : f32
      %156 = vector.broadcast %cst_63 : f32 to vector<8x1xf32>
      %157 = arith.divf %155, %156 : vector<8x1xf32>
      %158 = vector.broadcast %148 : vector<8x1xf32> to vector<8x128xf32>
      %159 = arith.subf %140, %158 : vector<8x128xf32>
      %cst_64 = arith.constant 9.99999974E-6 : f32
      %160 = vector.broadcast %cst_64 : f32 to vector<8x1xf32>
      %161 = arith.addf %157, %160 : vector<8x1xf32>
      %162 = math.rsqrt %161 : vector<8x1xf32>
      %163 = vector.broadcast %162 : vector<8x1xf32> to vector<8x128xf32>
      %164 = arith.mulf %159, %163 : vector<8x128xf32>
      %165 = vector.broadcast %142 : vector<1x128xf32> to vector<8x128xf32>
      %166 = arith.mulf %164, %165 : vector<8x128xf32>
      %167 = vector.broadcast %144 : vector<1x128xf32> to vector<8x128xf32>
      %168 = arith.addf %166, %167 : vector<8x128xf32>
      %169 = arith.truncf %168 : vector<8x128xf32> to vector<8x128xbf16>
      %c0_65 = arith.constant 0 : index
      %c0_66 = arith.constant 0 : index
      %c0_67 = arith.constant 0 : index
      %170 = vector.load %arg11[%c0_65, %c0_66, %c0_67] : memref<2x128x256xbf16, #tpu.memory_space<vmem>>, vector<1x128x256xbf16>
      %171 = vector.shape_cast %170 : vector<1x128x256xbf16> to vector<128x256xbf16>
      %cst_68 = arith.constant dense<0.000000e+00> : vector<8x256xf32>
      %172 = tpu.matmul %169, %171, %cst_68 {dimension_numbers = #tpu.dot_dimension_numbers<[1], [0], [0], [1], [0, 0, 1, 1], [], []>} : vector<8x128xbf16>, vector<128x256xbf16>, vector<8x256xf32> -> vector<8x256xf32>
      %c0_69 = arith.constant 0 : index
      %c0_70 = arith.constant 0 : index
      %c0_71 = arith.constant 0 : index
      %173 = vector.load %arg12[%c0_69, %c0_70, %c0_71] : memref<2x1x256xf32, #tpu.memory_space<vmem>>, vector<1x1x256xf32>
      %174 = vector.shape_cast %173 : vector<1x1x256xf32> to vector<1x256xf32>
      %175 = vector.broadcast %174 : vector<1x256xf32> to vector<8x256xf32>
      %176 = arith.addf %172, %175 : vector<8x256xf32>
      %177 = arith.mulf %176, %176 : vector<8x256xf32>
      %178 = arith.mulf %176, %177 : vector<8x256xf32>
      %cst_72 = arith.constant 4.471500e-02 : f32
      %179 = vector.broadcast %cst_72 : f32 to vector<8x256xf32>
      %180 = arith.mulf %179, %178 : vector<8x256xf32>
      %181 = arith.addf %176, %180 : vector<8x256xf32>
      %cst_73 = arith.constant 0.797884583 : f32
      %182 = vector.broadcast %cst_73 : f32 to vector<8x256xf32>
      %183 = arith.mulf %182, %181 : vector<8x256xf32>
      %184 = math.tanh %183 : vector<8x256xf32>
      %cst_74 = arith.constant 1.000000e+00 : f32
      %185 = vector.broadcast %cst_74 : f32 to vector<8x256xf32>
      %186 = arith.addf %185, %184 : vector<8x256xf32>
      %cst_75 = arith.constant 5.000000e-01 : f32
      %187 = vector.broadcast %cst_75 : f32 to vector<8x256xf32>
      %188 = arith.mulf %187, %186 : vector<8x256xf32>
      %189 = arith.mulf %176, %188 : vector<8x256xf32>
      %190 = arith.truncf %189 : vector<8x256xf32> to vector<8x256xbf16>
      %c0_76 = arith.constant 0 : index
      %c0_77 = arith.constant 0 : index
      %c0_78 = arith.constant 0 : index
      %191 = vector.load %arg13[%c0_76, %c0_77, %c0_78] : memref<2x256x128xbf16, #tpu.memory_space<vmem>>, vector<1x256x128xbf16>
      %192 = vector.shape_cast %191 : vector<1x256x128xbf16> to vector<256x128xbf16>
      %cst_79 = arith.constant dense<0.000000e+00> : vector<8x128xf32>
      %193 = tpu.matmul %190, %192, %cst_79 {dimension_numbers = #tpu.dot_dimension_numbers<[1], [0], [0], [1], [0, 0, 1, 1], [], []>} : vector<8x256xbf16>, vector<256x128xbf16>, vector<8x128xf32> -> vector<8x128xf32>
      %194 = arith.addf %140, %193 : vector<8x128xf32>
      %c0_80 = arith.constant 0 : index
      %c0_81 = arith.constant 0 : index
      %c0_82 = arith.constant 0 : index
      %195 = vector.load %arg14[%c0_80, %c0_81, %c0_82] : memref<2x1x128xf32, #tpu.memory_space<vmem>>, vector<1x1x128xf32>
      %196 = vector.shape_cast %195 : vector<1x1x128xf32> to vector<1x128xf32>
      %197 = vector.broadcast %196 : vector<1x128xf32> to vector<8x128xf32>
      %198 = arith.addf %194, %197 : vector<8x128xf32>
      %c1 = arith.constant 1 : index
      %c0_83 = arith.constant 0 : index
      %c0_84 = arith.constant 0 : index
      %199 = vector.load %arg9[%c1, %c0_83, %c0_84] : memref<2x1x128xf32, #tpu.memory_space<vmem>>, vector<1x1x128xf32>
      %200 = vector.shape_cast %199 : vector<1x1x128xf32> to vector<1x128xf32>
      %c1_85 = arith.constant 1 : index
      %c0_86 = arith.constant 0 : index
      %c0_87 = arith.constant 0 : index
      %201 = vector.load %arg10[%c1_85, %c0_86, %c0_87] : memref<2x1x128xf32, #tpu.memory_space<vmem>>, vector<1x1x128xf32>
      %202 = vector.shape_cast %201 : vector<1x1x128xf32> to vector<1x128xf32>
      %cst_88 = arith.constant dense<0.000000e+00> : vector<8xf32>
      %203 = vector.multi_reduction <add>, %198, %cst_88 [1] : vector<8x128xf32> to vector<8xf32>
      %204 = vector.shape_cast %203 : vector<8xf32> to vector<8x1xf32>
      %cst_89 = arith.constant 1.280000e+02 : f32
      %205 = vector.broadcast %cst_89 : f32 to vector<8x1xf32>
      %206 = arith.divf %204, %205 : vector<8x1xf32>
      %207 = vector.broadcast %206 : vector<8x1xf32> to vector<8x128xf32>
      %208 = arith.subf %198, %207 : vector<8x128xf32>
      %209 = vector.broadcast %206 : vector<8x1xf32> to vector<8x128xf32>
      %210 = arith.subf %198, %209 : vector<8x128xf32>
      %211 = arith.mulf %208, %210 : vector<8x128xf32>
      %cst_90 = arith.constant dense<0.000000e+00> : vector<8xf32>
      %212 = vector.multi_reduction <add>, %211, %cst_90 [1] : vector<8x128xf32> to vector<8xf32>
      %213 = vector.shape_cast %212 : vector<8xf32> to vector<8x1xf32>
      %cst_91 = arith.constant 1.280000e+02 : f32
      %214 = vector.broadcast %cst_91 : f32 to vector<8x1xf32>
      %215 = arith.divf %213, %214 : vector<8x1xf32>
      %216 = vector.broadcast %206 : vector<8x1xf32> to vector<8x128xf32>
      %217 = arith.subf %198, %216 : vector<8x128xf32>
      %cst_92 = arith.constant 9.99999974E-6 : f32
      %218 = vector.broadcast %cst_92 : f32 to vector<8x1xf32>
      %219 = arith.addf %215, %218 : vector<8x1xf32>
      %220 = math.rsqrt %219 : vector<8x1xf32>
      %221 = vector.broadcast %220 : vector<8x1xf32> to vector<8x128xf32>
      %222 = arith.mulf %217, %221 : vector<8x128xf32>
      %223 = vector.broadcast %200 : vector<1x128xf32> to vector<8x128xf32>
      %224 = arith.mulf %222, %223 : vector<8x128xf32>
      %225 = vector.broadcast %202 : vector<1x128xf32> to vector<8x128xf32>
      %226 = arith.addf %224, %225 : vector<8x128xf32>
      %227 = arith.truncf %226 : vector<8x128xf32> to vector<8x128xbf16>
      %c1_93 = arith.constant 1 : index
      %c0_94 = arith.constant 0 : index
      %c0_95 = arith.constant 0 : index
      %228 = vector.load %arg7[%c1_93, %c0_94, %c0_95] : memref<2x128x384xbf16, #tpu.memory_space<vmem>>, vector<1x128x384xbf16>
      %229 = vector.shape_cast %228 : vector<1x128x384xbf16> to vector<128x384xbf16>
      %cst_96 = arith.constant dense<0.000000e+00> : vector<8x384xf32>
      %230 = tpu.matmul %227, %229, %cst_96 {dimension_numbers = #tpu.dot_dimension_numbers<[1], [0], [0], [1], [0, 0, 1, 1], [], []>} : vector<8x128xbf16>, vector<128x384xbf16>, vector<8x384xf32> -> vector<8x384xf32>
      %231 = vector.extract_strided_slice %230 {offsets = [0, 0], sizes = [8, 128], strides = [1, 1]} : vector<8x384xf32> to vector<8x128xf32>
      %232 = vector.broadcast %cst : f32 to vector<8x128xf32>
      %233 = arith.mulf %231, %232 : vector<8x128xf32>
      %234 = vector.extract_strided_slice %230 {offsets = [0, 128], sizes = [8, 128], strides = [1, 1]} : vector<8x384xf32> to vector<8x128xf32>
      %235 = vector.extract_strided_slice %230 {offsets = [0, 256], sizes = [8, 128], strides = [1, 1]} : vector<8x384xf32> to vector<8x128xf32>
      %236 = vector.shape_cast %234 : vector<8x128xf32> to vector<1x8x128xf32>
      %c16_i32 = arith.constant 16 : i32
      %237 = arith.addi %c16_i32, %arg24 : i32
      %238 = arith.index_cast %237 : i32 to index
      %c0_97 = arith.constant 0 : index
      %c0_98 = arith.constant 0 : index
      %239 = vector.load %arg21[%238, %c0_97, %c0_98] : memref<32x8x128xf32, #tpu.memory_space<vmem>>, vector<1x8x128xf32>
      tpu.vector_store %arg21[%238, %c0_97, %c0_98], %236 {strides = array<i32>} : memref<32x8x128xf32, #tpu.memory_space<vmem>>, vector<1x8x128xf32>,
      %240 = vector.shape_cast %235 : vector<8x128xf32> to vector<1x8x128xf32>
      %c16_i32_99 = arith.constant 16 : i32
      %241 = arith.addi %c16_i32_99, %arg24 : i32
      %242 = arith.index_cast %241 : i32 to index
      %c0_100 = arith.constant 0 : index
      %c0_101 = arith.constant 0 : index
      %243 = vector.load %arg22[%242, %c0_100, %c0_101] : memref<32x8x128xf32, #tpu.memory_space<vmem>>, vector<1x8x128xf32>
      tpu.vector_store %arg22[%242, %c0_100, %c0_101], %240 {strides = array<i32>} : memref<32x8x128xf32, #tpu.memory_space<vmem>>, vector<1x8x128xf32>,
      %c16 = arith.constant 16 : index
      %c0_102 = arith.constant 0 : index
      %c0_103 = arith.constant 0 : index
      %244 = vector.load %arg21[%c16, %c0_102, %c0_103] : memref<32x8x128xf32, #tpu.memory_space<vmem>>, vector<16x8x128xf32>
      %c16_104 = arith.constant 16 : index
      %c0_105 = arith.constant 0 : index
      %c0_106 = arith.constant 0 : index
      %245 = vector.load %arg22[%c16_104, %c0_105, %c0_106] : memref<32x8x128xf32, #tpu.memory_space<vmem>>, vector<16x8x128xf32>
      %246 = vector.broadcast %arg24 : i32 to vector<16x1xi32>
      %247 = arith.cmpi sle, %8, %246 : vector<16x1xi32>
      %248 = vector.extract_strided_slice %233 {offsets = [0, 0], sizes = [8, 64], strides = [1, 1]} : vector<8x128xf32> to vector<8x64xf32>
      %249 = vector.extract_strided_slice %244 {offsets = [0, 0, 0], sizes = [16, 8, 64], strides = [1, 1, 1]} : vector<16x8x128xf32> to vector<16x8x64xf32>
      %250 = vector.extract_strided_slice %245 {offsets = [0, 0, 0], sizes = [16, 8, 64], strides = [1, 1, 1]} : vector<16x8x128xf32> to vector<16x8x64xf32>
      %251 = vector.shape_cast %248 : vector<8x64xf32> to vector<1x8x64xf32>
      %252 = vector.broadcast %251 : vector<1x8x64xf32> to vector<16x8x64xf32>
      %253 = arith.mulf %252, %249 : vector<16x8x64xf32>
      %cst_107 = arith.constant dense<0.000000e+00> : vector<16x8xf32>
      %254 = vector.multi_reduction <add>, %253, %cst_107 [2] : vector<16x8x64xf32> to vector<16x8xf32>
      %255 = vector.shape_cast %247 : vector<16x1xi1> to vector<16x1xi1>
      %256 = vector.broadcast %255 : vector<16x1xi1> to vector<16x8xi1>
      %257 = vector.broadcast %cst_5 : f32 to vector<16x8xf32>
      %258 = arith.select %256, %254, %257 : vector<16x8xi1>, vector<16x8xf32>
      %cst_108 = arith.constant dense<0xFF800000> : vector<8xf32>
      %259 = vector.multi_reduction <maximumf>, %258, %cst_108 [0] : vector<16x8xf32> to vector<8xf32>
      %260 = vector.shape_cast %259 : vector<8xf32> to vector<1x8xf32>
      %261 = vector.broadcast %260 : vector<1x8xf32> to vector<16x8xf32>
      %262 = arith.subf %258, %261 : vector<16x8xf32>
      %263 = math.exp %262 : vector<16x8xf32>
      %cst_109 = arith.constant dense<0.000000e+00> : vector<8xf32>
      %264 = vector.multi_reduction <add>, %263, %cst_109 [0] : vector<16x8xf32> to vector<8xf32>
      %265 = vector.shape_cast %264 : vector<8xf32> to vector<1x8xf32>
      %266 = vector.broadcast %265 : vector<1x8xf32> to vector<16x8xf32>
      %267 = arith.divf %263, %266 : vector<16x8xf32>
      %268 = vector.shape_cast %267 : vector<16x8xf32> to vector<16x8x1xf32>
      %269 = vector.broadcast %268 : vector<16x8x1xf32> to vector<16x8x64xf32>
      %270 = arith.mulf %269, %250 : vector<16x8x64xf32>
      %cst_110 = arith.constant dense<0.000000e+00> : vector<8x64xf32>
      %271 = vector.multi_reduction <add>, %270, %cst_110 [0] : vector<16x8x64xf32> to vector<8x64xf32>
      %272 = vector.extract_strided_slice %233 {offsets = [0, 64], sizes = [8, 64], strides = [1, 1]} : vector<8x128xf32> to vector<8x64xf32>
      %273 = vector.extract_strided_slice %244 {offsets = [0, 0, 64], sizes = [16, 8, 64], strides = [1, 1, 1]} : vector<16x8x128xf32> to vector<16x8x64xf32>
      %274 = vector.extract_strided_slice %245 {offsets = [0, 0, 64], sizes = [16, 8, 64], strides = [1, 1, 1]} : vector<16x8x128xf32> to vector<16x8x64xf32>
      %275 = vector.shape_cast %272 : vector<8x64xf32> to vector<1x8x64xf32>
      %276 = vector.broadcast %275 : vector<1x8x64xf32> to vector<16x8x64xf32>
      %277 = arith.mulf %276, %273 : vector<16x8x64xf32>
      %cst_111 = arith.constant dense<0.000000e+00> : vector<16x8xf32>
      %278 = vector.multi_reduction <add>, %277, %cst_111 [2] : vector<16x8x64xf32> to vector<16x8xf32>
      %279 = vector.shape_cast %247 : vector<16x1xi1> to vector<16x1xi1>
      %280 = vector.broadcast %279 : vector<16x1xi1> to vector<16x8xi1>
      %281 = vector.broadcast %cst_5 : f32 to vector<16x8xf32>
      %282 = arith.select %280, %278, %281 : vector<16x8xi1>, vector<16x8xf32>
      %cst_112 = arith.constant dense<0xFF800000> : vector<8xf32>
      %283 = vector.multi_reduction <maximumf>, %282, %cst_112 [0] : vector<16x8xf32> to vector<8xf32>
      %284 = vector.shape_cast %283 : vector<8xf32> to vector<1x8xf32>
      %285 = vector.broadcast %284 : vector<1x8xf32> to vector<16x8xf32>
      %286 = arith.subf %282, %285 : vector<16x8xf32>
      %287 = math.exp %286 : vector<16x8xf32>
      %cst_113 = arith.constant dense<0.000000e+00> : vector<8xf32>
      %288 = vector.multi_reduction <add>, %287, %cst_113 [0] : vector<16x8xf32> to vector<8xf32>
      %289 = vector.shape_cast %288 : vector<8xf32> to vector<1x8xf32>
      %290 = vector.broadcast %289 : vector<1x8xf32> to vector<16x8xf32>
      %291 = arith.divf %287, %290 : vector<16x8xf32>
      %292 = vector.shape_cast %291 : vector<16x8xf32> to vector<16x8x1xf32>
      %293 = vector.broadcast %292 : vector<16x8x1xf32> to vector<16x8x64xf32>
      %294 = arith.mulf %293, %274 : vector<16x8x64xf32>
      %cst_114 = arith.constant dense<0.000000e+00> : vector<8x64xf32>
      %295 = vector.multi_reduction <add>, %294, %cst_114 [0] : vector<16x8x64xf32> to vector<8x64xf32>
      %296 = tpu.concatenate %271, %295 in 1 : vector<8x64xf32>, vector<8x64xf32> -> vector<8x128xf32>
      %297 = arith.truncf %296 : vector<8x128xf32> to vector<8x128xbf16>
      %c1_115 = arith.constant 1 : index
      %c0_116 = arith.constant 0 : index
      %c0_117 = arith.constant 0 : index
      %298 = vector.load %arg8[%c1_115, %c0_116, %c0_117] : memref<2x128x128xbf16, #tpu.memory_space<vmem>>, vector<1x128x128xbf16>
      %299 = vector.shape_cast %298 : vector<1x128x128xbf16> to vector<128x128xbf16>
      %cst_118 = arith.constant dense<0.000000e+00> : vector<8x128xf32>
      %300 = tpu.matmul %297, %299, %cst_118 {dimension_numbers = #tpu.dot_dimension_numbers<[1], [0], [0], [1], [0, 0, 1, 1], [], []>} : vector<8x128xbf16>, vector<128x128xbf16>, vector<8x128xf32> -> vector<8x128xf32>
      %301 = arith.addf %198, %300 : vector<8x128xf32>
      %c1_119 = arith.constant 1 : index
      %c0_120 = arith.constant 0 : index
      %c0_121 = arith.constant 0 : index
      %302 = vector.load %arg15[%c1_119, %c0_120, %c0_121] : memref<2x1x128xf32, #tpu.memory_space<vmem>>, vector<1x1x128xf32>
      %303 = vector.shape_cast %302 : vector<1x1x128xf32> to vector<1x128xf32>
      %c1_122 = arith.constant 1 : index
      %c0_123 = arith.constant 0 : index
      %c0_124 = arith.constant 0 : index
      %304 = vector.load %arg16[%c1_122, %c0_123, %c0_124] : memref<2x1x128xf32, #tpu.memory_space<vmem>>, vector<1x1x128xf32>
      %305 = vector.shape_cast %304 : vector<1x1x128xf32> to vector<1x128xf32>
      %cst_125 = arith.constant dense<0.000000e+00> : vector<8xf32>
      %306 = vector.multi_reduction <add>, %301, %cst_125 [1] : vector<8x128xf32> to vector<8xf32>
      %307 = vector.shape_cast %306 : vector<8xf32> to vector<8x1xf32>
      %cst_126 = arith.constant 1.280000e+02 : f32
      %308 = vector.broadcast %cst_126 : f32 to vector<8x1xf32>
      %309 = arith.divf %307, %308 : vector<8x1xf32>
      %310 = vector.broadcast %309 : vector<8x1xf32> to vector<8x128xf32>
      %311 = arith.subf %301, %310 : vector<8x128xf32>
      %312 = vector.broadcast %309 : vector<8x1xf32> to vector<8x128xf32>
      %313 = arith.subf %301, %312 : vector<8x128xf32>
      %314 = arith.mulf %311, %313 : vector<8x128xf32>
      %cst_127 = arith.constant dense<0.000000e+00> : vector<8xf32>
      %315 = vector.multi_reduction <add>, %314, %cst_127 [1] : vector<8x128xf32> to vector<8xf32>
      %316 = vector.shape_cast %315 : vector<8xf32> to vector<8x1xf32>
      %cst_128 = arith.constant 1.280000e+02 : f32
      %317 = vector.broadcast %cst_128 : f32 to vector<8x1xf32>
      %318 = arith.divf %316, %317 : vector<8x1xf32>
      %319 = vector.broadcast %309 : vector<8x1xf32> to vector<8x128xf32>
      %320 = arith.subf %301, %319 : vector<8x128xf32>
      %cst_129 = arith.constant 9.99999974E-6 : f32
      %321 = vector.broadcast %cst_129 : f32 to vector<8x1xf32>
      %322 = arith.addf %318, %321 : vector<8x1xf32>
      %323 = math.rsqrt %322 : vector<8x1xf32>
      %324 = vector.broadcast %323 : vector<8x1xf32> to vector<8x128xf32>
      %325 = arith.mulf %320, %324 : vector<8x128xf32>
      %326 = vector.broadcast %303 : vector<1x128xf32> to vector<8x128xf32>
      %327 = arith.mulf %325, %326 : vector<8x128xf32>
      %328 = vector.broadcast %305 : vector<1x128xf32> to vector<8x128xf32>
      %329 = arith.addf %327, %328 : vector<8x128xf32>
      %330 = arith.truncf %329 : vector<8x128xf32> to vector<8x128xbf16>
      %c1_130 = arith.constant 1 : index
      %c0_131 = arith.constant 0 : index
      %c0_132 = arith.constant 0 : index
      %331 = vector.load %arg11[%c1_130, %c0_131, %c0_132] : memref<2x128x256xbf16, #tpu.memory_space<vmem>>, vector<1x128x256xbf16>
      %332 = vector.shape_cast %331 : vector<1x128x256xbf16> to vector<128x256xbf16>
      %cst_133 = arith.constant dense<0.000000e+00> : vector<8x256xf32>
      %333 = tpu.matmul %330, %332, %cst_133 {dimension_numbers = #tpu.dot_dimension_numbers<[1], [0], [0], [1], [0, 0, 1, 1], [], []>} : vector<8x128xbf16>, vector<128x256xbf16>, vector<8x256xf32> -> vector<8x256xf32>
      %c1_134 = arith.constant 1 : index
      %c0_135 = arith.constant 0 : index
      %c0_136 = arith.constant 0 : index
      %334 = vector.load %arg12[%c1_134, %c0_135, %c0_136] : memref<2x1x256xf32, #tpu.memory_space<vmem>>, vector<1x1x256xf32>
      %335 = vector.shape_cast %334 : vector<1x1x256xf32> to vector<1x256xf32>
      %336 = vector.broadcast %335 : vector<1x256xf32> to vector<8x256xf32>
      %337 = arith.addf %333, %336 : vector<8x256xf32>
      %338 = arith.mulf %337, %337 : vector<8x256xf32>
      %339 = arith.mulf %337, %338 : vector<8x256xf32>
      %cst_137 = arith.constant 4.471500e-02 : f32
      %340 = vector.broadcast %cst_137 : f32 to vector<8x256xf32>
      %341 = arith.mulf %340, %339 : vector<8x256xf32>
      %342 = arith.addf %337, %341 : vector<8x256xf32>
      %cst_138 = arith.constant 0.797884583 : f32
      %343 = vector.broadcast %cst_138 : f32 to vector<8x256xf32>
      %344 = arith.mulf %343, %342 : vector<8x256xf32>
      %345 = math.tanh %344 : vector<8x256xf32>
      %cst_139 = arith.constant 1.000000e+00 : f32
      %346 = vector.broadcast %cst_139 : f32 to vector<8x256xf32>
      %347 = arith.addf %346, %345 : vector<8x256xf32>
      %cst_140 = arith.constant 5.000000e-01 : f32
      %348 = vector.broadcast %cst_140 : f32 to vector<8x256xf32>
      %349 = arith.mulf %348, %347 : vector<8x256xf32>
      %350 = arith.mulf %337, %349 : vector<8x256xf32>
      %351 = arith.truncf %350 : vector<8x256xf32> to vector<8x256xbf16>
      %c1_141 = arith.constant 1 : index
      %c0_142 = arith.constant 0 : index
      %c0_143 = arith.constant 0 : index
      %352 = vector.load %arg13[%c1_141, %c0_142, %c0_143] : memref<2x256x128xbf16, #tpu.memory_space<vmem>>, vector<1x256x128xbf16>
      %353 = vector.shape_cast %352 : vector<1x256x128xbf16> to vector<256x128xbf16>
      %cst_144 = arith.constant dense<0.000000e+00> : vector<8x128xf32>
      %354 = tpu.matmul %351, %353, %cst_144 {dimension_numbers = #tpu.dot_dimension_numbers<[1], [0], [0], [1], [0, 0, 1, 1], [], []>} : vector<8x256xbf16>, vector<256x128xbf16>, vector<8x128xf32> -> vector<8x128xf32>
      %355 = arith.addf %301, %354 : vector<8x128xf32>
      %c1_145 = arith.constant 1 : index
      %c0_146 = arith.constant 0 : index
      %c0_147 = arith.constant 0 : index
      %356 = vector.load %arg14[%c1_145, %c0_146, %c0_147] : memref<2x1x128xf32, #tpu.memory_space<vmem>>, vector<1x1x128xf32>
      %357 = vector.shape_cast %356 : vector<1x1x128xf32> to vector<1x128xf32>
      %358 = vector.broadcast %357 : vector<1x128xf32> to vector<8x128xf32>
      %359 = arith.addf %355, %358 : vector<8x128xf32>
      %c1_i32_148 = arith.constant 1 : i32
      %360 = arith.addi %arg24, %c1_i32_148 : i32
      %361 = arith.cmpi sge, %360, %1 : i32
      %362 = arith.extui %361 : i1 to i32
      %c0_i32_149 = arith.constant 0 : i32
      %363 = arith.cmpi ne, %362, %c0_i32_149 : i32
      scf.if %363 {
        %c0_156 = arith.constant 0 : index
        %c0_157 = arith.constant 0 : index
        %376 = vector.load %arg17[%c0_156, %c0_157] : memref<1x128xf32, #tpu.memory_space<vmem>>, vector<1x128xf32>
        %c0_158 = arith.constant 0 : index
        %c0_159 = arith.constant 0 : index
        %377 = vector.load %arg18[%c0_158, %c0_159] : memref<1x128xf32, #tpu.memory_space<vmem>>, vector<1x128xf32>
        %cst_160 = arith.constant dense<0.000000e+00> : vector<8xf32>
        %378 = vector.multi_reduction <add>, %359, %cst_160 [1] : vector<8x128xf32> to vector<8xf32>
        %379 = vector.shape_cast %378 : vector<8xf32> to vector<8x1xf32>
        %cst_161 = arith.constant 1.280000e+02 : f32
        %380 = vector.broadcast %cst_161 : f32 to vector<8x1xf32>
        %381 = arith.divf %379, %380 : vector<8x1xf32>
        %382 = vector.broadcast %381 : vector<8x1xf32> to vector<8x128xf32>
        %383 = arith.subf %359, %382 : vector<8x128xf32>
        %384 = vector.broadcast %381 : vector<8x1xf32> to vector<8x128xf32>
        %385 = arith.subf %359, %384 : vector<8x128xf32>
        %386 = arith.mulf %383, %385 : vector<8x128xf32>
        %cst_162 = arith.constant dense<0.000000e+00> : vector<8xf32>
        %387 = vector.multi_reduction <add>, %386, %cst_162 [1] : vector<8x128xf32> to vector<8xf32>
        %388 = vector.shape_cast %387 : vector<8xf32> to vector<8x1xf32>
        %cst_163 = arith.constant 1.280000e+02 : f32
        %389 = vector.broadcast %cst_163 : f32 to vector<8x1xf32>
        %390 = arith.divf %388, %389 : vector<8x1xf32>
        %391 = vector.broadcast %381 : vector<8x1xf32> to vector<8x128xf32>
        %392 = arith.subf %359, %391 : vector<8x128xf32>
        %cst_164 = arith.constant 9.99999974E-6 : f32
        %393 = vector.broadcast %cst_164 : f32 to vector<8x1xf32>
        %394 = arith.addf %390, %393 : vector<8x1xf32>
        %395 = math.rsqrt %394 : vector<8x1xf32>
        %396 = vector.broadcast %395 : vector<8x1xf32> to vector<8x128xf32>
        %397 = arith.mulf %392, %396 : vector<8x128xf32>
        %398 = vector.broadcast %376 : vector<1x128xf32> to vector<8x128xf32>
        %399 = arith.mulf %397, %398 : vector<8x128xf32>
        %400 = vector.broadcast %377 : vector<1x128xf32> to vector<8x128xf32>
        %401 = arith.addf %399, %400 : vector<8x128xf32>
        %402 = arith.truncf %401 : vector<8x128xf32> to vector<8x128xbf16>
        %c0_165 = arith.constant 0 : index
        %c0_166 = arith.constant 0 : index
        %403 = vector.load %arg19[%c0_165, %c0_166] : memref<128x256xbf16, #tpu.memory_space<vmem>>, vector<128x256xbf16>
        %cst_167 = arith.constant dense<0.000000e+00> : vector<8x256xf32>
        %404 = tpu.matmul %402, %403, %cst_167 {dimension_numbers = #tpu.dot_dimension_numbers<[1], [0], [0], [1], [0, 0, 1, 1], [], []>} : vector<8x128xbf16>, vector<128x256xbf16>, vector<8x256xf32> -> vector<8x256xf32>
        %405 = arith.index_cast %arg24 : i32 to index
        %c0_168 = arith.constant 0 : index
        %c0_169 = arith.constant 0 : index
        %406 = vector.load %arg4[%405, %c0_168, %c0_169] : memref<16x8x256xf32, #tpu.memory_space<vmem>>, vector<1x8x256xf32>
        %407 = vector.shape_cast %406 : vector<1x8x256xf32> to vector<8x256xf32>
        %408 = arith.addf %404, %407 : vector<8x256xf32>
        %cst_170 = arith.constant dense<0xFF800000> : vector<8xf32>
        %409 = vector.multi_reduction <maximumf>, %408, %cst_170 [1] : vector<8x256xf32> to vector<8xf32>
        %410 = vector.shape_cast %409 : vector<8xf32> to vector<8x1xf32>
        %411 = vector.broadcast %410 : vector<8x1xf32> to vector<8x256xf32>
        %412 = arith.cmpf oge, %408, %411 : vector<8x256xf32>
        %cst_171 = arith.constant -1.000000e+00 : f32
        %413 = vector.shape_cast %7 : vector<1x256xf32> to vector<1x256xf32>
        %414 = vector.broadcast %413 : vector<1x256xf32> to vector<8x256xf32>
        %415 = vector.broadcast %cst_171 : f32 to vector<8x256xf32>
        %416 = arith.select %412, %414, %415 : vector<8x256xi1>, vector<8x256xf32>
        %cst_172 = arith.constant dense<0xFF800000> : vector<8xf32>
        %417 = vector.multi_reduction <maximumf>, %416, %cst_172 [1] : vector<8x256xf32> to vector<8xf32>
        %418 = vector.shape_cast %417 : vector<8xf32> to vector<8x1xf32>
        %419 = arith.fptosi %418 : vector<8x1xf32> to vector<8x1xi32>
        %c0_173 = arith.constant 0 : index
        %c0_174 = arith.constant 0 : index
        %420 = vector.load %arg23[%c0_173, %c0_174] : memref<8x1xi32, #tpu.memory_space<vmem>>, vector<8x1xi32>
        tpu.vector_store %arg23[%c0_173, %c0_174], %419 {strides = array<i32>} : memref<8x1xi32, #tpu.memory_space<vmem>>, vector<8x1xi32>,
      } else {
      }
      %c0_150 = arith.constant 0 : index
      %c0_151 = arith.constant 0 : index
      %364 = vector.load %arg23[%c0_150, %c0_151] : memref<8x1xi32, #tpu.memory_space<vmem>>, vector<8x1xi32>
      %c1_i32_152 = arith.constant 1 : i32
      %365 = arith.addi %arg24, %c1_i32_152 : i32
      %366 = vector.broadcast %365 : i32 to vector<8x16xi32>
      %367 = arith.cmpi eq, %5, %366 : vector<8x16xi32>
      %c0_i32_153 = arith.constant 0 : i32
      %368 = vector.broadcast %c0_i32_153 : i32 to vector<8x16xi32>
      %369 = arith.select %367, %9, %368 : vector<8x16xi1>, vector<8x16xi32>
      %cst_154 = arith.constant dense<0> : vector<8xi32>
      %370 = vector.multi_reduction <add>, %369, %cst_154 [1] : vector<8x16xi32> to vector<8xi32>
      %371 = vector.shape_cast %370 : vector<8xi32> to vector<8x1xi32>
      %c1_i32_155 = arith.constant 1 : i32
      %372 = arith.addi %arg24, %c1_i32_155 : i32
      %373 = vector.broadcast %372 : i32 to vector<8x1xi32>
      %374 = arith.cmpi slt, %373, %10 : vector<8x1xi32>
      %375 = arith.select %374, %371, %364 : vector<8x1xi1>, vector<8x1xi32>
      scf.yield %375, %25 : vector<8x1xi32>, vector<8x16xi32>
    }
    %c15_i32_7 = arith.constant 15 : i32
    %c15_i32_8 = arith.constant 15 : i32
    %15 = vector.broadcast %c15_i32_8 : i32 to vector<8x16xi32>
    %16 = arith.cmpi eq, %5, %15 : vector<8x16xi32>
    %17 = vector.shape_cast %14#0 : vector<8x1xi32> to vector<8x1xi32>
    %18 = vector.broadcast %17 : vector<8x1xi32> to vector<8x16xi32>
    %19 = arith.select %16, %18, %14#1 : vector<8x16xi1>, vector<8x16xi32>
    %c0_9 = arith.constant 0 : index
    %c0_10 = arith.constant 0 : index
    %20 = vector.load %arg20[%c0_9, %c0_10] : memref<8x16xi32, #tpu.memory_space<vmem>>, vector<8x16xi32>
    tpu.vector_store %arg20[%c0_9, %c0_10], %19 {strides = array<i32>} : memref<8x16xi32, #tpu.memory_space<vmem>>, vector<8x16xi32>,
    return
  }
  func.func @transform_0(%arg0: i32, %arg1: memref<1xi32, #tpu.memory_space<smem>>) -> (i32, i32) {
    %c0_i32 = arith.constant 0 : i32
    %c0_i32_0 = arith.constant 0 : i32
    return %arg0, %c0_i32 : i32, i32
  }
  func.func @transform_1(%arg0: i32, %arg1: memref<1xi32, #tpu.memory_space<smem>>) -> (i32, i32) {
    %c0_i32 = arith.constant 0 : i32
    %c0_i32_0 = arith.constant 0 : i32
    return %arg0, %c0_i32 : i32, i32
  }
  func.func @transform_2(%arg0: i32, %arg1: memref<1xi32, #tpu.memory_space<smem>>) -> (i32, i32, i32) {
    %c0_i32 = arith.constant 0 : i32
    %c0_i32_0 = arith.constant 0 : i32
    %c0_i32_1 = arith.constant 0 : i32
    return %c0_i32, %arg0, %c0_i32_0 : i32, i32, i32
  }
  func.func @transform_3(%arg0: i32, %arg1: memref<1xi32, #tpu.memory_space<smem>>) -> (i32, i32) {
    %c0_i32 = arith.constant 0 : i32
    %c0_i32_0 = arith.constant 0 : i32
    %c0_i32_1 = arith.constant 0 : i32
    return %c0_i32, %c0_i32_0 : i32, i32
  }
  func.func @transform_4(%arg0: i32, %arg1: memref<1xi32, #tpu.memory_space<smem>>) -> (i32, i32) {
    %c0_i32 = arith.constant 0 : i32
    %c0_i32_0 = arith.constant 0 : i32
    %c0_i32_1 = arith.constant 0 : i32
    return %c0_i32, %c0_i32_0 : i32, i32
  }
  func.func @transform_5(%arg0: i32, %arg1: memref<1xi32, #tpu.memory_space<smem>>) -> (i32, i32, i32) {
    %c0_i32 = arith.constant 0 : i32
    %c0_i32_0 = arith.constant 0 : i32
    %c0_i32_1 = arith.constant 0 : i32
    %c0_i32_2 = arith.constant 0 : i32
    return %c0_i32, %c0_i32_0, %c0_i32_1 : i32, i32, i32
  }
  func.func @transform_6(%arg0: i32, %arg1: memref<1xi32, #tpu.memory_space<smem>>) -> (i32, i32, i32) {
    %c0_i32 = arith.constant 0 : i32
    %c0_i32_0 = arith.constant 0 : i32
    %c0_i32_1 = arith.constant 0 : i32
    %c0_i32_2 = arith.constant 0 : i32
    return %c0_i32, %c0_i32_0, %c0_i32_1 : i32, i32, i32
  }
  func.func @transform_7(%arg0: i32, %arg1: memref<1xi32, #tpu.memory_space<smem>>) -> (i32, i32, i32) {
    %c0_i32 = arith.constant 0 : i32
    %c0_i32_0 = arith.constant 0 : i32
    %c0_i32_1 = arith.constant 0 : i32
    %c0_i32_2 = arith.constant 0 : i32
    return %c0_i32, %c0_i32_0, %c0_i32_1 : i32, i32, i32
  }
  func.func @transform_8(%arg0: i32, %arg1: memref<1xi32, #tpu.memory_space<smem>>) -> (i32, i32, i32) {
    %c0_i32 = arith.constant 0 : i32
    %c0_i32_0 = arith.constant 0 : i32
    %c0_i32_1 = arith.constant 0 : i32
    %c0_i32_2 = arith.constant 0 : i32
    return %c0_i32, %c0_i32_0, %c0_i32_1 : i32, i32, i32
  }
  func.func @transform_9(%arg0: i32, %arg1: memref<1xi32, #tpu.memory_space<smem>>) -> (i32, i32, i32) {
    %c0_i32 = arith.constant 0 : i32
    %c0_i32_0 = arith.constant 0 : i32
    %c0_i32_1 = arith.constant 0 : i32
    %c0_i32_2 = arith.constant 0 : i32
    return %c0_i32, %c0_i32_0, %c0_i32_1 : i32, i32, i32
  }
  func.func @transform_10(%arg0: i32, %arg1: memref<1xi32, #tpu.memory_space<smem>>) -> (i32, i32, i32) {
    %c0_i32 = arith.constant 0 : i32
    %c0_i32_0 = arith.constant 0 : i32
    %c0_i32_1 = arith.constant 0 : i32
    %c0_i32_2 = arith.constant 0 : i32
    return %c0_i32, %c0_i32_0, %c0_i32_1 : i32, i32, i32
  }
  func.func @transform_11(%arg0: i32, %arg1: memref<1xi32, #tpu.memory_space<smem>>) -> (i32, i32, i32) {
    %c0_i32 = arith.constant 0 : i32
    %c0_i32_0 = arith.constant 0 : i32
    %c0_i32_1 = arith.constant 0 : i32
    %c0_i32_2 = arith.constant 0 : i32
    return %c0_i32, %c0_i32_0, %c0_i32_1 : i32, i32, i32
  }
  func.func @transform_12(%arg0: i32, %arg1: memref<1xi32, #tpu.memory_space<smem>>) -> (i32, i32, i32) {
    %c0_i32 = arith.constant 0 : i32
    %c0_i32_0 = arith.constant 0 : i32
    %c0_i32_1 = arith.constant 0 : i32
    %c0_i32_2 = arith.constant 0 : i32
    return %c0_i32, %c0_i32_0, %c0_i32_1 : i32, i32, i32
  }
  func.func @transform_13(%arg0: i32, %arg1: memref<1xi32, #tpu.memory_space<smem>>) -> (i32, i32, i32) {
    %c0_i32 = arith.constant 0 : i32
    %c0_i32_0 = arith.constant 0 : i32
    %c0_i32_1 = arith.constant 0 : i32
    %c0_i32_2 = arith.constant 0 : i32
    return %c0_i32, %c0_i32_0, %c0_i32_1 : i32, i32, i32
  }
  func.func @transform_14(%arg0: i32, %arg1: memref<1xi32, #tpu.memory_space<smem>>) -> (i32, i32, i32) {
    %c0_i32 = arith.constant 0 : i32
    %c0_i32_0 = arith.constant 0 : i32
    %c0_i32_1 = arith.constant 0 : i32
    %c0_i32_2 = arith.constant 0 : i32
    return %c0_i32, %c0_i32_0, %c0_i32_1 : i32, i32, i32
  }
  func.func @transform_15(%arg0: i32, %arg1: memref<1xi32, #tpu.memory_space<smem>>) -> (i32, i32) {
    %c0_i32 = arith.constant 0 : i32
    %c0_i32_0 = arith.constant 0 : i32
    %c0_i32_1 = arith.constant 0 : i32
    return %c0_i32, %c0_i32_0 : i32, i32
  }
  func.func @transform_16(%arg0: i32, %arg1: memref<1xi32, #tpu.memory_space<smem>>) -> (i32, i32) {
    %c0_i32 = arith.constant 0 : i32
    %c0_i32_0 = arith.constant 0 : i32
    %c0_i32_1 = arith.constant 0 : i32
    return %c0_i32, %c0_i32_0 : i32, i32
  }
  func.func @transform_17(%arg0: i32, %arg1: memref<1xi32, #tpu.memory_space<smem>>) -> (i32, i32) {
    %c0_i32 = arith.constant 0 : i32
    %c0_i32_0 = arith.constant 0 : i32
    %c0_i32_1 = arith.constant 0 : i32
    return %c0_i32, %c0_i32_0 : i32, i32
  }
  func.func @transform_18(%arg0: i32, %arg1: memref<1xi32, #tpu.memory_space<smem>>) -> (i32, i32) {
    %c0_i32 = arith.constant 0 : i32
    %c0_i32_0 = arith.constant 0 : i32
    return %arg0, %c0_i32 : i32, i32
  }
}

</mosaic_0001>

<llo_original>
// kernel: _decode_batch.1
$region0: #{_decode_batch.1}
  #allocation0 [shape = 'u32[]', space=smem, size = 0x4, offset = 0x4, fixed_abs, tag = 'smem constant byte address 0x4 - core index']
  #allocation1 [shape = 'u32[144,128]{1,0:T(1,128)}', space=vmem, size = 0x12000, scoped, tag = 'internal scratch']
  #allocation2 [shape = 'f32[32,8,128]{2,1,0:T(8,128)}', space=vmem, size = 0x20000, scoped, tag = 'scratch operand']
  #allocation3 [shape = 'f32[32,8,128]{2,1,0:T(8,128)}', space=vmem, size = 0x20000, scoped, tag = 'scratch operand']
  #allocation4 [shape = 's32[8,1]{1,0:T(8,128)}', space=vmem, size = 0x1000, scoped, tag = 'scratch operand']
  #allocation5 [shape = 's32[1]{0}', space=sflag, size = 0x4, scoped, tag = 'scoped memory for _decode_batch.1']
  #allocation6 [shape = 's32[1]{0:T(128)S(6)}', space=smem, size = 0x200, scoped, tag = 'prefetched SMEM operand 0']
  %s0 = inlined_call_operand.<no memory space> [shape: s32[1], index: 0, kind: input, shape index: {}]
  %s1 = inlined_call_operand.vmem [shape: s32[8,16], index: 1, kind: input, shape index: {}]
  %s2 = inlined_call_operand.vmem [shape: s32[8,1], index: 2, kind: input, shape index: {}]
  %s3 = inlined_call_operand.hbm [shape: f32[16,8,256], index: 3, kind: input, shape index: {}]
  %s4 = inlined_call_operand.hbm [shape: bf16[256,128], index: 4, kind: input, shape index: {}]
  %s5 = inlined_call_operand.vmem [shape: f32[16,128], index: 5, kind: input, shape index: {}]
  %s6 = inlined_call_operand.hbm [shape: bf16[2,128,384], index: 6, kind: input, shape index: {}]
  %s7 = inlined_call_operand.hbm [shape: bf16[2,128,128], index: 7, kind: input, shape index: {}]
  %s8 = inlined_call_operand.vmem [shape: f32[2,1,128], index: 8, kind: input, shape index: {}]
  %s9 = inlined_call_operand.vmem [shape: f32[2,1,128], index: 9, kind: input, shape index: {}]
  %s10 = inlined_call_operand.hbm [shape: bf16[2,128,256], index: 10, kind: input, shape index: {}]
  %s11 = inlined_call_operand.vmem [shape: f32[2,1,256], index: 11, kind: input, shape index: {}]
  %s12 = inlined_call_operand.hbm [shape: bf16[2,256,128], index: 12, kind: input, shape index: {}]
  %s13 = inlined_call_operand.hbm [shape: f32[2,1,128], index: 13, kind: input, shape index: {}]
  %s14 = inlined_call_operand.hbm [shape: f32[2,1,128], index: 14, kind: input, shape index: {}]
  %s15 = inlined_call_operand.hbm [shape: f32[2,1,128], index: 15, kind: input, shape index: {}]
  %s16 = inlined_call_operand.hbm [shape: f32[1,128], index: 16, kind: input, shape index: {}]
  %s17 = inlined_call_operand.hbm [shape: f32[1,128], index: 17, kind: input, shape index: {}]
  %s18 = inlined_call_operand.hbm [shape: bf16[128,256], index: 18, kind: input, shape index: {}]
  %s19 = inlined_call_operand.hbm [shape: s32[8,16], index: 19, kind: output, shape index: {}]
  %s20 = sld [smem:[#allocation0]]
  $region145: #{_decode_batch.1} parent=0
    _
  %s22 = ssub.s32 1, %s20
  %s23 = scalar_select 0, %s22, %s20
  %24 = sst [smem:[#allocation6]] %s0
  $region1: #{_decode_batch.1} parent=0
    #allocation7 [shape = 'u8[131072]{0}', space=vmem, size = 0x20000, scoped, tag = 'input window, operand 3, single buffered']
    #allocation8 [shape = 's32[1]{0}', space=sflag, size = 0x4, scoped, tag = 'scoped memory for _decode_batch.1']
    #allocation9 [shape = 's32[1]{0}', space=sflag, size = 0x4, scoped, tag = 'scoped memory for _decode_batch.1']
    #allocation10 [shape = 'u8[65536]{0}', space=vmem, size = 0x10000, scoped, tag = 'input window, operand 4, single buffered']
    #allocation11 [shape = 's32[1]{0}', space=sflag, size = 0x4, scoped, tag = 'scoped memory for _decode_batch.1']
    #allocation12 [shape = 'u8[196608]{0}', space=vmem, size = 0x30000, scoped, tag = 'input window, operand 6, single buffered']
    #allocation13 [shape = 'u8[65536]{0}', space=vmem, size = 0x10000, scoped, tag = 'input window, operand 7, single buffered']
    #allocation14 [shape = 's32[1]{0}', space=sflag, size = 0x4, scoped, tag = 'scoped memory for _decode_batch.1']
    #allocation15 [shape = 'u8[131072]{0}', space=vmem, size = 0x20000, scoped, tag = 'input window, operand 10, single buffered']
    #allocation16 [shape = 'u8[131072]{0}', space=vmem, size = 0x20000, scoped, tag = 'input window, operand 12, single buffered']
    #allocation17 [shape = 's32[1]{0}', space=sflag, size = 0x4, scoped, tag = 'scoped memory for _decode_batch.1']
    #allocation18 [shape = 'u8[1024]{0}', space=vmem, size = 0x400, scoped, tag = 'input window, operand 13, single buffered']
    #allocation19 [shape = 'u8[1024]{0}', space=vmem, size = 0x400, scoped, tag = 'input window, operand 14, single buffered']
    #allocation20 [shape = 's32[1]{0}', space=sflag, size = 0x4, scoped, tag = 'scoped memory for _decode_batch.1']
    #allocation21 [shape = 'u8[1024]{0}', space=vmem, size = 0x400, scoped, tag = 'input window, operand 15, single buffered']
    #allocation22 [shape = 'u8[512]{0}', space=vmem, size = 0x400, scoped, tag = 'input window, operand 16, single buffered']
    #allocation23 [shape = 's32[1]{0}', space=sflag, size = 0x4, scoped, tag = 'scoped memory for _decode_batch.1']
    #allocation24 [shape = 'u8[512]{0}', space=vmem, size = 0x400, scoped, tag = 'input window, operand 17, single buffered']
    #allocation25 [shape = 'u8[65536]{0}', space=vmem, size = 0x10000, scoped, tag = 'input window, operand 18, single buffered']
    #allocation26 [shape = 's32[1]{0}', space=sflag, size = 0x4, scoped, tag = 'scoped memory for _decode_batch.1']
    #allocation27 [shape = 'u8[4096]{0}', space=vmem, size = 0x1000, scoped, tag = 'output window, operand 0, single buffered']
    %25 = vsyncpa [#allocation8], 0
    %26 = vsyncpa [#allocation11], 0
    %27 = vsyncpa [#allocation14], 0
    %28 = vsyncpa [#allocation17], 0
    %29 = vsyncpa [#allocation20], 0
    %30 = vsyncpa [#allocation23], 0
    %31 = vsyncpa [#allocation26], 0
    %32 = vsyncpa [#allocation9], 0
    // Predicated region
    $region2: #{_decode_batch.1} parent=1 // pred_check
      _
    $region3: #{_decode_batch.1} parent=1 // pred_check_branch
      %34 = sbr.rel (0) target = $region5
    $region4: #{_decode_batch.1} parent=1 // pred_region
      _
    $region5: #{_decode_batch.1} parent=1 // pred_fallthru
      _
    // Predicated region
    $region6: #{_decode_batch.1} parent=1 // pred_check
      _
    $region7: #{_decode_batch.1} parent=1 // pred_check_branch
      %36 = sbr.rel (0) target = $region9
    $region8: #{_decode_batch.1} parent=1 // pred_region
      _
    $region9: #{_decode_batch.1} parent=1 // pred_fallthru
      _
    // Predicated region
    $region10: #{_decode_batch.1} parent=1 // pred_check
      _
    $region11: #{_decode_batch.1} parent=1 // pred_check_branch
      %38 = sbr.rel (0) target = $region13
    $region12: #{_decode_batch.1} parent=1 // pred_region
      %s40 = ssub.s32 4096, 4096
      %41 = vsyncadd [#allocation8], %s40
      %s42 = sshll.u32 [#allocation7], 4
      %s43 = int_to_ptr.vmem [resolvable:$true] %s42
      %48 = dma.hbm_to_vmem [thread:$0]  %s3, 4096, %s43, [#allocation8], 256, 256, 16
    $region13: #{_decode_batch.1} parent=1 // pred_fallthru
      _
    // Predicated region
    $region14: #{_decode_batch.1} parent=1 // pred_check
      _
    $region15: #{_decode_batch.1} parent=1 // pred_check_branch
      %50 = sbr.rel (0) target = $region17
    $region16: #{_decode_batch.1} parent=1 // pred_region
      %s52 = ssub.s32 2048, 2048
      %53 = vsyncadd [#allocation11], %s52
      %s54 = sshll.u32 [#allocation10], 4
      %s55 = int_to_ptr.vmem [resolvable:$true] %s54
      %60 = dma.hbm_to_vmem [thread:$0]  %s4, 2048, %s55, [#allocation11], 64, 64, 4
    $region17: #{_decode_batch.1} parent=1 // pred_fallthru
      _
    // Predicated region
    $region18: #{_decode_batch.1} parent=1 // pred_check
      _
    $region19: #{_decode_batch.1} parent=1 // pred_check_branch
      %62 = sbr.rel (0) target = $region21
    $region20: #{_decode_batch.1} parent=1 // pred_region
      _
    $region21: #{_decode_batch.1} parent=1 // pred_fallthru
      _
    // Predicated region
    $region22: #{_decode_batch.1} parent=1 // pred_check
      _
    $region23: #{_decode_batch.1} parent=1 // pred_check_branch
      %64 = sbr.rel (0) target = $region25
    $region24: #{_decode_batch.1} parent=1 // pred_region
      %s66 = ssub.s32 6144, 6144
      %67 = vsyncadd [#allocation11], %s66
      %s68 = sshll.u32 [#allocation12], 4
      %s69 = int_to_ptr.vmem [resolvable:$true] %s68
      %74 = dma.hbm_to_vmem [thread:$0]  %s6, 6144, %s69, [#allocation11], 192, 192, 12
    $region25: #{_decode_batch.1} parent=1 // pred_fallthru
      _
    // Predicated region
    $region26: #{_decode_batch.1} parent=1 // pred_check
      _
    $region27: #{_decode_batch.1} parent=1 // pred_check_branch
      %76 = sbr.rel (0) target = $region29
    $region28: #{_decode_batch.1} parent=1 // pred_region
      %s78 = ssub.s32 2048, 2048
      %79 = vsyncadd [#allocation14], %s78
      %s80 = sshll.u32 [#allocation13], 4
      %s81 = int_to_ptr.vmem [resolvable:$true] %s80
      %86 = dma.hbm_to_vmem [thread:$0]  %s7, 2048, %s81, [#allocation14], 64, 64, 4
    $region29: #{_decode_batch.1} parent=1 // pred_fallthru
      _
    // Predicated region
    $region30: #{_decode_batch.1} parent=1 // pred_check
      _
    $region31: #{_decode_batch.1} parent=1 // pred_check_branch
      %88 = sbr.rel (0) target = $region33
    $region32: #{_decode_batch.1} parent=1 // pred_region
      _
    $region33: #{_decode_batch.1} parent=1 // pred_fallthru
      _
    // Predicated region
    $region34: #{_decode_batch.1} parent=1 // pred_check
      _
    $region35: #{_decode_batch.1} parent=1 // pred_check_branch
      %90 = sbr.rel (0) target = $region37
    $region36: #{_decode_batch.1} parent=1 // pred_region
      _
    $region37: #{_decode_batch.1} parent=1 // pred_fallthru
      _
    // Predicated region
    $region38: #{_decode_batch.1} parent=1 // pred_check
      _
    $region39: #{_decode_batch.1} parent=1 // pred_check_branch
      %92 = sbr.rel (0) target = $region41
    $region40: #{_decode_batch.1} parent=1 // pred_region
      %s94 = ssub.s32 4096, 4096
      %95 = vsyncadd [#allocation14], %s94
      %s96 = sshll.u32 [#allocation15], 4
      %s97 = int_to_ptr.vmem [resolvable:$true] %s96
      %102 = dma.hbm_to_vmem [thread:$0]  %s10, 4096, %s97, [#allocation14], 128, 128, 8
    $region41: #{_decode_batch.1} parent=1 // pred_fallthru
      _
    // Predicated region
    $region42: #{_decode_batch.1} parent=1 // pred_check
      _
    $region43: #{_decode_batch.1} parent=1 // pred_check_branch
      %104 = sbr.rel (0) target = $region45
    $region44: #{_decode_batch.1} parent=1 // pred_region
      _
    $region45: #{_decode_batch.1} parent=1 // pred_fallthru
      _
    // Predicated region
    $region46: #{_decode_batch.1} parent=1 // pred_check
      _
    $region47: #{_decode_batch.1} parent=1 // pred_check_branch
      %106 = sbr.rel (0) target = $region49
    $region48: #{_decode_batch.1} parent=1 // pred_region
      %s108 = ssub.s32 4096, 4096
      %109 = vsyncadd [#allocation17], %s108
      %s110 = sshll.u32 [#allocation16], 4
      %s111 = int_to_ptr.vmem [resolvable:$true] %s110
      %116 = dma.hbm_to_vmem [thread:$0]  %s12, 4096, %s111, [#allocation17], 64, 64, 4
    $region49: #{_decode_batch.1} parent=1 // pred_fallthru
      _
    // Predicated region
    $region50: #{_decode_batch.1} parent=1 // pred_check
      _
    $region51: #{_decode_batch.1} parent=1 // pred_check_branch
      %118 = sbr.rel (0) target = $region53
    $region52: #{_decode_batch.1} parent=1 // pred_region
      %s120 = ssub.s32 32, 32
      %121 = vsyncadd [#allocation17], %s120
      %s122 = sshll.u32 [#allocation18], 4
      %s123 = int_to_ptr.vmem [resolvable:$true] %s122
      %128 = dma.hbm_to_vmem [thread:$0]  %s13, 32, %s123, [#allocation17], 16, 16, 1
    $region53: #{_decode_batch.1} parent=1 // pred_fallthru
      _
    // Predicated region
    $region54: #{_decode_batch.1} parent=1 // pred_check
      _
    $region55: #{_decode_batch.1} parent=1 // pred_check_branch
      %130 = sbr.rel (0) target = $region57
    $region56: #{_decode_batch.1} parent=1 // pred_region
      %s132 = ssub.s32 32, 32
      %133 = vsyncadd [#allocation20], %s132
      %s134 = sshll.u32 [#allocation19], 4
      %s135 = int_to_ptr.vmem [resolvable:$true] %s134
      %140 = dma.hbm_to_vmem [thread:$0]  %s14, 32, %s135, [#allocation20], 16, 16, 1
    $region57: #{_decode_batch.1} parent=1 // pred_fallthru
      _
    // Predicated region
    $region58: #{_decode_batch.1} parent=1 // pred_check
      _
    $region59: #{_decode_batch.1} parent=1 // pred_check_branch
      %142 = sbr.rel (0) target = $region61
    $region60: #{_decode_batch.1} parent=1 // pred_region
      %s144 = ssub.s32 32, 32
      %145 = vsyncadd [#allocation20], %s144
      %s146 = sshll.u32 [#allocation21], 4
      %s147 = int_to_ptr.vmem [resolvable:$true] %s146
      %152 = dma.hbm_to_vmem [thread:$0]  %s15, 32, %s147, [#allocation20], 16, 16, 1
    $region61: #{_decode_batch.1} parent=1 // pred_fallthru
      _
    // Predicated region
    $region62: #{_decode_batch.1} parent=1 // pred_check
      _
    $region63: #{_decode_batch.1} parent=1 // pred_check_branch
      %154 = sbr.rel (0) target = $region65
    $region64: #{_decode_batch.1} parent=1 // pred_region
      %s156 = ssub.s32 16, 16
      %157 = vsyncadd [#allocation23], %s156
      %s159 = sshll.u32 [#allocation22], 4
      %s160 = int_to_ptr.vmem [resolvable:$true] %s159
      %162 = dma.hbm_to_vmem [thread:$0]  %s16, 16, %s160, [#allocation23]
    $region65: #{_decode_batch.1} parent=1 // pred_fallthru
      _
    // Predicated region
    $region66: #{_decode_batch.1} parent=1 // pred_check
      _
    $region67: #{_decode_batch.1} parent=1 // pred_check_branch
      %164 = sbr.rel (0) target = $region69
    $region68: #{_decode_batch.1} parent=1 // pred_region
      %s166 = ssub.s32 16, 16
      %167 = vsyncadd [#allocation23], %s166
      %s169 = sshll.u32 [#allocation24], 4
      %s170 = int_to_ptr.vmem [resolvable:$true] %s169
      %172 = dma.hbm_to_vmem [thread:$0]  %s17, 16, %s170, [#allocation23]
    $region69: #{_decode_batch.1} parent=1 // pred_fallthru
      _
    // Predicated region
    $region70: #{_decode_batch.1} parent=1 // pred_check
      _
    $region71: #{_decode_batch.1} parent=1 // pred_check_branch
      %174 = sbr.rel (0) target = $region73
    $region72: #{_decode_batch.1} parent=1 // pred_region
      %s176 = ssub.s32 2048, 2048
      %177 = vsyncadd [#allocation26], %s176
      %s178 = sshll.u32 [#allocation25], 4
      %s179 = int_to_ptr.vmem [resolvable:$true] %s178
      %184 = dma.hbm_to_vmem [thread:$0]  %s18, 2048, %s179, [#allocation26], 128, 128, 8
    $region73: #{_decode_batch.1} parent=1 // pred_fallthru
      _
    // Predicated region
    $region74: #{_decode_batch.1} parent=1 // pred_check
      _
    $region75: #{_decode_batch.1} parent=1 // pred_check_branch
      %186 = sbr.rel (0) target = $region77
    $region76: #{_decode_batch.1} parent=1 // pred_region
      %187 = dma.done [#allocation8], 4096
    $region77: #{_decode_batch.1} parent=1 // pred_fallthru
      _
    // Predicated region
    $region78: #{_decode_batch.1} parent=1 // pred_check
      _
    $region79: #{_decode_batch.1} parent=1 // pred_check_branch
      %189 = sbr.rel (0) target = $region81
    $region80: #{_decode_batch.1} parent=1 // pred_region
      %190 = dma.done [#allocation11], 2048
    $region81: #{_decode_batch.1} parent=1 // pred_fallthru
      _
    // Predicated region
    $region82: #{_decode_batch.1} parent=1 // pred_check
      _
    $region83: #{_decode_batch.1} parent=1 // pred_check_branch
      %192 = sbr.rel (0) target = $region85
    $region84: #{_decode_batch.1} parent=1 // pred_region
      %193 = dma.done [#allocation11], 6144
    $region85: #{_decode_batch.1} parent=1 // pred_fallthru
      _
    // Predicated region
    $region86: #{_decode_batch.1} parent=1 // pred_check
      _
    $region87: #{_decode_batch.1} parent=1 // pred_check_branch
      %195 = sbr.rel (0) target = $region89
    $region88: #{_decode_batch.1} parent=1 // pred_region
      %196 = dma.done [#allocation14], 2048
    $region89: #{_decode_batch.1} parent=1 // pred_fallthru
      _
    // Predicated region
    $region90: #{_decode_batch.1} parent=1 // pred_check
      _
    $region91: #{_decode_batch.1} parent=1 // pred_check_branch
      %198 = sbr.rel (0) target = $region93
    $region92: #{_decode_batch.1} parent=1 // pred_region
      %199 = dma.done [#allocation14], 4096
    $region93: #{_decode_batch.1} parent=1 // pred_fallthru
      _
    // Predicated region
    $region94: #{_decode_batch.1} parent=1 // pred_check
      _
    $region95: #{_decode_batch.1} parent=1 // pred_check_branch
      %201 = sbr.rel (0) target = $region97
    $region96: #{_decode_batch.1} parent=1 // pred_region
      %202 = dma.done [#allocation17], 4096
    $region97: #{_decode_batch.1} parent=1 // pred_fallthru
      _
    // Predicated region
    $region98: #{_decode_batch.1} parent=1 // pred_check
      _
    $region99: #{_decode_batch.1} parent=1 // pred_check_branch
      %204 = sbr.rel (0) target = $region101
    $region100: #{_decode_batch.1} parent=1 // pred_region
      %205 = dma.done [#allocation17], 32
    $region101: #{_decode_batch.1} parent=1 // pred_fallthru
      _
    // Predicated region
    $region102: #{_decode_batch.1} parent=1 // pred_check
      _
    $region103: #{_decode_batch.1} parent=1 // pred_check_branch
      %207 = sbr.rel (0) target = $region105
    $region104: #{_decode_batch.1} parent=1 // pred_region
      %208 = dma.done [#allocation20], 32
    $region105: #{_decode_batch.1} parent=1 // pred_fallthru
      _
    // Predicated region
    $region106: #{_decode_batch.1} parent=1 // pred_check
      _
    $region107: #{_decode_batch.1} parent=1 // pred_check_branch
      %210 = sbr.rel (0) target = $region109
    $region108: #{_decode_batch.1} parent=1 // pred_region
      %211 = dma.done [#allocation20], 32
    $region109: #{_decode_batch.1} parent=1 // pred_fallthru
      _
    // Predicated region
    $region110: #{_decode_batch.1} parent=1 // pred_check
      _
    $region111: #{_decode_batch.1} parent=1 // pred_check_branch
      %213 = sbr.rel (0) target = $region113
    $region112: #{_decode_batch.1} parent=1 // pred_region
      %214 = dma.done [#allocation23], 16
    $region113: #{_decode_batch.1} parent=1 // pred_fallthru
      _
    // Predicated region
    $region114: #{_decode_batch.1} parent=1 // pred_check
      _
    $region115: #{_decode_batch.1} parent=1 // pred_check_branch
      %216 = sbr.rel (0) target = $region117
    $region116: #{_decode_batch.1} parent=1 // pred_region
      %217 = dma.done [#allocation23], 16
    $region117: #{_decode_batch.1} parent=1 // pred_fallthru
      _
    // Predicated region
    $region118: #{_decode_batch.1} parent=1 // pred_check
      _
    $region119: #{_decode_batch.1} parent=1 // pred_check_branch
      %219 = sbr.rel (0) target = $region121
    $region120: #{_decode_batch.1} parent=1 // pred_region
      %220 = dma.done [#allocation26], 2048
    $region121: #{_decode_batch.1} parent=1 // pred_fallthru
      _
    %s222 = sld [smem:[#allocation6]]
    %p223 = scmp.eq.s32.totalorder 0, 0
    // Predicated region
    $region122: #{_decode_batch.1} parent=1 // pred_check
      %p224 = pneg %p223
    $region123: #{_decode_batch.1} parent=1 // pred_check_branch
      %226 = sbr.rel (%p224) target = $region125
    $region124: #{_decode_batch.1} parent=1 // pred_region
      %227 = vst [vmem:[#allocation2] sm:$0xff] 0.0
      %228 = vst [vmem:[#allocation2 + $0x8] sm:$0xff] 0.0
      %229 = vst [vmem:[#allocation2 + $0x10] sm:$0xff] 0.0
      %230 = vst [vmem:[#allocation2 + $0x18] sm:$0xff] 0.0
      %231 = vst [vmem:[#allocation2 + $0x20] sm:$0xff] 0.0
      %232 = vst [vmem:[#allocation2 + $0x28] sm:$0xff] 0.0
      %233 = vst [vmem:[#allocation2 + $0x30] sm:$0xff] 0.0
      %234 = vst [vmem:[#allocation2 + $0x38] sm:$0xff] 0.0
      %235 = vst [vmem:[#allocation2 + $0x40] sm:$0xff] 0.0
      %236 = vst [vmem:[#allocation2 + $0x48] sm:$0xff] 0.0
      %237 = vst [vmem:[#allocation2 + $0x50] sm:$0xff] 0.0
      %238 = vst [vmem:[#allocation2 + $0x58] sm:$0xff] 0.0
      %239 = vst [vmem:[#allocation2 + $0x60] sm:$0xff] 0.0
      %240 = vst [vmem:[#allocation2 + $0x68] sm:$0xff] 0.0
      %241 = vst [vmem:[#allocation2 + $0x70] sm:$0xff] 0.0
      %242 = vst [vmem:[#allocation2 + $0x78] sm:$0xff] 0.0
      %243 = vst [vmem:[#allocation2 + $0x80] sm:$0xff] 0.0
      %244 = vst [vmem:[#allocation2 + $0x88] sm:$0xff] 0.0
      %245 = vst [vmem:[#allocation2 + $0x90] sm:$0xff] 0.0
      %246 = vst [vmem:[#allocation2 + $0x98] sm:$0xff] 0.0
      %247 = vst [vmem:[#allocation2 + $0xa0] sm:$0xff] 0.0
      %248 = vst [vmem:[#allocation2 + $0xa8] sm:$0xff] 0.0
      %249 = vst [vmem:[#allocation2 + $0xb0] sm:$0xff] 0.0
      %250 = vst [vmem:[#allocation2 + $0xb8] sm:$0xff] 0.0
      %251 = vst [vmem:[#allocation2 + $0xc0] sm:$0xff] 0.0
      %252 = vst [vmem:[#allocation2 + $0xc8] sm:$0xff] 0.0
      %253 = vst [vmem:[#allocation2 + $0xd0] sm:$0xff] 0.0
      %254 = vst [vmem:[#allocation2 + $0xd8] sm:$0xff] 0.0
      %255 = vst [vmem:[#allocation2 + $0xe0] sm:$0xff] 0.0
      %256 = vst [vmem:[#allocation2 + $0xe8] sm:$0xff] 0.0
      %257 = vst [vmem:[#allocation2 + $0xf0] sm:$0xff] 0.0
      %258 = vst [vmem:[#allocation2 + $0xf8] sm:$0xff] 0.0
      %259 = vst [vmem:[#allocation3] sm:$0xff] 0.0
      %260 = vst [vmem:[#allocation3 + $0x8] sm:$0xff] 0.0
      %261 = vst [vmem:[#allocation3 + $0x10] sm:$0xff] 0.0
      %262 = vst [vmem:[#allocation3 + $0x18] sm:$0xff] 0.0
      %263 = vst [vmem:[#allocation3 + $0x20] sm:$0xff] 0.0
      %264 = vst [vmem:[#allocation3 + $0x28] sm:$0xff] 0.0
      %265 = vst [vmem:[#allocation3 + $0x30] sm:$0xff] 0.0
      %266 = vst [vmem:[#allocation3 + $0x38] sm:$0xff] 0.0
      %267 = vst [vmem:[#allocation3 + $0x40] sm:$0xff] 0.0
      %268 = vst [vmem:[#allocation3 + $0x48] sm:$0xff] 0.0
      %269 = vst [vmem:[#allocation3 + $0x50] sm:$0xff] 0.0
      %270 = vst [vmem:[#allocation3 + $0x58] sm:$0xff] 0.0
      %271 = vst [vmem:[#allocation3 + $0x60] sm:$0xff] 0.0
      %272 = vst [vmem:[#allocation3 + $0x68] sm:$0xff] 0.0
      %273 = vst [vmem:[#allocation3 + $0x70] sm:$0xff] 0.0
      %274 = vst [vmem:[#allocation3 + $0x78] sm:$0xff] 0.0
      %275 = vst [vmem:[#allocation3 + $0x80] sm:$0xff] 0.0
      %276 = vst [vmem:[#allocation3 + $0x88] sm:$0xff] 0.0
      %277 = vst [vmem:[#allocation3 + $0x90] sm:$0xff] 0.0
      %278 = vst [vmem:[#allocation3 + $0x98] sm:$0xff] 0.0
      %279 = vst [vmem:[#allocation3 + $0xa0] sm:$0xff] 0.0
      %280 = vst [vmem:[#allocation3 + $0xa8] sm:$0xff] 0.0
      %281 = vst [vmem:[#allocation3 + $0xb0] sm:$0xff] 0.0
      %282 = vst [vmem:[#allocation3 + $0xb8] sm:$0xff] 0.0
      %283 = vst [vmem:[#allocation3 + $0xc0] sm:$0xff] 0.0
      %284 = vst [vmem:[#allocation3 + $0xc8] sm:$0xff] 0.0
      %285 = vst [vmem:[#allocation3 + $0xd0] sm:$0xff] 0.0
      %286 = vst [vmem:[#allocation3 + $0xd8] sm:$0xff] 0.0
      %287 = vst [vmem:[#allocation3 + $0xe0] sm:$0xff] 0.0
      %288 = vst [vmem:[#allocation3 + $0xe8] sm:$0xff] 0.0
      %289 = vst [vmem:[#allocation3 + $0xf0] sm:$0xff] 0.0
      %290 = vst [vmem:[#allocation3 + $0xf8] sm:$0xff] 0.0
    $region125: #{_decode_batch.1} parent=1 // pred_fallthru
      _
    %v291 = vlaneseq
    %v292 = vand.u32 %v291, 127
    %v293 = vadd.s32 %v292, 128
    %v294 = vcvt.s32.f32 %v292
    %v295 = vcvt.s32.f32 %v293
    %v296 = vlaneseq
    %v297 = vshrl.u32 %v296, 7
    %v298 = vadd.s32 %v297, 8
    %v299 = vld [vmem:[%s1] sm:$0xff]
    %v300 = vld [vmem:[%s2] sm:$0xff]
    loop: start=0, step=1, limit=15
    $region126: #{_decode_batch.1} parent=1 // loop_pre_header
      _
    $region127: #{_decode_batch.1} parent=1 // loop_header
      %s302 = sphi 0, %s306
      %p303 = scmp.ge.s32.totalorder %s302, 15
      %v307 = vphi %v299, %v3798
      %v308 = vphi 0, %v314
    $region128: #{_decode_batch.1} parent=1 // loop_header_branch
      %305 = sbr.rel (%p303) target = $region132
    $region129: #{_decode_batch.1} parent=1 // loop_body
      %v309 = vstv %s302
      %vm310 = vcmp.eq.s32.totalorder %v292, %v309
      %311 = vset.pattern.permute.xlu0 0
      %312 = vperm.xlu0 %311, %v307
      %v313 = vpop.permute.xlu0 %312
      %v314 = vsel %vm310, %v313, %v308
      %vm315 = vcmp.eq.s32.totalorder %v292, %v313
      %vm316 = vcmp.eq.s32.totalorder %v293, %v313
      %v317 = vsel %vm315, 1, 0
      %v318 = vsel %vm316, 1, 0
      %v319 = vcvt.s32.f32 %v317
      %v320 = vcvt.s32.f32 %v318
      %v321 = vpack.c.bf16 %v319, %v319
      %v322 = vpack.c.bf16 %v320, %v320
      %v323 = vld [vmem:[#allocation10] sm:$0xf]
      %v324 = vld [vmem:[#allocation10 + $0x4] sm:$0xf]
      %v325 = vld [vmem:[#allocation10 + $0x8] sm:$0xf]
      %v326 = vld [vmem:[#allocation10 + $0xc] sm:$0xf]
      %v327 = vld [vmem:[#allocation10 + $0x10] sm:$0xf]
      %v328 = vld [vmem:[#allocation10 + $0x14] sm:$0xf]
      %v329 = vld [vmem:[#allocation10 + $0x18] sm:$0xf]
      %v330 = vld [vmem:[#allocation10 + $0x1c] sm:$0xf]
      %v331 = vld [vmem:[#allocation10 + $0x20] sm:$0xf]
      %v332 = vld [vmem:[#allocation10 + $0x24] sm:$0xf]
      %v333 = vld [vmem:[#allocation10 + $0x28] sm:$0xf]
      %v334 = vld [vmem:[#allocation10 + $0x2c] sm:$0xf]
      %v335 = vld [vmem:[#allocation10 + $0x30] sm:$0xf]
      %v336 = vld [vmem:[#allocation10 + $0x34] sm:$0xf]
      %v337 = vld [vmem:[#allocation10 + $0x38] sm:$0xf]
      %v338 = vld [vmem:[#allocation10 + $0x3c] sm:$0xf]
      %v339 = vld [vmem:[#allocation10 + $0x40] sm:$0xf]
      %v340 = vld [vmem:[#allocation10 + $0x44] sm:$0xf]
      %v341 = vld [vmem:[#allocation10 + $0x48] sm:$0xf]
      %v342 = vld [vmem:[#allocation10 + $0x4c] sm:$0xf]
      %v343 = vld [vmem:[#allocation10 + $0x50] sm:$0xf]
      %v344 = vld [vmem:[#allocation10 + $0x54] sm:$0xf]
      %v345 = vld [vmem:[#allocation10 + $0x58] sm:$0xf]
      %v346 = vld [vmem:[#allocation10 + $0x5c] sm:$0xf]
      %v347 = vld [vmem:[#allocation10 + $0x60] sm:$0xf]
      %v348 = vld [vmem:[#allocation10 + $0x64] sm:$0xf]
      %v349 = vld [vmem:[#allocation10 + $0x68] sm:$0xf]
      %v350 = vld [vmem:[#allocation10 + $0x6c] sm:$0xf]
      %v351 = vld [vmem:[#allocation10 + $0x70] sm:$0xf]
      %v352 = vld [vmem:[#allocation10 + $0x74] sm:$0xf]
      %v353 = vld [vmem:[#allocation10 + $0x78] sm:$0xf]
      %v354 = vld [vmem:[#allocation10 + $0x7c] sm:$0xf]
      %s355 = scalar_lea.vmem %s5, %s302
      %v356 = vld [vmem:[%s355] sm:$0x1]
      %v357 = vlaneseq
      %v358 = vshrl.u32 %v357, 7
      %v359 = vsub.s32 0, %v358
      %v360 = vrot.slane %v356, %v359
      %v393 = vunpack.c.l.b16 %v323
      %v394 = vunpack.c.l.b16 %v324
      %v395 = vunpack.c.l.b16 %v325
      %v396 = vunpack.c.l.b16 %v326
      %v397 = vunpack.c.l.b16 %v327
      %v398 = vunpack.c.l.b16 %v328
      %v399 = vunpack.c.l.b16 %v329
      %v400 = vunpack.c.l.b16 %v330
      %v401 = vunpack.c.l.b16 %v331
      %v402 = vunpack.c.l.b16 %v332
      %v403 = vunpack.c.l.b16 %v333
      %v404 = vunpack.c.l.b16 %v334
      %v405 = vunpack.c.l.b16 %v335
      %v406 = vunpack.c.l.b16 %v336
      %v407 = vunpack.c.l.b16 %v337
      %v408 = vunpack.c.l.b16 %v338
      %v409 = vunpack.c.l.b16 %v339
      %v410 = vunpack.c.l.b16 %v340
      %v411 = vunpack.c.l.b16 %v341
      %v412 = vunpack.c.l.b16 %v342
      %v413 = vunpack.c.l.b16 %v343
      %v414 = vunpack.c.l.b16 %v344
      %v415 = vunpack.c.l.b16 %v345
      %v416 = vunpack.c.l.b16 %v346
      %v417 = vunpack.c.l.b16 %v347
      %v418 = vunpack.c.l.b16 %v348
      %v419 = vunpack.c.l.b16 %v349
      %v420 = vunpack.c.l.b16 %v350
      %v421 = vunpack.c.l.b16 %v351
      %v422 = vunpack.c.l.b16 %v352
      %v423 = vunpack.c.l.b16 %v353
      %v424 = vunpack.c.l.b16 %v354
      %v425 = vpack.c.b16 %v394, %v393
      %v426 = vpack.c.b16 %v396, %v395
      %v427 = vpack.c.b16 %v398, %v397
      %v428 = vpack.c.b16 %v400, %v399
      %v429 = vpack.c.b16 %v402, %v401
      %v430 = vpack.c.b16 %v404, %v403
      %v431 = vpack.c.b16 %v406, %v405
      %v432 = vpack.c.b16 %v408, %v407
      %v433 = vpack.c.b16 %v410, %v409
      %v434 = vpack.c.b16 %v412, %v411
      %v435 = vpack.c.b16 %v414, %v413
      %v436 = vpack.c.b16 %v416, %v415
      %v437 = vpack.c.b16 %v418, %v417
      %v438 = vpack.c.b16 %v420, %v419
      %v439 = vpack.c.b16 %v422, %v421
      %v440 = vpack.c.b16 %v424, %v423
      %457 = vmatprep.subr.bf16.mxu0 0
      %458 = vmatpush1.bf16.msra.mxu0 %v432
      %459 = vmatprep.subr.bf16.mxu0 0
      %460 = vmatpush1.bf16.msra.mxu0 %v431
      %461 = vmatprep.subr.bf16.mxu0 0
      %462 = vmatpush1.bf16.msra.mxu0 %v430
      %463 = vmatprep.subr.bf16.mxu0 0
      %464 = vmatpush1.bf16.msra.mxu0 %v429
      %465 = vmatprep.subr.bf16.mxu0 0
      %466 = vmatpush1.bf16.msra.mxu0 %v428
      %467 = vmatprep.subr.bf16.mxu0 0
      %468 = vmatpush1.bf16.msra.mxu0 %v427
      %469 = vmatprep.subr.bf16.mxu0 0
      %470 = vmatpush1.bf16.msra.mxu0 %v426
      %471 = vmatprep.subr.bf16.mxu0 0
      %472 = vmatpush1.bf16.msra.mxu0 %v425
      %473 = vmatprep.subr.bf16.mxu0 0
      %474 = vmatpush2.bf16.msra.mxu0 %v440
      %475 = vmatprep.subr.bf16.mxu0 0
      %476 = vmatpush2.bf16.msra.mxu0 %v439
      %477 = vmatprep.subr.bf16.mxu0 0
      %478 = vmatpush2.bf16.msra.mxu0 %v438
      %479 = vmatprep.subr.bf16.mxu0 0
      %480 = vmatpush2.bf16.msra.mxu0 %v437
      %481 = vmatprep.subr.bf16.mxu0 0
      %482 = vmatpush2.bf16.msra.mxu0 %v436
      %483 = vmatprep.subr.bf16.mxu0 0
      %484 = vmatpush2.bf16.msra.mxu0 %v435
      %485 = vmatprep.subr.bf16.mxu0 0
      %486 = vmatpush2.bf16.msra.mxu0 %v434
      %487 = vmatprep.subr.bf16.mxu0 0
      %488 = vmatpush2.bf16.msra.mxu0 %v433
      %489 = vmatprep.mubr.bf16.mxu0 %v322
      %490 = vmatmul.mubr.bf16.gmra.mxu0 %v321
      %v491 = vpop.f32.mrf.mxu0
      %v492 = vadd.f32 %v360, %v491
      %v493 = vpop.f32.mrf.mxu0
      %v494 = vpop.f32.mrf.mxu0
      %v495 = vpop.f32.mrf.mxu0
      %496 = vdwg.mxu0
      %v497 = vld [vmem:[%s8] sm:$0x1]
      %v498 = vld [vmem:[%s9] sm:$0x1]
      %499 = vadd.xlane.f32.xlu0 %v492
      %v500 = vpop.xlane.xlu0 %499
      %v501 = vrcp.pop 128.0
      %v502 = vmul.f32 %v500, %v501
      %v503 = vsub.f32 %v492, %v502
      %v504 = vmul.f32 %v503, %v503
      %505 = vadd.xlane.f32.xlu0 %v504
      %v506 = vpop.xlane.xlu0 %505
      %v507 = vmul.f32 %v506, %v501
      %v508 = vadd.f32 %v507, 1e-05
      %v509 = vrsqrt.pop %v508
      %v510 = vmul.f32 %v503, %v509
      %v512 = vlaneseq
      %v513 = vshrl.u32 %v512, 7
      %v514 = vsub.s32 0, %v513
      %v515 = vrot.slane %v497, %v514
      %v517 = vmul.f32 %v510, %v515
      %v519 = vlaneseq
      %v520 = vshrl.u32 %v519, 7
      %v521 = vsub.s32 0, %v520
      %v522 = vrot.slane %v498, %v521
      %v524 = vadd.f32 %v517, %v522
      %v525 = vpack.c.bf16 %v524, %v524
      %v526 = vld [vmem:[#allocation12] sm:$0xff]
      %v527 = vld [vmem:[#allocation12 + $0x8] sm:$0xf]
      %v528 = vld [vmem:[#allocation12 + $0xc] sm:$0xff]
      %v529 = vld [vmem:[#allocation12 + $0x14] sm:$0xf]
      %v530 = vld [vmem:[#allocation12 + $0x18] sm:$0xff]
      %v531 = vld [vmem:[#allocation12 + $0x20] sm:$0xf]
      %v532 = vld [vmem:[#allocation12 + $0x24] sm:$0xff]
      %v533 = vld [vmem:[#allocation12 + $0x2c] sm:$0xf]
      %v534 = vld [vmem:[#allocation12 + $0x30] sm:$0xff]
      %v535 = vld [vmem:[#allocation12 + $0x38] sm:$0xf]
      %v536 = vld [vmem:[#allocation12 + $0x3c] sm:$0xff]
      %v537 = vld [vmem:[#allocation12 + $0x44] sm:$0xf]
      %v538 = vld [vmem:[#allocation12 + $0x48] sm:$0xff]
      %v539 = vld [vmem:[#allocation12 + $0x50] sm:$0xf]
      %v540 = vld [vmem:[#allocation12 + $0x54] sm:$0xff]
      %v541 = vld [vmem:[#allocation12 + $0x5c] sm:$0xf]
      %v542 = vld [vmem:[#allocation12 + $0x60] sm:$0xff]
      %v543 = vld [vmem:[#allocation12 + $0x68] sm:$0xf]
      %v544 = vld [vmem:[#allocation12 + $0x6c] sm:$0xff]
      %v545 = vld [vmem:[#allocation12 + $0x74] sm:$0xf]
      %v546 = vld [vmem:[#allocation12 + $0x78] sm:$0xff]
      %v547 = vld [vmem:[#allocation12 + $0x80] sm:$0xf]
      %v548 = vld [vmem:[#allocation12 + $0x84] sm:$0xff]
      %v549 = vld [vmem:[#allocation12 + $0x8c] sm:$0xf]
      %v550 = vld [vmem:[#allocation12 + $0x90] sm:$0xff]
      %v551 = vld [vmem:[#allocation12 + $0x98] sm:$0xf]
      %v552 = vld [vmem:[#allocation12 + $0x9c] sm:$0xff]
      %v553 = vld [vmem:[#allocation12 + $0xa4] sm:$0xf]
      %v554 = vld [vmem:[#allocation12 + $0xa8] sm:$0xff]
      %v555 = vld [vmem:[#allocation12 + $0xb0] sm:$0xf]
      %v556 = vld [vmem:[#allocation12 + $0xb4] sm:$0xff]
      %v557 = vld [vmem:[#allocation12 + $0xbc] sm:$0xf]
      %v590 = vunpack.c.l.b16 %v526
      %v591 = vunpack.c.h.b16 %v526
      %v592 = vunpack.c.l.b16 %v527
      %v593 = vunpack.c.l.b16 %v528
      %v594 = vunpack.c.h.b16 %v528
      %v595 = vunpack.c.l.b16 %v529
      %v596 = vunpack.c.l.b16 %v530
      %v597 = vunpack.c.h.b16 %v530
      %v598 = vunpack.c.l.b16 %v531
      %v599 = vunpack.c.l.b16 %v532
      %v600 = vunpack.c.h.b16 %v532
      %v601 = vunpack.c.l.b16 %v533
      %v602 = vunpack.c.l.b16 %v534
      %v603 = vunpack.c.h.b16 %v534
      %v604 = vunpack.c.l.b16 %v535
      %v605 = vunpack.c.l.b16 %v536
      %v606 = vunpack.c.h.b16 %v536
      %v607 = vunpack.c.l.b16 %v537
      %v608 = vunpack.c.l.b16 %v538
      %v609 = vunpack.c.h.b16 %v538
      %v610 = vunpack.c.l.b16 %v539
      %v611 = vunpack.c.l.b16 %v540
      %v612 = vunpack.c.h.b16 %v540
      %v613 = vunpack.c.l.b16 %v541
      %v614 = vunpack.c.l.b16 %v542
      %v615 = vunpack.c.h.b16 %v542
      %v616 = vunpack.c.l.b16 %v543
      %v617 = vunpack.c.l.b16 %v544
      %v618 = vunpack.c.h.b16 %v544
      %v619 = vunpack.c.l.b16 %v545
      %v620 = vunpack.c.l.b16 %v546
      %v621 = vunpack.c.h.b16 %v546
      %v622 = vunpack.c.l.b16 %v547
      %v623 = vunpack.c.l.b16 %v548
      %v624 = vunpack.c.h.b16 %v548
      %v625 = vunpack.c.l.b16 %v549
      %v626 = vunpack.c.l.b16 %v550
      %v627 = vunpack.c.h.b16 %v550
      %v628 = vunpack.c.l.b16 %v551
      %v629 = vunpack.c.l.b16 %v552
      %v630 = vunpack.c.h.b16 %v552
      %v631 = vunpack.c.l.b16 %v553
      %v632 = vunpack.c.l.b16 %v554
      %v633 = vunpack.c.h.b16 %v554
      %v634 = vunpack.c.l.b16 %v555
      %v635 = vunpack.c.l.b16 %v556
      %v636 = vunpack.c.h.b16 %v556
      %v637 = vunpack.c.l.b16 %v557
      %v638 = vpack.c.b16 %v593, %v590
      %v639 = vpack.c.b16 %v594, %v591
      %v640 = vpack.c.b16 %v595, %v592
      %v641 = vpack.c.b16 %v599, %v596
      %v642 = vpack.c.b16 %v600, %v597
      %v643 = vpack.c.b16 %v601, %v598
      %v644 = vpack.c.b16 %v605, %v602
      %v645 = vpack.c.b16 %v606, %v603
      %v646 = vpack.c.b16 %v607, %v604
      %v647 = vpack.c.b16 %v611, %v608
      %v648 = vpack.c.b16 %v612, %v609
      %v649 = vpack.c.b16 %v613, %v610
      %v650 = vpack.c.b16 %v617, %v614
      %v651 = vpack.c.b16 %v618, %v615
      %v652 = vpack.c.b16 %v619, %v616
      %v653 = vpack.c.b16 %v623, %v620
      %v654 = vpack.c.b16 %v624, %v621
      %v655 = vpack.c.b16 %v625, %v622
      %v656 = vpack.c.b16 %v629, %v626
      %v657 = vpack.c.b16 %v630, %v627
      %v658 = vpack.c.b16 %v631, %v628
      %v659 = vpack.c.b16 %v635, %v632
      %v660 = vpack.c.b16 %v636, %v633
      %v661 = vpack.c.b16 %v637, %v634
      %686 = vmatprep.subr.bf16.mxu0 %v660
      %687 = vmatpush1.bf16.msra.mxu0 %v659
      %688 = vmatprep.subr.bf16.mxu0 %v657
      %689 = vmatpush1.bf16.msra.mxu0 %v656
      %690 = vmatprep.subr.bf16.mxu0 %v654
      %691 = vmatpush1.bf16.msra.mxu0 %v653
      %692 = vmatprep.subr.bf16.mxu0 %v651
      %693 = vmatpush1.bf16.msra.mxu0 %v650
      %694 = vmatprep.subr.bf16.mxu0 %v648
      %695 = vmatpush1.bf16.msra.mxu0 %v647
      %696 = vmatprep.subr.bf16.mxu0 %v645
      %697 = vmatpush1.bf16.msra.mxu0 %v644
      %698 = vmatprep.subr.bf16.mxu0 %v642
      %699 = vmatpush1.bf16.msra.mxu0 %v641
      %700 = vmatprep.subr.bf16.mxu0 %v639
      %701 = vmatpush1.bf16.msra.mxu0 %v638
      %702 = vmatprep.subr.bf16.mxu0 0
      %703 = vmatpush2.bf16.msra.mxu0 0
      %704 = vmatprep.subr.bf16.mxu0 0
      %705 = vmatpush2.bf16.msra.mxu0 0
      %706 = vmatprep.subr.bf16.mxu0 0
      %707 = vmatpush2.bf16.msra.mxu0 0
      %708 = vmatprep.subr.bf16.mxu0 0
      %709 = vmatpush2.bf16.msra.mxu0 0
      %710 = vmatprep.subr.bf16.mxu0 0
      %711 = vmatpush2.bf16.msra.mxu0 0
      %712 = vmatprep.subr.bf16.mxu0 0
      %713 = vmatpush2.bf16.msra.mxu0 0
      %714 = vmatprep.subr.bf16.mxu0 0
      %715 = vmatpush2.bf16.msra.mxu0 0
      %716 = vmatprep.subr.bf16.mxu0 0
      %717 = vmatpush2.bf16.msra.mxu0 0
      %718 = vmatprep.mubr.bf16.mxu0 0
      %719 = vmatmul.mubr.bf16.gmra.mxu0 %v525
      %v720 = vpop.f32.mrf.mxu0
      %v721 = vadd.f32 0.0, %v720
      %v722 = vpop.f32.mrf.mxu0
      %v723 = vadd.f32 0.0, %v722
      %v724 = vpop.f32.mrf.mxu0
      %v725 = vpop.f32.mrf.mxu0
      %726 = vdwg.mxu0
      %727 = vmatprep.subr.bf16.mxu0 0
      %728 = vmatpush1.bf16.msra.mxu0 %v661
      %729 = vmatprep.subr.bf16.mxu0 0
      %730 = vmatpush1.bf16.msra.mxu0 %v658
      %731 = vmatprep.subr.bf16.mxu0 0
      %732 = vmatpush1.bf16.msra.mxu0 %v655
      %733 = vmatprep.subr.bf16.mxu0 0
      %734 = vmatpush1.bf16.msra.mxu0 %v652
      %735 = vmatprep.subr.bf16.mxu0 0
      %736 = vmatpush1.bf16.msra.mxu0 %v649
      %737 = vmatprep.subr.bf16.mxu0 0
      %738 = vmatpush1.bf16.msra.mxu0 %v646
      %739 = vmatprep.subr.bf16.mxu0 0
      %740 = vmatpush1.bf16.msra.mxu0 %v643
      %741 = vmatprep.subr.bf16.mxu0 0
      %742 = vmatpush1.bf16.msra.mxu0 %v640
      %743 = vmatprep.subr.bf16.mxu0 0
      %744 = vmatpush2.bf16.msra.mxu0 0
      %745 = vmatprep.subr.bf16.mxu0 0
      %746 = vmatpush2.bf16.msra.mxu0 0
      %747 = vmatprep.subr.bf16.mxu0 0
      %748 = vmatpush2.bf16.msra.mxu0 0
      %749 = vmatprep.subr.bf16.mxu0 0
      %750 = vmatpush2.bf16.msra.mxu0 0
      %751 = vmatprep.subr.bf16.mxu0 0
      %752 = vmatpush2.bf16.msra.mxu0 0
      %753 = vmatprep.subr.bf16.mxu0 0
      %754 = vmatpush2.bf16.msra.mxu0 0
      %755 = vmatprep.subr.bf16.mxu0 0
      %756 = vmatpush2.bf16.msra.mxu0 0
      %757 = vmatprep.subr.bf16.mxu0 0
      %758 = vmatpush2.bf16.msra.mxu0 0
      %759 = vmatprep.mubr.bf16.mxu0 0
      %760 = vmatmul.mubr.bf16.gmra.mxu0 %v525
      %v761 = vpop.f32.mrf.mxu0
      %v762 = vadd.f32 0.0, %v761
      %v763 = vpop.f32.mrf.mxu0
      %v764 = vpop.f32.mrf.mxu0
      %v765 = vpop.f32.mrf.mxu0
      %766 = vdwg.mxu0
      %v767 = vmul.f32 %v721, 0.125
      %s768 = smul.u32 %s302, 8
      %s769 = scalar_lea.vmem [#allocation2], %s768
      %770 = vst [vmem:[%s769] sm:$0xff] %v723
      %s771 = scalar_lea.vmem [#allocation3], %s768
      %772 = vst [vmem:[%s771] sm:$0xff] %v762
      %v773 = vld [vmem:[#allocation2] sm:$0xff]
      %v774 = vld [vmem:[#allocation2 + $0x8] sm:$0xff]
      %v775 = vld [vmem:[#allocation2 + $0x10] sm:$0xff]
      %v776 = vld [vmem:[#allocation2 + $0x18] sm:$0xff]
      %v777 = vld [vmem:[#allocation2 + $0x20] sm:$0xff]
      %v778 = vld [vmem:[#allocation2 + $0x28] sm:$0xff]
      %v779 = vld [vmem:[#allocation2 + $0x30] sm:$0xff]
      %v780 = vld [vmem:[#allocation2 + $0x38] sm:$0xff]
      %v781 = vld [vmem:[#allocation2 + $0x40] sm:$0xff]
      %v782 = vld [vmem:[#allocation2 + $0x48] sm:$0xff]
      %v783 = vld [vmem:[#allocation2 + $0x50] sm:$0xff]
      %v784 = vld [vmem:[#allocation2 + $0x58] sm:$0xff]
      %v785 = vld [vmem:[#allocation2 + $0x60] sm:$0xff]
      %v786 = vld [vmem:[#allocation2 + $0x68] sm:$0xff]
      %v787 = vld [vmem:[#allocation2 + $0x70] sm:$0xff]
      %v788 = vld [vmem:[#allocation2 + $0x78] sm:$0xff]
      %v789 = vld [vmem:[#allocation3] sm:$0xff]
      %v790 = vld [vmem:[#allocation3 + $0x8] sm:$0xff]
      %v791 = vld [vmem:[#allocation3 + $0x10] sm:$0xff]
      %v792 = vld [vmem:[#allocation3 + $0x18] sm:$0xff]
      %v793 = vld [vmem:[#allocation3 + $0x20] sm:$0xff]
      %v794 = vld [vmem:[#allocation3 + $0x28] sm:$0xff]
      %v795 = vld [vmem:[#allocation3 + $0x30] sm:$0xff]
      %v796 = vld [vmem:[#allocation3 + $0x38] sm:$0xff]
      %v797 = vld [vmem:[#allocation3 + $0x40] sm:$0xff]
      %v798 = vld [vmem:[#allocation3 + $0x48] sm:$0xff]
      %v799 = vld [vmem:[#allocation3 + $0x50] sm:$0xff]
      %v800 = vld [vmem:[#allocation3 + $0x58] sm:$0xff]
      %v801 = vld [vmem:[#allocation3 + $0x60] sm:$0xff]
      %v802 = vld [vmem:[#allocation3 + $0x68] sm:$0xff]
      %v803 = vld [vmem:[#allocation3 + $0x70] sm:$0xff]
      %v804 = vld [vmem:[#allocation3 + $0x78] sm:$0xff]
      %vm805 = vcmp.le.s32.totalorder %v297, %v309
      %vm806 = vcmp.le.s32.totalorder %v298, %v309
      %v807 = vmul.f32 %v767, %v773
      %v808 = vmul.f32 %v767, %v774
      %v809 = vmul.f32 %v767, %v775
      %v810 = vmul.f32 %v767, %v776
      %v811 = vmul.f32 %v767, %v777
      %v812 = vmul.f32 %v767, %v778
      %v813 = vmul.f32 %v767, %v779
      %v814 = vmul.f32 %v767, %v780
      %v815 = vmul.f32 %v767, %v781
      %v816 = vmul.f32 %v767, %v782
      %v817 = vmul.f32 %v767, %v783
      %v818 = vmul.f32 %v767, %v784
      %v819 = vmul.f32 %v767, %v785
      %v820 = vmul.f32 %v767, %v786
      %v821 = vmul.f32 %v767, %v787
      %v822 = vmul.f32 %v767, %v788
      %vm823 = vcmask 523264
      %v824 = vsel %vm823, %v807, 0.0
      %825 = vadd.xlane.f32.xlu0 %v824
      %v826 = vpop.xlane.xlu0 %825
      %v827 = vsel %vm823, %v808, 0.0
      %828 = vadd.xlane.f32.xlu0 %v827
      %v829 = vpop.xlane.xlu0 %828
      %v830 = vsel %vm823, %v809, 0.0
      %831 = vadd.xlane.f32.xlu0 %v830
      %v832 = vpop.xlane.xlu0 %831
      %v833 = vsel %vm823, %v810, 0.0
      %834 = vadd.xlane.f32.xlu0 %v833
      %v835 = vpop.xlane.xlu0 %834
      %v836 = vsel %vm823, %v811, 0.0
      %837 = vadd.xlane.f32.xlu0 %v836
      %v838 = vpop.xlane.xlu0 %837
      %v839 = vsel %vm823, %v812, 0.0
      %840 = vadd.xlane.f32.xlu0 %v839
      %v841 = vpop.xlane.xlu0 %840
      %v842 = vsel %vm823, %v813, 0.0
      %843 = vadd.xlane.f32.xlu0 %v842
      %v844 = vpop.xlane.xlu0 %843
      %v845 = vsel %vm823, %v814, 0.0
      %846 = vadd.xlane.f32.xlu0 %v845
      %v847 = vpop.xlane.xlu0 %846
      %v848 = vsel %vm823, %v815, 0.0
      %849 = vadd.xlane.f32.xlu0 %v848
      %v850 = vpop.xlane.xlu0 %849
      %v851 = vsel %vm823, %v816, 0.0
      %852 = vadd.xlane.f32.xlu0 %v851
      %v853 = vpop.xlane.xlu0 %852
      %v854 = vsel %vm823, %v817, 0.0
      %855 = vadd.xlane.f32.xlu0 %v854
      %v856 = vpop.xlane.xlu0 %855
      %v857 = vsel %vm823, %v818, 0.0
      %858 = vadd.xlane.f32.xlu0 %v857
      %v859 = vpop.xlane.xlu0 %858
      %v860 = vsel %vm823, %v819, 0.0
      %861 = vadd.xlane.f32.xlu0 %v860
      %v862 = vpop.xlane.xlu0 %861
      %v863 = vsel %vm823, %v820, 0.0
      %864 = vadd.xlane.f32.xlu0 %v863
      %v865 = vpop.xlane.xlu0 %864
      %v866 = vsel %vm823, %v821, 0.0
      %867 = vadd.xlane.f32.xlu0 %v866
      %v868 = vpop.xlane.xlu0 %867
      %v869 = vsel %vm823, %v822, 0.0
      %870 = vadd.xlane.f32.xlu0 %v869
      %v871 = vpop.xlane.xlu0 %870
      %v872 = vsel %vm805, 1, 0
      %v873 = vsel %vm806, 1, 0
      %vm874 = vcmp.eq.s32.totalorder %v872, 1
      %vm875 = vcmp.eq.s32.totalorder %v873, 1
      %v892 = vlaneseq
      %v893 = vshrl.u32 %v892, 7
      %v894 = vsub.s32 %v292, %v893
      %v895 = vrot.slane %v826, %v894
      %v896 = vlaneseq
      %v897 = vshrl.u32 %v896, 7
      %v898 = vsub.s32 %v292, %v897
      %v899 = vrot.slane %v829, %v898
      %v900 = vlaneseq
      %v901 = vshrl.u32 %v900, 7
      %v902 = vsub.s32 %v292, %v901
      %v903 = vrot.slane %v832, %v902
      %v904 = vlaneseq
      %v905 = vshrl.u32 %v904, 7
      %v906 = vsub.s32 %v292, %v905
      %v907 = vrot.slane %v835, %v906
      %v908 = vlaneseq
      %v909 = vshrl.u32 %v908, 7
      %v910 = vsub.s32 %v292, %v909
      %v911 = vrot.slane %v838, %v910
      %v912 = vlaneseq
      %v913 = vshrl.u32 %v912, 7
      %v914 = vsub.s32 %v292, %v913
      %v915 = vrot.slane %v841, %v914
      %v916 = vlaneseq
      %v917 = vshrl.u32 %v916, 7
      %v918 = vsub.s32 %v292, %v917
      %v919 = vrot.slane %v844, %v918
      %v920 = vlaneseq
      %v921 = vshrl.u32 %v920, 7
      %v922 = vsub.s32 %v292, %v921
      %v923 = vrot.slane %v847, %v922
      %v924 = vlaneseq
      %v925 = vshrl.u32 %v924, 7
      %v926 = vsub.s32 %v292, %v925
      %v927 = vrot.slane %v850, %v926
      %v928 = vlaneseq
      %v929 = vshrl.u32 %v928, 7
      %v930 = vsub.s32 %v292, %v929
      %v931 = vrot.slane %v853, %v930
      %v932 = vlaneseq
      %v933 = vshrl.u32 %v932, 7
      %v934 = vsub.s32 %v292, %v933
      %v935 = vrot.slane %v856, %v934
      %v936 = vlaneseq
      %v937 = vshrl.u32 %v936, 7
      %v938 = vsub.s32 %v292, %v937
      %v939 = vrot.slane %v859, %v938
      %v940 = vlaneseq
      %v941 = vshrl.u32 %v940, 7
      %v942 = vsub.s32 %v292, %v941
      %v943 = vrot.slane %v862, %v942
      %v944 = vlaneseq
      %v945 = vshrl.u32 %v944, 7
      %v946 = vsub.s32 %v292, %v945
      %v947 = vrot.slane %v865, %v946
      %v948 = vlaneseq
      %v949 = vshrl.u32 %v948, 7
      %v950 = vsub.s32 %v292, %v949
      %v951 = vrot.slane %v868, %v950
      %v952 = vlaneseq
      %v953 = vshrl.u32 %v952, 7
      %v954 = vsub.s32 %v292, %v953
      %v955 = vrot.slane %v871, %v954
      %vm956 = vcmask 1041409
      %v957 = vsel %vm956, %v899, %v895
      %vm958 = vcmask 1042434
      %v959 = vsel %vm958, %v903, %v957
      %vm960 = vcmask 1043459
      %v961 = vsel %vm960, %v907, %v959
      %vm962 = vcmask 1044484
      %v963 = vsel %vm962, %v911, %v961
      %vm964 = vcmask 1045509
      %v965 = vsel %vm964, %v915, %v963
      %vm966 = vcmask 1046534
      %v967 = vsel %vm966, %v919, %v965
      %vm968 = vcmask 1047559
      %v969 = vsel %vm968, %v923, %v967
      %v970 = vsel %vm956, %v931, %v927
      %v971 = vsel %vm958, %v935, %v970
      %v972 = vsel %vm960, %v939, %v971
      %v973 = vsel %vm962, %v943, %v972
      %v974 = vsel %vm964, %v947, %v973
      %v975 = vsel %vm966, %v951, %v974
      %v976 = vsel %vm968, %v955, %v975
      %v979 = vsel %vm874, %v969, -1e+30
      %v980 = vsel %vm875, %v976, -1e+30
      %vm981 = vcmask 64512
      %v982 = vsel %vm981, %v979, -inf
      %v983 = vsel %vm981, %v980, -inf
      %v984 = vmax.f32 %v982, %v983
      %v985 = vrot.slane %v984, 4
      %v986 = vmax.f32 %v984, %v985
      %v987 = vrot.slane %v986, 2
      %v988 = vmax.f32 %v986, %v987
      %v989 = vrot.slane %v988, 1
      %v990 = vmax.f32 %v988, %v989
      %v991 = vsub.f32 %v979, %v990
      %v992 = vsub.f32 %v980, %v990
      %v993 = vmul.f32 %v991, 1.442695
      %v994 = vpow.pop %v993
      %v995 = vmul.f32 %v992, 1.442695
      %v996 = vpow.pop %v995
      %v997 = vsel %vm981, %v994, 0.0
      %v998 = vsel %vm981, %v996, 0.0
      %v999 = vadd.f32 %v997, %v998
      %v1000 = vrot.slane %v999, 4
      %v1001 = vadd.f32 %v999, %v1000
      %v1002 = vrot.slane %v1001, 2
      %v1003 = vadd.f32 %v1001, %v1002
      %v1004 = vrot.slane %v1003, 1
      %v1005 = vadd.f32 %v1003, %v1004
      %v1006 = vrcp.pop %v1005
      %v1007 = vmul.f32 %v994, %v1006
      %v1008 = vmul.f32 %v996, %v1006
      %v1009 = vlaneseq
      %v1010 = vshrl.u32 %v1009, 7
      %v1011 = vsub.s32 0, %v1010
      %v1012 = vrot.slane %v1007, %v1011
      %1014 = vbcast.lane.b32.xlu0 %v1012, 256
      %v1015 = vpop.permute.xlu0 %1014
      %v1016 = vlaneseq
      %v1017 = vshrl.u32 %v1016, 7
      %v1018 = vsub.s32 1, %v1017
      %v1019 = vrot.slane %v1007, %v1018
      %1021 = vbcast.lane.b32.xlu0 %v1019, 256
      %v1022 = vpop.permute.xlu0 %1021
      %v1023 = vlaneseq
      %v1024 = vshrl.u32 %v1023, 7
      %v1025 = vsub.s32 2, %v1024
      %v1026 = vrot.slane %v1007, %v1025
      %1028 = vbcast.lane.b32.xlu0 %v1026, 256
      %v1029 = vpop.permute.xlu0 %1028
      %v1030 = vlaneseq
      %v1031 = vshrl.u32 %v1030, 7
      %v1032 = vsub.s32 3, %v1031
      %v1033 = vrot.slane %v1007, %v1032
      %1035 = vbcast.lane.b32.xlu0 %v1033, 256
      %v1036 = vpop.permute.xlu0 %1035
      %v1037 = vlaneseq
      %v1038 = vshrl.u32 %v1037, 7
      %v1039 = vsub.s32 4, %v1038
      %v1040 = vrot.slane %v1007, %v1039
      %1042 = vbcast.lane.b32.xlu0 %v1040, 256
      %v1043 = vpop.permute.xlu0 %1042
      %v1044 = vlaneseq
      %v1045 = vshrl.u32 %v1044, 7
      %v1046 = vsub.s32 5, %v1045
      %v1047 = vrot.slane %v1007, %v1046
      %1049 = vbcast.lane.b32.xlu0 %v1047, 256
      %v1050 = vpop.permute.xlu0 %1049
      %v1051 = vlaneseq
      %v1052 = vshrl.u32 %v1051, 7
      %v1053 = vsub.s32 6, %v1052
      %v1054 = vrot.slane %v1007, %v1053
      %1056 = vbcast.lane.b32.xlu0 %v1054, 256
      %v1057 = vpop.permute.xlu0 %1056
      %v1058 = vlaneseq
      %v1059 = vshrl.u32 %v1058, 7
      %v1060 = vsub.s32 7, %v1059
      %v1061 = vrot.slane %v1007, %v1060
      %1063 = vbcast.lane.b32.xlu0 %v1061, 256
      %v1064 = vpop.permute.xlu0 %1063
      %v1065 = vlaneseq
      %v1066 = vshrl.u32 %v1065, 7
      %v1067 = vsub.s32 0, %v1066
      %v1068 = vrot.slane %v1008, %v1067
      %1070 = vbcast.lane.b32.xlu0 %v1068, 256
      %v1071 = vpop.permute.xlu0 %1070
      %v1072 = vlaneseq
      %v1073 = vshrl.u32 %v1072, 7
      %v1074 = vsub.s32 1, %v1073
      %v1075 = vrot.slane %v1008, %v1074
      %1077 = vbcast.lane.b32.xlu0 %v1075, 256
      %v1078 = vpop.permute.xlu0 %1077
      %v1079 = vlaneseq
      %v1080 = vshrl.u32 %v1079, 7
      %v1081 = vsub.s32 2, %v1080
      %v1082 = vrot.slane %v1008, %v1081
      %1084 = vbcast.lane.b32.xlu0 %v1082, 256
      %v1085 = vpop.permute.xlu0 %1084
      %v1086 = vlaneseq
      %v1087 = vshrl.u32 %v1086, 7
      %v1088 = vsub.s32 3, %v1087
      %v1089 = vrot.slane %v1008, %v1088
      %1091 = vbcast.lane.b32.xlu0 %v1089, 256
      %v1092 = vpop.permute.xlu0 %1091
      %v1093 = vlaneseq
      %v1094 = vshrl.u32 %v1093, 7
      %v1095 = vsub.s32 4, %v1094
      %v1096 = vrot.slane %v1008, %v1095
      %1098 = vbcast.lane.b32.xlu0 %v1096, 256
      %v1099 = vpop.permute.xlu0 %1098
      %v1100 = vlaneseq
      %v1101 = vshrl.u32 %v1100, 7
      %v1102 = vsub.s32 5, %v1101
      %v1103 = vrot.slane %v1008, %v1102
      %1105 = vbcast.lane.b32.xlu0 %v1103, 256
      %v1106 = vpop.permute.xlu0 %1105
      %v1107 = vlaneseq
      %v1108 = vshrl.u32 %v1107, 7
      %v1109 = vsub.s32 6, %v1108
      %v1110 = vrot.slane %v1008, %v1109
      %1112 = vbcast.lane.b32.xlu0 %v1110, 256
      %v1113 = vpop.permute.xlu0 %1112
      %v1114 = vlaneseq
      %v1115 = vshrl.u32 %v1114, 7
      %v1116 = vsub.s32 7, %v1115
      %v1117 = vrot.slane %v1008, %v1116
      %1119 = vbcast.lane.b32.xlu0 %v1117, 256
      %v1120 = vpop.permute.xlu0 %1119
      %v1121 = vmul.f32 %v1015, %v789
      %v1122 = vmul.f32 %v1022, %v790
      %v1123 = vmul.f32 %v1029, %v791
      %v1124 = vmul.f32 %v1036, %v792
      %v1125 = vmul.f32 %v1043, %v793
      %v1126 = vmul.f32 %v1050, %v794
      %v1127 = vmul.f32 %v1057, %v795
      %v1128 = vmul.f32 %v1064, %v796
      %v1129 = vmul.f32 %v1071, %v797
      %v1130 = vmul.f32 %v1078, %v798
      %v1131 = vmul.f32 %v1085, %v799
      %v1132 = vmul.f32 %v1092, %v800
      %v1133 = vmul.f32 %v1099, %v801
      %v1134 = vmul.f32 %v1106, %v802
      %v1135 = vmul.f32 %v1113, %v803
      %v1136 = vmul.f32 %v1120, %v804
      %v1137 = vsel %vm823, %v1121, 0.0
      %v1138 = vsel %vm823, %v1122, 0.0
      %v1139 = vadd.f32 %v1137, %v1138
      %v1140 = vsel %vm823, %v1123, 0.0
      %v1141 = vadd.f32 %v1139, %v1140
      %v1142 = vsel %vm823, %v1124, 0.0
      %v1143 = vadd.f32 %v1141, %v1142
      %v1144 = vsel %vm823, %v1125, 0.0
      %v1145 = vadd.f32 %v1143, %v1144
      %v1146 = vsel %vm823, %v1126, 0.0
      %v1147 = vadd.f32 %v1145, %v1146
      %v1148 = vsel %vm823, %v1127, 0.0
      %v1149 = vadd.f32 %v1147, %v1148
      %v1150 = vsel %vm823, %v1128, 0.0
      %v1151 = vadd.f32 %v1149, %v1150
      %v1152 = vsel %vm823, %v1129, 0.0
      %v1153 = vadd.f32 %v1151, %v1152
      %v1154 = vsel %vm823, %v1130, 0.0
      %v1155 = vadd.f32 %v1153, %v1154
      %v1156 = vsel %vm823, %v1131, 0.0
      %v1157 = vadd.f32 %v1155, %v1156
      %v1158 = vsel %vm823, %v1132, 0.0
      %v1159 = vadd.f32 %v1157, %v1158
      %v1160 = vsel %vm823, %v1133, 0.0
      %v1161 = vadd.f32 %v1159, %v1160
      %v1162 = vsel %vm823, %v1134, 0.0
      %v1163 = vadd.f32 %v1161, %v1162
      %v1164 = vsel %vm823, %v1135, 0.0
      %v1165 = vadd.f32 %v1163, %v1164
      %v1166 = vsel %vm823, %v1136, 0.0
      %v1167 = vadd.f32 %v1165, %v1166
      %1184 = vrot.lane.b32.xlu0 %v807, 64
      %v1185 = vpop.permute.xlu0 %1184
      %1186 = vrot.lane.b32.xlu0 %v808, 64
      %v1187 = vpop.permute.xlu0 %1186
      %1188 = vrot.lane.b32.xlu0 %v809, 64
      %v1189 = vpop.permute.xlu0 %1188
      %1190 = vrot.lane.b32.xlu0 %v810, 64
      %v1191 = vpop.permute.xlu0 %1190
      %1192 = vrot.lane.b32.xlu0 %v811, 64
      %v1193 = vpop.permute.xlu0 %1192
      %1194 = vrot.lane.b32.xlu0 %v812, 64
      %v1195 = vpop.permute.xlu0 %1194
      %1196 = vrot.lane.b32.xlu0 %v813, 64
      %v1197 = vpop.permute.xlu0 %1196
      %1198 = vrot.lane.b32.xlu0 %v814, 64
      %v1199 = vpop.permute.xlu0 %1198
      %1200 = vrot.lane.b32.xlu0 %v815, 64
      %v1201 = vpop.permute.xlu0 %1200
      %1202 = vrot.lane.b32.xlu0 %v816, 64
      %v1203 = vpop.permute.xlu0 %1202
      %1204 = vrot.lane.b32.xlu0 %v817, 64
      %v1205 = vpop.permute.xlu0 %1204
      %1206 = vrot.lane.b32.xlu0 %v818, 64
      %v1207 = vpop.permute.xlu0 %1206
      %1208 = vrot.lane.b32.xlu0 %v819, 64
      %v1209 = vpop.permute.xlu0 %1208
      %1210 = vrot.lane.b32.xlu0 %v820, 64
      %v1211 = vpop.permute.xlu0 %1210
      %1212 = vrot.lane.b32.xlu0 %v821, 64
      %v1213 = vpop.permute.xlu0 %1212
      %1214 = vrot.lane.b32.xlu0 %v822, 64
      %v1215 = vpop.permute.xlu0 %1214
      %v1232 = vsel %vm823, %v1185, 0.0
      %1233 = vadd.xlane.f32.xlu0 %v1232
      %v1234 = vpop.xlane.xlu0 %1233
      %v1235 = vsel %vm823, %v1187, 0.0
      %1236 = vadd.xlane.f32.xlu0 %v1235
      %v1237 = vpop.xlane.xlu0 %1236
      %v1238 = vsel %vm823, %v1189, 0.0
      %1239 = vadd.xlane.f32.xlu0 %v1238
      %v1240 = vpop.xlane.xlu0 %1239
      %v1241 = vsel %vm823, %v1191, 0.0
      %1242 = vadd.xlane.f32.xlu0 %v1241
      %v1243 = vpop.xlane.xlu0 %1242
      %v1244 = vsel %vm823, %v1193, 0.0
      %1245 = vadd.xlane.f32.xlu0 %v1244
      %v1246 = vpop.xlane.xlu0 %1245
      %v1247 = vsel %vm823, %v1195, 0.0
      %1248 = vadd.xlane.f32.xlu0 %v1247
      %v1249 = vpop.xlane.xlu0 %1248
      %v1250 = vsel %vm823, %v1197, 0.0
      %1251 = vadd.xlane.f32.xlu0 %v1250
      %v1252 = vpop.xlane.xlu0 %1251
      %v1253 = vsel %vm823, %v1199, 0.0
      %1254 = vadd.xlane.f32.xlu0 %v1253
      %v1255 = vpop.xlane.xlu0 %1254
      %v1256 = vsel %vm823, %v1201, 0.0
      %1257 = vadd.xlane.f32.xlu0 %v1256
      %v1258 = vpop.xlane.xlu0 %1257
      %v1259 = vsel %vm823, %v1203, 0.0
      %1260 = vadd.xlane.f32.xlu0 %v1259
      %v1261 = vpop.xlane.xlu0 %1260
      %v1262 = vsel %vm823, %v1205, 0.0
      %1263 = vadd.xlane.f32.xlu0 %v1262
      %v1264 = vpop.xlane.xlu0 %1263
      %v1265 = vsel %vm823, %v1207, 0.0
      %1266 = vadd.xlane.f32.xlu0 %v1265
      %v1267 = vpop.xlane.xlu0 %1266
      %v1268 = vsel %vm823, %v1209, 0.0
      %1269 = vadd.xlane.f32.xlu0 %v1268
      %v1270 = vpop.xlane.xlu0 %1269
      %v1271 = vsel %vm823, %v1211, 0.0
      %1272 = vadd.xlane.f32.xlu0 %v1271
      %v1273 = vpop.xlane.xlu0 %1272
      %v1274 = vsel %vm823, %v1213, 0.0
      %1275 = vadd.xlane.f32.xlu0 %v1274
      %v1276 = vpop.xlane.xlu0 %1275
      %v1277 = vsel %vm823, %v1215, 0.0
      %1278 = vadd.xlane.f32.xlu0 %v1277
      %v1279 = vpop.xlane.xlu0 %1278
      %v1296 = vlaneseq
      %v1297 = vshrl.u32 %v1296, 7
      %v1298 = vsub.s32 %v292, %v1297
      %v1299 = vrot.slane %v1234, %v1298
      %v1300 = vlaneseq
      %v1301 = vshrl.u32 %v1300, 7
      %v1302 = vsub.s32 %v292, %v1301
      %v1303 = vrot.slane %v1237, %v1302
      %v1304 = vlaneseq
      %v1305 = vshrl.u32 %v1304, 7
      %v1306 = vsub.s32 %v292, %v1305
      %v1307 = vrot.slane %v1240, %v1306
      %v1308 = vlaneseq
      %v1309 = vshrl.u32 %v1308, 7
      %v1310 = vsub.s32 %v292, %v1309
      %v1311 = vrot.slane %v1243, %v1310
      %v1312 = vlaneseq
      %v1313 = vshrl.u32 %v1312, 7
      %v1314 = vsub.s32 %v292, %v1313
      %v1315 = vrot.slane %v1246, %v1314
      %v1316 = vlaneseq
      %v1317 = vshrl.u32 %v1316, 7
      %v1318 = vsub.s32 %v292, %v1317
      %v1319 = vrot.slane %v1249, %v1318
      %v1320 = vlaneseq
      %v1321 = vshrl.u32 %v1320, 7
      %v1322 = vsub.s32 %v292, %v1321
      %v1323 = vrot.slane %v1252, %v1322
      %v1324 = vlaneseq
      %v1325 = vshrl.u32 %v1324, 7
      %v1326 = vsub.s32 %v292, %v1325
      %v1327 = vrot.slane %v1255, %v1326
      %v1328 = vlaneseq
      %v1329 = vshrl.u32 %v1328, 7
      %v1330 = vsub.s32 %v292, %v1329
      %v1331 = vrot.slane %v1258, %v1330
      %v1332 = vlaneseq
      %v1333 = vshrl.u32 %v1332, 7
      %v1334 = vsub.s32 %v292, %v1333
      %v1335 = vrot.slane %v1261, %v1334
      %v1336 = vlaneseq
      %v1337 = vshrl.u32 %v1336, 7
      %v1338 = vsub.s32 %v292, %v1337
      %v1339 = vrot.slane %v1264, %v1338
      %v1340 = vlaneseq
      %v1341 = vshrl.u32 %v1340, 7
      %v1342 = vsub.s32 %v292, %v1341
      %v1343 = vrot.slane %v1267, %v1342
      %v1344 = vlaneseq
      %v1345 = vshrl.u32 %v1344, 7
      %v1346 = vsub.s32 %v292, %v1345
      %v1347 = vrot.slane %v1270, %v1346
      %v1348 = vlaneseq
      %v1349 = vshrl.u32 %v1348, 7
      %v1350 = vsub.s32 %v292, %v1349
      %v1351 = vrot.slane %v1273, %v1350
      %v1352 = vlaneseq
      %v1353 = vshrl.u32 %v1352, 7
      %v1354 = vsub.s32 %v292, %v1353
      %v1355 = vrot.slane %v1276, %v1354
      %v1356 = vlaneseq
      %v1357 = vshrl.u32 %v1356, 7
      %v1358 = vsub.s32 %v292, %v1357
      %v1359 = vrot.slane %v1279, %v1358
      %v1360 = vsel %vm956, %v1303, %v1299
      %v1361 = vsel %vm958, %v1307, %v1360
      %v1362 = vsel %vm960, %v1311, %v1361
      %v1363 = vsel %vm962, %v1315, %v1362
      %v1364 = vsel %vm964, %v1319, %v1363
      %v1365 = vsel %vm966, %v1323, %v1364
      %v1366 = vsel %vm968, %v1327, %v1365
      %v1367 = vsel %vm956, %v1335, %v1331
      %v1368 = vsel %vm958, %v1339, %v1367
      %v1369 = vsel %vm960, %v1343, %v1368
      %v1370 = vsel %vm962, %v1347, %v1369
      %v1371 = vsel %vm964, %v1351, %v1370
      %v1372 = vsel %vm966, %v1355, %v1371
      %v1373 = vsel %vm968, %v1359, %v1372
      %v1376 = vsel %vm874, %v1366, -1e+30
      %v1377 = vsel %vm875, %v1373, -1e+30
      %v1378 = vsel %vm981, %v1376, -inf
      %v1379 = vsel %vm981, %v1377, -inf
      %v1380 = vmax.f32 %v1378, %v1379
      %v1381 = vrot.slane %v1380, 4
      %v1382 = vmax.f32 %v1380, %v1381
      %v1383 = vrot.slane %v1382, 2
      %v1384 = vmax.f32 %v1382, %v1383
      %v1385 = vrot.slane %v1384, 1
      %v1386 = vmax.f32 %v1384, %v1385
      %v1387 = vsub.f32 %v1376, %v1386
      %v1388 = vsub.f32 %v1377, %v1386
      %v1389 = vmul.f32 %v1387, 1.442695
      %v1390 = vpow.pop %v1389
      %v1391 = vmul.f32 %v1388, 1.442695
      %v1392 = vpow.pop %v1391
      %v1393 = vsel %vm981, %v1390, 0.0
      %v1394 = vsel %vm981, %v1392, 0.0
      %v1395 = vadd.f32 %v1393, %v1394
      %v1396 = vrot.slane %v1395, 4
      %v1397 = vadd.f32 %v1395, %v1396
      %v1398 = vrot.slane %v1397, 2
      %v1399 = vadd.f32 %v1397, %v1398
      %v1400 = vrot.slane %v1399, 1
      %v1401 = vadd.f32 %v1399, %v1400
      %v1402 = vrcp.pop %v1401
      %v1403 = vmul.f32 %v1390, %v1402
      %v1404 = vmul.f32 %v1392, %v1402
      %v1405 = vlaneseq
      %v1406 = vshrl.u32 %v1405, 7
      %v1407 = vsub.s32 0, %v1406
      %v1408 = vrot.slane %v1403, %v1407
      %1410 = vbcast.lane.b32.xlu0 %v1408, 256
      %v1411 = vpop.permute.xlu0 %1410
      %v1412 = vlaneseq
      %v1413 = vshrl.u32 %v1412, 7
      %v1414 = vsub.s32 1, %v1413
      %v1415 = vrot.slane %v1403, %v1414
      %1417 = vbcast.lane.b32.xlu0 %v1415, 256
      %v1418 = vpop.permute.xlu0 %1417
      %v1419 = vlaneseq
      %v1420 = vshrl.u32 %v1419, 7
      %v1421 = vsub.s32 2, %v1420
      %v1422 = vrot.slane %v1403, %v1421
      %1424 = vbcast.lane.b32.xlu0 %v1422, 256
      %v1425 = vpop.permute.xlu0 %1424
      %v1426 = vlaneseq
      %v1427 = vshrl.u32 %v1426, 7
      %v1428 = vsub.s32 3, %v1427
      %v1429 = vrot.slane %v1403, %v1428
      %1431 = vbcast.lane.b32.xlu0 %v1429, 256
      %v1432 = vpop.permute.xlu0 %1431
      %v1433 = vlaneseq
      %v1434 = vshrl.u32 %v1433, 7
      %v1435 = vsub.s32 4, %v1434
      %v1436 = vrot.slane %v1403, %v1435
      %1438 = vbcast.lane.b32.xlu0 %v1436, 256
      %v1439 = vpop.permute.xlu0 %1438
      %v1440 = vlaneseq
      %v1441 = vshrl.u32 %v1440, 7
      %v1442 = vsub.s32 5, %v1441
      %v1443 = vrot.slane %v1403, %v1442
      %1445 = vbcast.lane.b32.xlu0 %v1443, 256
      %v1446 = vpop.permute.xlu0 %1445
      %v1447 = vlaneseq
      %v1448 = vshrl.u32 %v1447, 7
      %v1449 = vsub.s32 6, %v1448
      %v1450 = vrot.slane %v1403, %v1449
      %1452 = vbcast.lane.b32.xlu0 %v1450, 256
      %v1453 = vpop.permute.xlu0 %1452
      %v1454 = vlaneseq
      %v1455 = vshrl.u32 %v1454, 7
      %v1456 = vsub.s32 7, %v1455
      %v1457 = vrot.slane %v1403, %v1456
      %1459 = vbcast.lane.b32.xlu0 %v1457, 256
      %v1460 = vpop.permute.xlu0 %1459
      %v1461 = vlaneseq
      %v1462 = vshrl.u32 %v1461, 7
      %v1463 = vsub.s32 0, %v1462
      %v1464 = vrot.slane %v1404, %v1463
      %1466 = vbcast.lane.b32.xlu0 %v1464, 256
      %v1467 = vpop.permute.xlu0 %1466
      %v1468 = vlaneseq
      %v1469 = vshrl.u32 %v1468, 7
      %v1470 = vsub.s32 1, %v1469
      %v1471 = vrot.slane %v1404, %v1470
      %1473 = vbcast.lane.b32.xlu0 %v1471, 256
      %v1474 = vpop.permute.xlu0 %1473
      %v1475 = vlaneseq
      %v1476 = vshrl.u32 %v1475, 7
      %v1477 = vsub.s32 2, %v1476
      %v1478 = vrot.slane %v1404, %v1477
      %1480 = vbcast.lane.b32.xlu0 %v1478, 256
      %v1481 = vpop.permute.xlu0 %1480
      %v1482 = vlaneseq
      %v1483 = vshrl.u32 %v1482, 7
      %v1484 = vsub.s32 3, %v1483
      %v1485 = vrot.slane %v1404, %v1484
      %1487 = vbcast.lane.b32.xlu0 %v1485, 256
      %v1488 = vpop.permute.xlu0 %1487
      %v1489 = vlaneseq
      %v1490 = vshrl.u32 %v1489, 7
      %v1491 = vsub.s32 4, %v1490
      %v1492 = vrot.slane %v1404, %v1491
      %1494 = vbcast.lane.b32.xlu0 %v1492, 256
      %v1495 = vpop.permute.xlu0 %1494
      %v1496 = vlaneseq
      %v1497 = vshrl.u32 %v1496, 7
      %v1498 = vsub.s32 5, %v1497
      %v1499 = vrot.slane %v1404, %v1498
      %1501 = vbcast.lane.b32.xlu0 %v1499, 256
      %v1502 = vpop.permute.xlu0 %1501
      %v1503 = vlaneseq
      %v1504 = vshrl.u32 %v1503, 7
      %v1505 = vsub.s32 6, %v1504
      %v1506 = vrot.slane %v1404, %v1505
      %1508 = vbcast.lane.b32.xlu0 %v1506, 256
      %v1509 = vpop.permute.xlu0 %1508
      %v1510 = vlaneseq
      %v1511 = vshrl.u32 %v1510, 7
      %v1512 = vsub.s32 7, %v1511
      %v1513 = vrot.slane %v1404, %v1512
      %1515 = vbcast.lane.b32.xlu0 %v1513, 256
      %v1516 = vpop.permute.xlu0 %1515
      %v1517 = vmul.f32 %v1411, %v789
      %v1518 = vmul.f32 %v1418, %v790
      %v1519 = vmul.f32 %v1425, %v791
      %v1520 = vmul.f32 %v1432, %v792
      %v1521 = vmul.f32 %v1439, %v793
      %v1522 = vmul.f32 %v1446, %v794
      %v1523 = vmul.f32 %v1453, %v795
      %v1524 = vmul.f32 %v1460, %v796
      %v1525 = vmul.f32 %v1467, %v797
      %v1526 = vmul.f32 %v1474, %v798
      %v1527 = vmul.f32 %v1481, %v799
      %v1528 = vmul.f32 %v1488, %v800
      %v1529 = vmul.f32 %v1495, %v801
      %v1530 = vmul.f32 %v1502, %v802
      %v1531 = vmul.f32 %v1509, %v803
      %v1532 = vmul.f32 %v1516, %v804
      %vm1533 = vcmask 1048064
      %v1534 = vsel %vm1533, %v1517, 0.0
      %v1535 = vsel %vm1533, %v1518, 0.0
      %v1536 = vadd.f32 %v1534, %v1535
      %v1537 = vsel %vm1533, %v1519, 0.0
      %v1538 = vadd.f32 %v1536, %v1537
      %v1539 = vsel %vm1533, %v1520, 0.0
      %v1540 = vadd.f32 %v1538, %v1539
      %v1541 = vsel %vm1533, %v1521, 0.0
      %v1542 = vadd.f32 %v1540, %v1541
      %v1543 = vsel %vm1533, %v1522, 0.0
      %v1544 = vadd.f32 %v1542, %v1543
      %v1545 = vsel %vm1533, %v1523, 0.0
      %v1546 = vadd.f32 %v1544, %v1545
      %v1547 = vsel %vm1533, %v1524, 0.0
      %v1548 = vadd.f32 %v1546, %v1547
      %v1549 = vsel %vm1533, %v1525, 0.0
      %v1550 = vadd.f32 %v1548, %v1549
      %v1551 = vsel %vm1533, %v1526, 0.0
      %v1552 = vadd.f32 %v1550, %v1551
      %v1553 = vsel %vm1533, %v1527, 0.0
      %v1554 = vadd.f32 %v1552, %v1553
      %v1555 = vsel %vm1533, %v1528, 0.0
      %v1556 = vadd.f32 %v1554, %v1555
      %v1557 = vsel %vm1533, %v1529, 0.0
      %v1558 = vadd.f32 %v1556, %v1557
      %v1559 = vsel %vm1533, %v1530, 0.0
      %v1560 = vadd.f32 %v1558, %v1559
      %v1561 = vsel %vm1533, %v1531, 0.0
      %v1562 = vadd.f32 %v1560, %v1561
      %v1563 = vsel %vm1533, %v1532, 0.0
      %v1564 = vadd.f32 %v1562, %v1563
      %v1565 = vsel %vm823, %v1167, %v1564
      %v1566 = vpack.c.bf16 %v1565, %v1565
      %v1567 = vld [vmem:[#allocation13] sm:$0xf]
      %v1568 = vld [vmem:[#allocation13 + $0x4] sm:$0xf]
      %v1569 = vld [vmem:[#allocation13 + $0x8] sm:$0xf]
      %v1570 = vld [vmem:[#allocation13 + $0xc] sm:$0xf]
      %v1571 = vld [vmem:[#allocation13 + $0x10] sm:$0xf]
      %v1572 = vld [vmem:[#allocation13 + $0x14] sm:$0xf]
      %v1573 = vld [vmem:[#allocation13 + $0x18] sm:$0xf]
      %v1574 = vld [vmem:[#allocation13 + $0x1c] sm:$0xf]
      %v1575 = vld [vmem:[#allocation13 + $0x20] sm:$0xf]
      %v1576 = vld [vmem:[#allocation13 + $0x24] sm:$0xf]
      %v1577 = vld [vmem:[#allocation13 + $0x28] sm:$0xf]
      %v1578 = vld [vmem:[#allocation13 + $0x2c] sm:$0xf]
      %v1579 = vld [vmem:[#allocation13 + $0x30] sm:$0xf]
      %v1580 = vld [vmem:[#allocation13 + $0x34] sm:$0xf]
      %v1581 = vld [vmem:[#allocation13 + $0x38] sm:$0xf]
      %v1582 = vld [vmem:[#allocation13 + $0x3c] sm:$0xf]
      %v1599 = vunpack.c.l.b16 %v1567
      %v1600 = vunpack.c.l.b16 %v1568
      %v1601 = vunpack.c.l.b16 %v1569
      %v1602 = vunpack.c.l.b16 %v1570
      %v1603 = vunpack.c.l.b16 %v1571
      %v1604 = vunpack.c.l.b16 %v1572
      %v1605 = vunpack.c.l.b16 %v1573
      %v1606 = vunpack.c.l.b16 %v1574
      %v1607 = vunpack.c.l.b16 %v1575
      %v1608 = vunpack.c.l.b16 %v1576
      %v1609 = vunpack.c.l.b16 %v1577
      %v1610 = vunpack.c.l.b16 %v1578
      %v1611 = vunpack.c.l.b16 %v1579
      %v1612 = vunpack.c.l.b16 %v1580
      %v1613 = vunpack.c.l.b16 %v1581
      %v1614 = vunpack.c.l.b16 %v1582
      %v1615 = vpack.c.b16 %v1600, %v1599
      %v1616 = vpack.c.b16 %v1602, %v1601
      %v1617 = vpack.c.b16 %v1604, %v1603
      %v1618 = vpack.c.b16 %v1606, %v1605
      %v1619 = vpack.c.b16 %v1608, %v1607
      %v1620 = vpack.c.b16 %v1610, %v1609
      %v1621 = vpack.c.b16 %v1612, %v1611
      %v1622 = vpack.c.b16 %v1614, %v1613
      %1631 = vmatprep.subr.bf16.mxu0 0
      %1632 = vmatpush1.bf16.msra.mxu0 %v1622
      %1633 = vmatprep.subr.bf16.mxu0 0
      %1634 = vmatpush1.bf16.msra.mxu0 %v1621
      %1635 = vmatprep.subr.bf16.mxu0 0
      %1636 = vmatpush1.bf16.msra.mxu0 %v1620
      %1637 = vmatprep.subr.bf16.mxu0 0
      %1638 = vmatpush1.bf16.msra.mxu0 %v1619
      %1639 = vmatprep.subr.bf16.mxu0 0
      %1640 = vmatpush1.bf16.msra.mxu0 %v1618
      %1641 = vmatprep.subr.bf16.mxu0 0
      %1642 = vmatpush1.bf16.msra.mxu0 %v1617
      %1643 = vmatprep.subr.bf16.mxu0 0
      %1644 = vmatpush1.bf16.msra.mxu0 %v1616
      %1645 = vmatprep.subr.bf16.mxu0 0
      %1646 = vmatpush1.bf16.msra.mxu0 %v1615
      %1647 = vmatprep.subr.bf16.mxu0 0
      %1648 = vmatpush2.bf16.msra.mxu0 0
      %1649 = vmatprep.subr.bf16.mxu0 0
      %1650 = vmatpush2.bf16.msra.mxu0 0
      %1651 = vmatprep.subr.bf16.mxu0 0
      %1652 = vmatpush2.bf16.msra.mxu0 0
      %1653 = vmatprep.subr.bf16.mxu0 0
      %1654 = vmatpush2.bf16.msra.mxu0 0
      %1655 = vmatprep.subr.bf16.mxu0 0
      %1656 = vmatpush2.bf16.msra.mxu0 0
      %1657 = vmatprep.subr.bf16.mxu0 0
      %1658 = vmatpush2.bf16.msra.mxu0 0
      %1659 = vmatprep.subr.bf16.mxu0 0
      %1660 = vmatpush2.bf16.msra.mxu0 0
      %1661 = vmatprep.subr.bf16.mxu0 0
      %1662 = vmatpush2.bf16.msra.mxu0 0
      %1663 = vmatprep.mubr.bf16.mxu0 0
      %1664 = vmatmul.mubr.bf16.gmra.mxu0 %v1566
      %v1665 = vpop.f32.mrf.mxu0
      %v1666 = vadd.f32 0.0, %v1665
      %v1667 = vpop.f32.mrf.mxu0
      %v1668 = vpop.f32.mrf.mxu0
      %v1669 = vpop.f32.mrf.mxu0
      %1670 = vdwg.mxu0
      %v1671 = vadd.f32 %v492, %v1666
      %v1672 = vld [vmem:[#allocation19] sm:$0x1]
      %v1673 = vld [vmem:[#allocation21] sm:$0x1]
      %1674 = vadd.xlane.f32.xlu0 %v1671
      %v1675 = vpop.xlane.xlu0 %1674
      %v1676 = vmul.f32 %v1675, %v501
      %v1677 = vsub.f32 %v1671, %v1676
      %v1678 = vmul.f32 %v1677, %v1677
      %1679 = vadd.xlane.f32.xlu0 %v1678
      %v1680 = vpop.xlane.xlu0 %1679
      %v1681 = vmul.f32 %v1680, %v501
      %v1682 = vadd.f32 %v1681, 1e-05
      %v1683 = vrsqrt.pop %v1682
      %v1684 = vmul.f32 %v1677, %v1683
      %v1686 = vlaneseq
      %v1687 = vshrl.u32 %v1686, 7
      %v1688 = vsub.s32 0, %v1687
      %v1689 = vrot.slane %v1672, %v1688
      %v1691 = vmul.f32 %v1684, %v1689
      %v1693 = vlaneseq
      %v1694 = vshrl.u32 %v1693, 7
      %v1695 = vsub.s32 0, %v1694
      %v1696 = vrot.slane %v1673, %v1695
      %v1698 = vadd.f32 %v1691, %v1696
      %v1699 = vpack.c.bf16 %v1698, %v1698
      %v1700 = vld [vmem:[#allocation15] sm:$0xff]
      %v1701 = vld [vmem:[#allocation15 + $0x8] sm:$0xff]
      %v1702 = vld [vmem:[#allocation15 + $0x10] sm:$0xff]
      %v1703 = vld [vmem:[#allocation15 + $0x18] sm:$0xff]
      %v1704 = vld [vmem:[#allocation15 + $0x20] sm:$0xff]
      %v1705 = vld [vmem:[#allocation15 + $0x28] sm:$0xff]
      %v1706 = vld [vmem:[#allocation15 + $0x30] sm:$0xff]
      %v1707 = vld [vmem:[#allocation15 + $0x38] sm:$0xff]
      %v1708 = vld [vmem:[#allocation15 + $0x40] sm:$0xff]
      %v1709 = vld [vmem:[#allocation15 + $0x48] sm:$0xff]
      %v1710 = vld [vmem:[#allocation15 + $0x50] sm:$0xff]
      %v1711 = vld [vmem:[#allocation15 + $0x58] sm:$0xff]
      %v1712 = vld [vmem:[#allocation15 + $0x60] sm:$0xff]
      %v1713 = vld [vmem:[#allocation15 + $0x68] sm:$0xff]
      %v1714 = vld [vmem:[#allocation15 + $0x70] sm:$0xff]
      %v1715 = vld [vmem:[#allocation15 + $0x78] sm:$0xff]
      %v1716 = vld [vmem:[%s11] sm:$0x3]
      %v1718 = vlaneseq
      %v1719 = vshrl.u32 %v1718, 7
      %v1720 = vsub.s32 0, %v1719
      %v1721 = vrot.slane %v1716, %v1720
      %v1722 = vlaneseq
      %v1723 = vshrl.u32 %v1722, 7
      %v1724 = vsub.s32 1, %v1723
      %v1725 = vrot.slane %v1716, %v1724
      %v1744 = vunpack.c.l.b16 %v1700
      %v1745 = vunpack.c.h.b16 %v1700
      %v1746 = vunpack.c.l.b16 %v1701
      %v1747 = vunpack.c.h.b16 %v1701
      %v1748 = vunpack.c.l.b16 %v1702
      %v1749 = vunpack.c.h.b16 %v1702
      %v1750 = vunpack.c.l.b16 %v1703
      %v1751 = vunpack.c.h.b16 %v1703
      %v1752 = vunpack.c.l.b16 %v1704
      %v1753 = vunpack.c.h.b16 %v1704
      %v1754 = vunpack.c.l.b16 %v1705
      %v1755 = vunpack.c.h.b16 %v1705
      %v1756 = vunpack.c.l.b16 %v1706
      %v1757 = vunpack.c.h.b16 %v1706
      %v1758 = vunpack.c.l.b16 %v1707
      %v1759 = vunpack.c.h.b16 %v1707
      %v1760 = vunpack.c.l.b16 %v1708
      %v1761 = vunpack.c.h.b16 %v1708
      %v1762 = vunpack.c.l.b16 %v1709
      %v1763 = vunpack.c.h.b16 %v1709
      %v1764 = vunpack.c.l.b16 %v1710
      %v1765 = vunpack.c.h.b16 %v1710
      %v1766 = vunpack.c.l.b16 %v1711
      %v1767 = vunpack.c.h.b16 %v1711
      %v1768 = vunpack.c.l.b16 %v1712
      %v1769 = vunpack.c.h.b16 %v1712
      %v1770 = vunpack.c.l.b16 %v1713
      %v1771 = vunpack.c.h.b16 %v1713
      %v1772 = vunpack.c.l.b16 %v1714
      %v1773 = vunpack.c.h.b16 %v1714
      %v1774 = vunpack.c.l.b16 %v1715
      %v1775 = vunpack.c.h.b16 %v1715
      %v1776 = vpack.c.b16 %v1746, %v1744
      %v1777 = vpack.c.b16 %v1747, %v1745
      %v1778 = vpack.c.b16 %v1750, %v1748
      %v1779 = vpack.c.b16 %v1751, %v1749
      %v1780 = vpack.c.b16 %v1754, %v1752
      %v1781 = vpack.c.b16 %v1755, %v1753
      %v1782 = vpack.c.b16 %v1758, %v1756
      %v1783 = vpack.c.b16 %v1759, %v1757
      %v1784 = vpack.c.b16 %v1762, %v1760
      %v1785 = vpack.c.b16 %v1763, %v1761
      %v1786 = vpack.c.b16 %v1766, %v1764
      %v1787 = vpack.c.b16 %v1767, %v1765
      %v1788 = vpack.c.b16 %v1770, %v1768
      %v1789 = vpack.c.b16 %v1771, %v1769
      %v1790 = vpack.c.b16 %v1774, %v1772
      %v1791 = vpack.c.b16 %v1775, %v1773
      %1808 = vmatprep.subr.bf16.mxu0 %v1791
      %1809 = vmatpush1.bf16.msra.mxu0 %v1790
      %1810 = vmatprep.subr.bf16.mxu0 %v1789
      %1811 = vmatpush1.bf16.msra.mxu0 %v1788
      %1812 = vmatprep.subr.bf16.mxu0 %v1787
      %1813 = vmatpush1.bf16.msra.mxu0 %v1786
      %1814 = vmatprep.subr.bf16.mxu0 %v1785
      %1815 = vmatpush1.bf16.msra.mxu0 %v1784
      %1816 = vmatprep.subr.bf16.mxu0 %v1783
      %1817 = vmatpush1.bf16.msra.mxu0 %v1782
      %1818 = vmatprep.subr.bf16.mxu0 %v1781
      %1819 = vmatpush1.bf16.msra.mxu0 %v1780
      %1820 = vmatprep.subr.bf16.mxu0 %v1779
      %1821 = vmatpush1.bf16.msra.mxu0 %v1778
      %1822 = vmatprep.subr.bf16.mxu0 %v1777
      %1823 = vmatpush1.bf16.msra.mxu0 %v1776
      %1824 = vmatprep.subr.bf16.mxu0 0
      %1825 = vmatpush2.bf16.msra.mxu0 0
      %1826 = vmatprep.subr.bf16.mxu0 0
      %1827 = vmatpush2.bf16.msra.mxu0 0
      %1828 = vmatprep.subr.bf16.mxu0 0
      %1829 = vmatpush2.bf16.msra.mxu0 0
      %1830 = vmatprep.subr.bf16.mxu0 0
      %1831 = vmatpush2.bf16.msra.mxu0 0
      %1832 = vmatprep.subr.bf16.mxu0 0
      %1833 = vmatpush2.bf16.msra.mxu0 0
      %1834 = vmatprep.subr.bf16.mxu0 0
      %1835 = vmatpush2.bf16.msra.mxu0 0
      %1836 = vmatprep.subr.bf16.mxu0 0
      %1837 = vmatpush2.bf16.msra.mxu0 0
      %1838 = vmatprep.subr.bf16.mxu0 0
      %1839 = vmatpush2.bf16.msra.mxu0 0
      %1840 = vmatprep.mubr.bf16.mxu0 0
      %1841 = vmatmul.mubr.bf16.gmra.mxu0 %v1699
      %v1842 = vpop.f32.mrf.mxu0
      %v1843 = vadd.f32 %v1721, %v1842
      %v1844 = vpop.f32.mrf.mxu0
      %v1845 = vadd.f32 %v1725, %v1844
      %v1846 = vpop.f32.mrf.mxu0
      %v1847 = vpop.f32.mrf.mxu0
      %1848 = vdwg.mxu0
      %v1849 = vmul.f32 %v1843, %v1843
      %v1850 = vmul.f32 %v1845, %v1845
      %v1851 = vmul.f32 %v1843, %v1849
      %v1852 = vmul.f32 %v1845, %v1850
      %v1853 = vmul.f32 %v1851, 0.044715
      %v1854 = vmul.f32 %v1852, 0.044715
      %v1855 = vadd.f32 %v1843, %v1853
      %v1856 = vadd.f32 %v1845, %v1854
      %v1857 = vmul.f32 %v1855, 0.7978846
      %v1858 = vmul.f32 %v1856, 0.7978846
      %v1859 = vtanh.pop %v1857
      %v1860 = vtanh.pop %v1858
      %v1861 = vadd.f32 %v1859, 1.0
      %v1862 = vadd.f32 %v1860, 1.0
      %v1863 = vmul.f32 %v1861, 0.5
      %v1864 = vmul.f32 %v1862, 0.5
      %v1865 = vmul.f32 %v1843, %v1863
      %v1866 = vmul.f32 %v1845, %v1864
      %v1867 = vpack.c.bf16 %v1865, %v1865
      %v1868 = vpack.c.bf16 %v1866, %v1866
      %v1869 = vld [vmem:[#allocation16] sm:$0xf]
      %v1870 = vld [vmem:[#allocation16 + $0x4] sm:$0xf]
      %v1871 = vld [vmem:[#allocation16 + $0x8] sm:$0xf]
      %v1872 = vld [vmem:[#allocation16 + $0xc] sm:$0xf]
      %v1873 = vld [vmem:[#allocation16 + $0x10] sm:$0xf]
      %v1874 = vld [vmem:[#allocation16 + $0x14] sm:$0xf]
      %v1875 = vld [vmem:[#allocation16 + $0x18] sm:$0xf]
      %v1876 = vld [vmem:[#allocation16 + $0x1c] sm:$0xf]
      %v1877 = vld [vmem:[#allocation16 + $0x20] sm:$0xf]
      %v1878 = vld [vmem:[#allocation16 + $0x24] sm:$0xf]
      %v1879 = vld [vmem:[#allocation16 + $0x28] sm:$0xf]
      %v1880 = vld [vmem:[#allocation16 + $0x2c] sm:$0xf]
      %v1881 = vld [vmem:[#allocation16 + $0x30] sm:$0xf]
      %v1882 = vld [vmem:[#allocation16 + $0x34] sm:$0xf]
      %v1883 = vld [vmem:[#allocation16 + $0x38] sm:$0xf]
      %v1884 = vld [vmem:[#allocation16 + $0x3c] sm:$0xf]
      %v1885 = vld [vmem:[#allocation16 + $0x40] sm:$0xf]
      %v1886 = vld [vmem:[#allocation16 + $0x44] sm:$0xf]
      %v1887 = vld [vmem:[#allocation16 + $0x48] sm:$0xf]
      %v1888 = vld [vmem:[#allocation16 + $0x4c] sm:$0xf]
      %v1889 = vld [vmem:[#allocation16 + $0x50] sm:$0xf]
      %v1890 = vld [vmem:[#allocation16 + $0x54] sm:$0xf]
      %v1891 = vld [vmem:[#allocation16 + $0x58] sm:$0xf]
      %v1892 = vld [vmem:[#allocation16 + $0x5c] sm:$0xf]
      %v1893 = vld [vmem:[#allocation16 + $0x60] sm:$0xf]
      %v1894 = vld [vmem:[#allocation16 + $0x64] sm:$0xf]
      %v1895 = vld [vmem:[#allocation16 + $0x68] sm:$0xf]
      %v1896 = vld [vmem:[#allocation16 + $0x6c] sm:$0xf]
      %v1897 = vld [vmem:[#allocation16 + $0x70] sm:$0xf]
      %v1898 = vld [vmem:[#allocation16 + $0x74] sm:$0xf]
      %v1899 = vld [vmem:[#allocation16 + $0x78] sm:$0xf]
      %v1900 = vld [vmem:[#allocation16 + $0x7c] sm:$0xf]
      %v1933 = vunpack.c.l.b16 %v1869
      %v1934 = vunpack.c.l.b16 %v1870
      %v1935 = vunpack.c.l.b16 %v1871
      %v1936 = vunpack.c.l.b16 %v1872
      %v1937 = vunpack.c.l.b16 %v1873
      %v1938 = vunpack.c.l.b16 %v1874
      %v1939 = vunpack.c.l.b16 %v1875
      %v1940 = vunpack.c.l.b16 %v1876
      %v1941 = vunpack.c.l.b16 %v1877
      %v1942 = vunpack.c.l.b16 %v1878
      %v1943 = vunpack.c.l.b16 %v1879
      %v1944 = vunpack.c.l.b16 %v1880
      %v1945 = vunpack.c.l.b16 %v1881
      %v1946 = vunpack.c.l.b16 %v1882
      %v1947 = vunpack.c.l.b16 %v1883
      %v1948 = vunpack.c.l.b16 %v1884
      %v1949 = vunpack.c.l.b16 %v1885
      %v1950 = vunpack.c.l.b16 %v1886
      %v1951 = vunpack.c.l.b16 %v1887
      %v1952 = vunpack.c.l.b16 %v1888
      %v1953 = vunpack.c.l.b16 %v1889
      %v1954 = vunpack.c.l.b16 %v1890
      %v1955 = vunpack.c.l.b16 %v1891
      %v1956 = vunpack.c.l.b16 %v1892
      %v1957 = vunpack.c.l.b16 %v1893
      %v1958 = vunpack.c.l.b16 %v1894
      %v1959 = vunpack.c.l.b16 %v1895
      %v1960 = vunpack.c.l.b16 %v1896
      %v1961 = vunpack.c.l.b16 %v1897
      %v1962 = vunpack.c.l.b16 %v1898
      %v1963 = vunpack.c.l.b16 %v1899
      %v1964 = vunpack.c.l.b16 %v1900
      %v1965 = vpack.c.b16 %v1934, %v1933
      %v1966 = vpack.c.b16 %v1936, %v1935
      %v1967 = vpack.c.b16 %v1938, %v1937
      %v1968 = vpack.c.b16 %v1940, %v1939
      %v1969 = vpack.c.b16 %v1942, %v1941
      %v1970 = vpack.c.b16 %v1944, %v1943
      %v1971 = vpack.c.b16 %v1946, %v1945
      %v1972 = vpack.c.b16 %v1948, %v1947
      %v1973 = vpack.c.b16 %v1950, %v1949
      %v1974 = vpack.c.b16 %v1952, %v1951
      %v1975 = vpack.c.b16 %v1954, %v1953
      %v1976 = vpack.c.b16 %v1956, %v1955
      %v1977 = vpack.c.b16 %v1958, %v1957
      %v1978 = vpack.c.b16 %v1960, %v1959
      %v1979 = vpack.c.b16 %v1962, %v1961
      %v1980 = vpack.c.b16 %v1964, %v1963
      %1997 = vmatprep.subr.bf16.mxu0 0
      %1998 = vmatpush1.bf16.msra.mxu0 %v1972
      %1999 = vmatprep.subr.bf16.mxu0 0
      %2000 = vmatpush1.bf16.msra.mxu0 %v1971
      %2001 = vmatprep.subr.bf16.mxu0 0
      %2002 = vmatpush1.bf16.msra.mxu0 %v1970
      %2003 = vmatprep.subr.bf16.mxu0 0
      %2004 = vmatpush1.bf16.msra.mxu0 %v1969
      %2005 = vmatprep.subr.bf16.mxu0 0
      %2006 = vmatpush1.bf16.msra.mxu0 %v1968
      %2007 = vmatprep.subr.bf16.mxu0 0
      %2008 = vmatpush1.bf16.msra.mxu0 %v1967
      %2009 = vmatprep.subr.bf16.mxu0 0
      %2010 = vmatpush1.bf16.msra.mxu0 %v1966
      %2011 = vmatprep.subr.bf16.mxu0 0
      %2012 = vmatpush1.bf16.msra.mxu0 %v1965
      %2013 = vmatprep.subr.bf16.mxu0 0
      %2014 = vmatpush2.bf16.msra.mxu0 %v1980
      %2015 = vmatprep.subr.bf16.mxu0 0
      %2016 = vmatpush2.bf16.msra.mxu0 %v1979
      %2017 = vmatprep.subr.bf16.mxu0 0
      %2018 = vmatpush2.bf16.msra.mxu0 %v1978
      %2019 = vmatprep.subr.bf16.mxu0 0
      %2020 = vmatpush2.bf16.msra.mxu0 %v1977
      %2021 = vmatprep.subr.bf16.mxu0 0
      %2022 = vmatpush2.bf16.msra.mxu0 %v1976
      %2023 = vmatprep.subr.bf16.mxu0 0
      %2024 = vmatpush2.bf16.msra.mxu0 %v1975
      %2025 = vmatprep.subr.bf16.mxu0 0
      %2026 = vmatpush2.bf16.msra.mxu0 %v1974
      %2027 = vmatprep.subr.bf16.mxu0 0
      %2028 = vmatpush2.bf16.msra.mxu0 %v1973
      %2029 = vmatprep.mubr.bf16.mxu0 %v1868
      %2030 = vmatmul.mubr.bf16.gmra.mxu0 %v1867
      %v2031 = vpop.f32.mrf.mxu0
      %v2032 = vadd.f32 0.0, %v2031
      %v2033 = vpop.f32.mrf.mxu0
      %v2034 = vpop.f32.mrf.mxu0
      %v2035 = vpop.f32.mrf.mxu0
      %2036 = vdwg.mxu0
      %v2037 = vadd.f32 %v1671, %v2032
      %v2038 = vld [vmem:[#allocation18] sm:$0x1]
      %v2040 = vlaneseq
      %v2041 = vshrl.u32 %v2040, 7
      %v2042 = vsub.s32 0, %v2041
      %v2043 = vrot.slane %v2038, %v2042
      %v2045 = vadd.f32 %v2037, %v2043
      %s2046 = scalar_lea.vmem %s8, 1
      %v2047 = vld [vmem:[%s2046] sm:$0x1]
      %s2048 = scalar_lea.vmem %s9, 1
      %v2049 = vld [vmem:[%s2048] sm:$0x1]
      %2050 = vadd.xlane.f32.xlu0 %v2045
      %v2051 = vpop.xlane.xlu0 %2050
      %v2052 = vmul.f32 %v2051, %v501
      %v2053 = vsub.f32 %v2045, %v2052
      %v2054 = vmul.f32 %v2053, %v2053
      %2055 = vadd.xlane.f32.xlu0 %v2054
      %v2056 = vpop.xlane.xlu0 %2055
      %v2057 = vmul.f32 %v2056, %v501
      %v2058 = vadd.f32 %v2057, 1e-05
      %v2059 = vrsqrt.pop %v2058
      %v2060 = vmul.f32 %v2053, %v2059
      %v2062 = vlaneseq
      %v2063 = vshrl.u32 %v2062, 7
      %v2064 = vsub.s32 0, %v2063
      %v2065 = vrot.slane %v2047, %v2064
      %v2067 = vmul.f32 %v2060, %v2065
      %v2069 = vlaneseq
      %v2070 = vshrl.u32 %v2069, 7
      %v2071 = vsub.s32 0, %v2070
      %v2072 = vrot.slane %v2049, %v2071
      %v2074 = vadd.f32 %v2067, %v2072
      %v2075 = vpack.c.bf16 %v2074, %v2074
      %s2076 = scalar_lea.vmem [#allocation12], 192
      %v2077 = vld [vmem:[%s2076] sm:$0xff]
      %v2078 = vld [vmem:[%s2076 + $0x8] sm:$0xf]
      %v2079 = vld [vmem:[%s2076 + $0xc] sm:$0xff]
      %v2080 = vld [vmem:[%s2076 + $0x14] sm:$0xf]
      %v2081 = vld [vmem:[%s2076 + $0x18] sm:$0xff]
      %v2082 = vld [vmem:[%s2076 + $0x20] sm:$0xf]
      %v2083 = vld [vmem:[%s2076 + $0x24] sm:$0xff]
      %v2084 = vld [vmem:[%s2076 + $0x2c] sm:$0xf]
      %v2085 = vld [vmem:[%s2076 + $0x30] sm:$0xff]
      %v2086 = vld [vmem:[%s2076 + $0x38] sm:$0xf]
      %v2087 = vld [vmem:[%s2076 + $0x3c] sm:$0xff]
      %v2088 = vld [vmem:[%s2076 + $0x44] sm:$0xf]
      %v2089 = vld [vmem:[%s2076 + $0x48] sm:$0xff]
      %v2090 = vld [vmem:[%s2076 + $0x50] sm:$0xf]
      %v2091 = vld [vmem:[%s2076 + $0x54] sm:$0xff]
      %v2092 = vld [vmem:[%s2076 + $0x5c] sm:$0xf]
      %v2093 = vld [vmem:[%s2076 + $0x60] sm:$0xff]
      %v2094 = vld [vmem:[%s2076 + $0x68] sm:$0xf]
      %v2095 = vld [vmem:[%s2076 + $0x6c] sm:$0xff]
      %v2096 = vld [vmem:[%s2076 + $0x74] sm:$0xf]
      %v2097 = vld [vmem:[%s2076 + $0x78] sm:$0xff]
      %v2098 = vld [vmem:[%s2076 + $0x80] sm:$0xf]
      %v2099 = vld [vmem:[%s2076 + $0x84] sm:$0xff]
      %v2100 = vld [vmem:[%s2076 + $0x8c] sm:$0xf]
      %v2101 = vld [vmem:[%s2076 + $0x90] sm:$0xff]
      %v2102 = vld [vmem:[%s2076 + $0x98] sm:$0xf]
      %v2103 = vld [vmem:[%s2076 + $0x9c] sm:$0xff]
      %v2104 = vld [vmem:[%s2076 + $0xa4] sm:$0xf]
      %v2105 = vld [vmem:[%s2076 + $0xa8] sm:$0xff]
      %v2106 = vld [vmem:[%s2076 + $0xb0] sm:$0xf]
      %v2107 = vld [vmem:[%s2076 + $0xb4] sm:$0xff]
      %v2108 = vld [vmem:[%s2076 + $0xbc] sm:$0xf]
      %v2141 = vunpack.c.l.b16 %v2077
      %v2142 = vunpack.c.h.b16 %v2077
      %v2143 = vunpack.c.l.b16 %v2078
      %v2144 = vunpack.c.l.b16 %v2079
      %v2145 = vunpack.c.h.b16 %v2079
      %v2146 = vunpack.c.l.b16 %v2080
      %v2147 = vunpack.c.l.b16 %v2081
      %v2148 = vunpack.c.h.b16 %v2081
      %v2149 = vunpack.c.l.b16 %v2082
      %v2150 = vunpack.c.l.b16 %v2083
      %v2151 = vunpack.c.h.b16 %v2083
      %v2152 = vunpack.c.l.b16 %v2084
      %v2153 = vunpack.c.l.b16 %v2085
      %v2154 = vunpack.c.h.b16 %v2085
      %v2155 = vunpack.c.l.b16 %v2086
      %v2156 = vunpack.c.l.b16 %v2087
      %v2157 = vunpack.c.h.b16 %v2087
      %v2158 = vunpack.c.l.b16 %v2088
      %v2159 = vunpack.c.l.b16 %v2089
      %v2160 = vunpack.c.h.b16 %v2089
      %v2161 = vunpack.c.l.b16 %v2090
      %v2162 = vunpack.c.l.b16 %v2091
      %v2163 = vunpack.c.h.b16 %v2091
      %v2164 = vunpack.c.l.b16 %v2092
      %v2165 = vunpack.c.l.b16 %v2093
      %v2166 = vunpack.c.h.b16 %v2093
      %v2167 = vunpack.c.l.b16 %v2094
      %v2168 = vunpack.c.l.b16 %v2095
      %v2169 = vunpack.c.h.b16 %v2095
      %v2170 = vunpack.c.l.b16 %v2096
      %v2171 = vunpack.c.l.b16 %v2097
      %v2172 = vunpack.c.h.b16 %v2097
      %v2173 = vunpack.c.l.b16 %v2098
      %v2174 = vunpack.c.l.b16 %v2099
      %v2175 = vunpack.c.h.b16 %v2099
      %v2176 = vunpack.c.l.b16 %v2100
      %v2177 = vunpack.c.l.b16 %v2101
      %v2178 = vunpack.c.h.b16 %v2101
      %v2179 = vunpack.c.l.b16 %v2102
      %v2180 = vunpack.c.l.b16 %v2103
      %v2181 = vunpack.c.h.b16 %v2103
      %v2182 = vunpack.c.l.b16 %v2104
      %v2183 = vunpack.c.l.b16 %v2105
      %v2184 = vunpack.c.h.b16 %v2105
      %v2185 = vunpack.c.l.b16 %v2106
      %v2186 = vunpack.c.l.b16 %v2107
      %v2187 = vunpack.c.h.b16 %v2107
      %v2188 = vunpack.c.l.b16 %v2108
      %v2189 = vpack.c.b16 %v2144, %v2141
      %v2190 = vpack.c.b16 %v2145, %v2142
      %v2191 = vpack.c.b16 %v2146, %v2143
      %v2192 = vpack.c.b16 %v2150, %v2147
      %v2193 = vpack.c.b16 %v2151, %v2148
      %v2194 = vpack.c.b16 %v2152, %v2149
      %v2195 = vpack.c.b16 %v2156, %v2153
      %v2196 = vpack.c.b16 %v2157, %v2154
      %v2197 = vpack.c.b16 %v2158, %v2155
      %v2198 = vpack.c.b16 %v2162, %v2159
      %v2199 = vpack.c.b16 %v2163, %v2160
      %v2200 = vpack.c.b16 %v2164, %v2161
      %v2201 = vpack.c.b16 %v2168, %v2165
      %v2202 = vpack.c.b16 %v2169, %v2166
      %v2203 = vpack.c.b16 %v2170, %v2167
      %v2204 = vpack.c.b16 %v2174, %v2171
      %v2205 = vpack.c.b16 %v2175, %v2172
      %v2206 = vpack.c.b16 %v2176, %v2173
      %v2207 = vpack.c.b16 %v2180, %v2177
      %v2208 = vpack.c.b16 %v2181, %v2178
      %v2209 = vpack.c.b16 %v2182, %v2179
      %v2210 = vpack.c.b16 %v2186, %v2183
      %v2211 = vpack.c.b16 %v2187, %v2184
      %v2212 = vpack.c.b16 %v2188, %v2185
      %2237 = vmatprep.subr.bf16.mxu0 %v2211
      %2238 = vmatpush1.bf16.msra.mxu0 %v2210
      %2239 = vmatprep.subr.bf16.mxu0 %v2208
      %2240 = vmatpush1.bf16.msra.mxu0 %v2207
      %2241 = vmatprep.subr.bf16.mxu0 %v2205
      %2242 = vmatpush1.bf16.msra.mxu0 %v2204
      %2243 = vmatprep.subr.bf16.mxu0 %v2202
      %2244 = vmatpush1.bf16.msra.mxu0 %v2201
      %2245 = vmatprep.subr.bf16.mxu0 %v2199
      %2246 = vmatpush1.bf16.msra.mxu0 %v2198
      %2247 = vmatprep.subr.bf16.mxu0 %v2196
      %2248 = vmatpush1.bf16.msra.mxu0 %v2195
      %2249 = vmatprep.subr.bf16.mxu0 %v2193
      %2250 = vmatpush1.bf16.msra.mxu0 %v2192
      %2251 = vmatprep.subr.bf16.mxu0 %v2190
      %2252 = vmatpush1.bf16.msra.mxu0 %v2189
      %2253 = vmatprep.subr.bf16.mxu0 0
      %2254 = vmatpush2.bf16.msra.mxu0 0
      %2255 = vmatprep.subr.bf16.mxu0 0
      %2256 = vmatpush2.bf16.msra.mxu0 0
      %2257 = vmatprep.subr.bf16.mxu0 0
      %2258 = vmatpush2.bf16.msra.mxu0 0
      %2259 = vmatprep.subr.bf16.mxu0 0
      %2260 = vmatpush2.bf16.msra.mxu0 0
      %2261 = vmatprep.subr.bf16.mxu0 0
      %2262 = vmatpush2.bf16.msra.mxu0 0
      %2263 = vmatprep.subr.bf16.mxu0 0
      %2264 = vmatpush2.bf16.msra.mxu0 0
      %2265 = vmatprep.subr.bf16.mxu0 0
      %2266 = vmatpush2.bf16.msra.mxu0 0
      %2267 = vmatprep.subr.bf16.mxu0 0
      %2268 = vmatpush2.bf16.msra.mxu0 0
      %2269 = vmatprep.mubr.bf16.mxu0 0
      %2270 = vmatmul.mubr.bf16.gmra.mxu0 %v2075
      %v2271 = vpop.f32.mrf.mxu0
      %v2272 = vadd.f32 0.0, %v2271
      %v2273 = vpop.f32.mrf.mxu0
      %v2274 = vadd.f32 0.0, %v2273
      %v2275 = vpop.f32.mrf.mxu0
      %v2276 = vpop.f32.mrf.mxu0
      %2277 = vdwg.mxu0
      %2278 = vmatprep.subr.bf16.mxu0 0
      %2279 = vmatpush1.bf16.msra.mxu0 %v2212
      %2280 = vmatprep.subr.bf16.mxu0 0
      %2281 = vmatpush1.bf16.msra.mxu0 %v2209
      %2282 = vmatprep.subr.bf16.mxu0 0
      %2283 = vmatpush1.bf16.msra.mxu0 %v2206
      %2284 = vmatprep.subr.bf16.mxu0 0
      %2285 = vmatpush1.bf16.msra.mxu0 %v2203
      %2286 = vmatprep.subr.bf16.mxu0 0
      %2287 = vmatpush1.bf16.msra.mxu0 %v2200
      %2288 = vmatprep.subr.bf16.mxu0 0
      %2289 = vmatpush1.bf16.msra.mxu0 %v2197
      %2290 = vmatprep.subr.bf16.mxu0 0
      %2291 = vmatpush1.bf16.msra.mxu0 %v2194
      %2292 = vmatprep.subr.bf16.mxu0 0
      %2293 = vmatpush1.bf16.msra.mxu0 %v2191
      %2294 = vmatprep.subr.bf16.mxu0 0
      %2295 = vmatpush2.bf16.msra.mxu0 0
      %2296 = vmatprep.subr.bf16.mxu0 0
      %2297 = vmatpush2.bf16.msra.mxu0 0
      %2298 = vmatprep.subr.bf16.mxu0 0
      %2299 = vmatpush2.bf16.msra.mxu0 0
      %2300 = vmatprep.subr.bf16.mxu0 0
      %2301 = vmatpush2.bf16.msra.mxu0 0
      %2302 = vmatprep.subr.bf16.mxu0 0
      %2303 = vmatpush2.bf16.msra.mxu0 0
      %2304 = vmatprep.subr.bf16.mxu0 0
      %2305 = vmatpush2.bf16.msra.mxu0 0
      %2306 = vmatprep.subr.bf16.mxu0 0
      %2307 = vmatpush2.bf16.msra.mxu0 0
      %2308 = vmatprep.subr.bf16.mxu0 0
      %2309 = vmatpush2.bf16.msra.mxu0 0
      %2310 = vmatprep.mubr.bf16.mxu0 0
      %2311 = vmatmul.mubr.bf16.gmra.mxu0 %v2075
      %v2312 = vpop.f32.mrf.mxu0
      %v2313 = vadd.f32 0.0, %v2312
      %v2314 = vpop.f32.mrf.mxu0
      %v2315 = vpop.f32.mrf.mxu0
      %v2316 = vpop.f32.mrf.mxu0
      %2317 = vdwg.mxu0
      %v2318 = vmul.f32 %v2272, 0.125
      %s2319 = sadd.s32 %s302, 16
      %s2320 = smul.u32 %s2319, 8
      %s2321 = scalar_lea.vmem [#allocation2], %s2320
      %2322 = vst [vmem:[%s2321] sm:$0xff] %v2274
      %s2323 = scalar_lea.vmem [#allocation3], %s2320
      %2324 = vst [vmem:[%s2323] sm:$0xff] %v2313
      %s2325 = scalar_lea.vmem [#allocation2], 128
      %v2326 = vld [vmem:[%s2325] sm:$0xff]
      %v2327 = vld [vmem:[%s2325 + $0x8] sm:$0xff]
      %v2328 = vld [vmem:[%s2325 + $0x10] sm:$0xff]
      %v2329 = vld [vmem:[%s2325 + $0x18] sm:$0xff]
      %v2330 = vld [vmem:[%s2325 + $0x20] sm:$0xff]
      %v2331 = vld [vmem:[%s2325 + $0x28] sm:$0xff]
      %v2332 = vld [vmem:[%s2325 + $0x30] sm:$0xff]
      %v2333 = vld [vmem:[%s2325 + $0x38] sm:$0xff]
      %v2334 = vld [vmem:[%s2325 + $0x40] sm:$0xff]
      %v2335 = vld [vmem:[%s2325 + $0x48] sm:$0xff]
      %v2336 = vld [vmem:[%s2325 + $0x50] sm:$0xff]
      %v2337 = vld [vmem:[%s2325 + $0x58] sm:$0xff]
      %v2338 = vld [vmem:[%s2325 + $0x60] sm:$0xff]
      %v2339 = vld [vmem:[%s2325 + $0x68] sm:$0xff]
      %v2340 = vld [vmem:[%s2325 + $0x70] sm:$0xff]
      %v2341 = vld [vmem:[%s2325 + $0x78] sm:$0xff]
      %s2342 = scalar_lea.vmem [#allocation3], 128
      %v2343 = vld [vmem:[%s2342] sm:$0xff]
      %v2344 = vld [vmem:[%s2342 + $0x8] sm:$0xff]
      %v2345 = vld [vmem:[%s2342 + $0x10] sm:$0xff]
      %v2346 = vld [vmem:[%s2342 + $0x18] sm:$0xff]
      %v2347 = vld [vmem:[%s2342 + $0x20] sm:$0xff]
      %v2348 = vld [vmem:[%s2342 + $0x28] sm:$0xff]
      %v2349 = vld [vmem:[%s2342 + $0x30] sm:$0xff]
      %v2350 = vld [vmem:[%s2342 + $0x38] sm:$0xff]
      %v2351 = vld [vmem:[%s2342 + $0x40] sm:$0xff]
      %v2352 = vld [vmem:[%s2342 + $0x48] sm:$0xff]
      %v2353 = vld [vmem:[%s2342 + $0x50] sm:$0xff]
      %v2354 = vld [vmem:[%s2342 + $0x58] sm:$0xff]
      %v2355 = vld [vmem:[%s2342 + $0x60] sm:$0xff]
      %v2356 = vld [vmem:[%s2342 + $0x68] sm:$0xff]
      %v2357 = vld [vmem:[%s2342 + $0x70] sm:$0xff]
      %v2358 = vld [vmem:[%s2342 + $0x78] sm:$0xff]
      %v2359 = vmul.f32 %v2318, %v2326
      %v2360 = vmul.f32 %v2318, %v2327
      %v2361 = vmul.f32 %v2318, %v2328
      %v2362 = vmul.f32 %v2318, %v2329
      %v2363 = vmul.f32 %v2318, %v2330
      %v2364 = vmul.f32 %v2318, %v2331
      %v2365 = vmul.f32 %v2318, %v2332
      %v2366 = vmul.f32 %v2318, %v2333
      %v2367 = vmul.f32 %v2318, %v2334
      %v2368 = vmul.f32 %v2318, %v2335
      %v2369 = vmul.f32 %v2318, %v2336
      %v2370 = vmul.f32 %v2318, %v2337
      %v2371 = vmul.f32 %v2318, %v2338
      %v2372 = vmul.f32 %v2318, %v2339
      %v2373 = vmul.f32 %v2318, %v2340
      %v2374 = vmul.f32 %v2318, %v2341
      %v2375 = vsel %vm823, %v2359, 0.0
      %2376 = vadd.xlane.f32.xlu0 %v2375
      %v2377 = vpop.xlane.xlu0 %2376
      %v2378 = vsel %vm823, %v2360, 0.0
      %2379 = vadd.xlane.f32.xlu0 %v2378
      %v2380 = vpop.xlane.xlu0 %2379
      %v2381 = vsel %vm823, %v2361, 0.0
      %2382 = vadd.xlane.f32.xlu0 %v2381
      %v2383 = vpop.xlane.xlu0 %2382
      %v2384 = vsel %vm823, %v2362, 0.0
      %2385 = vadd.xlane.f32.xlu0 %v2384
      %v2386 = vpop.xlane.xlu0 %2385
      %v2387 = vsel %vm823, %v2363, 0.0
      %2388 = vadd.xlane.f32.xlu0 %v2387
      %v2389 = vpop.xlane.xlu0 %2388
      %v2390 = vsel %vm823, %v2364, 0.0
      %2391 = vadd.xlane.f32.xlu0 %v2390
      %v2392 = vpop.xlane.xlu0 %2391
      %v2393 = vsel %vm823, %v2365, 0.0
      %2394 = vadd.xlane.f32.xlu0 %v2393
      %v2395 = vpop.xlane.xlu0 %2394
      %v2396 = vsel %vm823, %v2366, 0.0
      %2397 = vadd.xlane.f32.xlu0 %v2396
      %v2398 = vpop.xlane.xlu0 %2397
      %v2399 = vsel %vm823, %v2367, 0.0
      %2400 = vadd.xlane.f32.xlu0 %v2399
      %v2401 = vpop.xlane.xlu0 %2400
      %v2402 = vsel %vm823, %v2368, 0.0
      %2403 = vadd.xlane.f32.xlu0 %v2402
      %v2404 = vpop.xlane.xlu0 %2403
      %v2405 = vsel %vm823, %v2369, 0.0
      %2406 = vadd.xlane.f32.xlu0 %v2405
      %v2407 = vpop.xlane.xlu0 %2406
      %v2408 = vsel %vm823, %v2370, 0.0
      %2409 = vadd.xlane.f32.xlu0 %v2408
      %v2410 = vpop.xlane.xlu0 %2409
      %v2411 = vsel %vm823, %v2371, 0.0
      %2412 = vadd.xlane.f32.xlu0 %v2411
      %v2413 = vpop.xlane.xlu0 %2412
      %v2414 = vsel %vm823, %v2372, 0.0
      %2415 = vadd.xlane.f32.xlu0 %v2414
      %v2416 = vpop.xlane.xlu0 %2415
      %v2417 = vsel %vm823, %v2373, 0.0
      %2418 = vadd.xlane.f32.xlu0 %v2417
      %v2419 = vpop.xlane.xlu0 %2418
      %v2420 = vsel %vm823, %v2374, 0.0
      %2421 = vadd.xlane.f32.xlu0 %v2420
      %v2422 = vpop.xlane.xlu0 %2421
      %v2439 = vlaneseq
      %v2440 = vshrl.u32 %v2439, 7
      %v2441 = vsub.s32 %v292, %v2440
      %v2442 = vrot.slane %v2377, %v2441
      %v2443 = vlaneseq
      %v2444 = vshrl.u32 %v2443, 7
      %v2445 = vsub.s32 %v292, %v2444
      %v2446 = vrot.slane %v2380, %v2445
      %v2447 = vlaneseq
      %v2448 = vshrl.u32 %v2447, 7
      %v2449 = vsub.s32 %v292, %v2448
      %v2450 = vrot.slane %v2383, %v2449
      %v2451 = vlaneseq
      %v2452 = vshrl.u32 %v2451, 7
      %v2453 = vsub.s32 %v292, %v2452
      %v2454 = vrot.slane %v2386, %v2453
      %v2455 = vlaneseq
      %v2456 = vshrl.u32 %v2455, 7
      %v2457 = vsub.s32 %v292, %v2456
      %v2458 = vrot.slane %v2389, %v2457
      %v2459 = vlaneseq
      %v2460 = vshrl.u32 %v2459, 7
      %v2461 = vsub.s32 %v292, %v2460
      %v2462 = vrot.slane %v2392, %v2461
      %v2463 = vlaneseq
      %v2464 = vshrl.u32 %v2463, 7
      %v2465 = vsub.s32 %v292, %v2464
      %v2466 = vrot.slane %v2395, %v2465
      %v2467 = vlaneseq
      %v2468 = vshrl.u32 %v2467, 7
      %v2469 = vsub.s32 %v292, %v2468
      %v2470 = vrot.slane %v2398, %v2469
      %v2471 = vlaneseq
      %v2472 = vshrl.u32 %v2471, 7
      %v2473 = vsub.s32 %v292, %v2472
      %v2474 = vrot.slane %v2401, %v2473
      %v2475 = vlaneseq
      %v2476 = vshrl.u32 %v2475, 7
      %v2477 = vsub.s32 %v292, %v2476
      %v2478 = vrot.slane %v2404, %v2477
      %v2479 = vlaneseq
      %v2480 = vshrl.u32 %v2479, 7
      %v2481 = vsub.s32 %v292, %v2480
      %v2482 = vrot.slane %v2407, %v2481
      %v2483 = vlaneseq
      %v2484 = vshrl.u32 %v2483, 7
      %v2485 = vsub.s32 %v292, %v2484
      %v2486 = vrot.slane %v2410, %v2485
      %v2487 = vlaneseq
      %v2488 = vshrl.u32 %v2487, 7
      %v2489 = vsub.s32 %v292, %v2488
      %v2490 = vrot.slane %v2413, %v2489
      %v2491 = vlaneseq
      %v2492 = vshrl.u32 %v2491, 7
      %v2493 = vsub.s32 %v292, %v2492
      %v2494 = vrot.slane %v2416, %v2493
      %v2495 = vlaneseq
      %v2496 = vshrl.u32 %v2495, 7
      %v2497 = vsub.s32 %v292, %v2496
      %v2498 = vrot.slane %v2419, %v2497
      %v2499 = vlaneseq
      %v2500 = vshrl.u32 %v2499, 7
      %v2501 = vsub.s32 %v292, %v2500
      %v2502 = vrot.slane %v2422, %v2501
      %v2503 = vsel %vm956, %v2446, %v2442
      %v2504 = vsel %vm958, %v2450, %v2503
      %v2505 = vsel %vm960, %v2454, %v2504
      %v2506 = vsel %vm962, %v2458, %v2505
      %v2507 = vsel %vm964, %v2462, %v2506
      %v2508 = vsel %vm966, %v2466, %v2507
      %v2509 = vsel %vm968, %v2470, %v2508
      %v2510 = vsel %vm956, %v2478, %v2474
      %v2511 = vsel %vm958, %v2482, %v2510
      %v2512 = vsel %vm960, %v2486, %v2511
      %v2513 = vsel %vm962, %v2490, %v2512
      %v2514 = vsel %vm964, %v2494, %v2513
      %v2515 = vsel %vm966, %v2498, %v2514
      %v2516 = vsel %vm968, %v2502, %v2515
      %v2519 = vsel %vm874, %v2509, -1e+30
      %v2520 = vsel %vm875, %v2516, -1e+30
      %v2521 = vsel %vm981, %v2519, -inf
      %v2522 = vsel %vm981, %v2520, -inf
      %v2523 = vmax.f32 %v2521, %v2522
      %v2524 = vrot.slane %v2523, 4
      %v2525 = vmax.f32 %v2523, %v2524
      %v2526 = vrot.slane %v2525, 2
      %v2527 = vmax.f32 %v2525, %v2526
      %v2528 = vrot.slane %v2527, 1
      %v2529 = vmax.f32 %v2527, %v2528
      %v2530 = vsub.f32 %v2519, %v2529
      %v2531 = vsub.f32 %v2520, %v2529
      %v2532 = vmul.f32 %v2530, 1.442695
      %v2533 = vpow.pop %v2532
      %v2534 = vmul.f32 %v2531, 1.442695
      %v2535 = vpow.pop %v2534
      %v2536 = vsel %vm981, %v2533, 0.0
      %v2537 = vsel %vm981, %v2535, 0.0
      %v2538 = vadd.f32 %v2536, %v2537
      %v2539 = vrot.slane %v2538, 4
      %v2540 = vadd.f32 %v2538, %v2539
      %v2541 = vrot.slane %v2540, 2
      %v2542 = vadd.f32 %v2540, %v2541
      %v2543 = vrot.slane %v2542, 1
      %v2544 = vadd.f32 %v2542, %v2543
      %v2545 = vrcp.pop %v2544
      %v2546 = vmul.f32 %v2533, %v2545
      %v2547 = vmul.f32 %v2535, %v2545
      %v2548 = vlaneseq
      %v2549 = vshrl.u32 %v2548, 7
      %v2550 = vsub.s32 0, %v2549
      %v2551 = vrot.slane %v2546, %v2550
      %2553 = vbcast.lane.b32.xlu0 %v2551, 256
      %v2554 = vpop.permute.xlu0 %2553
      %v2555 = vlaneseq
      %v2556 = vshrl.u32 %v2555, 7
      %v2557 = vsub.s32 1, %v2556
      %v2558 = vrot.slane %v2546, %v2557
      %2560 = vbcast.lane.b32.xlu0 %v2558, 256
      %v2561 = vpop.permute.xlu0 %2560
      %v2562 = vlaneseq
      %v2563 = vshrl.u32 %v2562, 7
      %v2564 = vsub.s32 2, %v2563
      %v2565 = vrot.slane %v2546, %v2564
      %2567 = vbcast.lane.b32.xlu0 %v2565, 256
      %v2568 = vpop.permute.xlu0 %2567
      %v2569 = vlaneseq
      %v2570 = vshrl.u32 %v2569, 7
      %v2571 = vsub.s32 3, %v2570
      %v2572 = vrot.slane %v2546, %v2571
      %2574 = vbcast.lane.b32.xlu0 %v2572, 256
      %v2575 = vpop.permute.xlu0 %2574
      %v2576 = vlaneseq
      %v2577 = vshrl.u32 %v2576, 7
      %v2578 = vsub.s32 4, %v2577
      %v2579 = vrot.slane %v2546, %v2578
      %2581 = vbcast.lane.b32.xlu0 %v2579, 256
      %v2582 = vpop.permute.xlu0 %2581
      %v2583 = vlaneseq
      %v2584 = vshrl.u32 %v2583, 7
      %v2585 = vsub.s32 5, %v2584
      %v2586 = vrot.slane %v2546, %v2585
      %2588 = vbcast.lane.b32.xlu0 %v2586, 256
      %v2589 = vpop.permute.xlu0 %2588
      %v2590 = vlaneseq
      %v2591 = vshrl.u32 %v2590, 7
      %v2592 = vsub.s32 6, %v2591
      %v2593 = vrot.slane %v2546, %v2592
      %2595 = vbcast.lane.b32.xlu0 %v2593, 256
      %v2596 = vpop.permute.xlu0 %2595
      %v2597 = vlaneseq
      %v2598 = vshrl.u32 %v2597, 7
      %v2599 = vsub.s32 7, %v2598
      %v2600 = vrot.slane %v2546, %v2599
      %2602 = vbcast.lane.b32.xlu0 %v2600, 256
      %v2603 = vpop.permute.xlu0 %2602
      %v2604 = vlaneseq
      %v2605 = vshrl.u32 %v2604, 7
      %v2606 = vsub.s32 0, %v2605
      %v2607 = vrot.slane %v2547, %v2606
      %2609 = vbcast.lane.b32.xlu0 %v2607, 256
      %v2610 = vpop.permute.xlu0 %2609
      %v2611 = vlaneseq
      %v2612 = vshrl.u32 %v2611, 7
      %v2613 = vsub.s32 1, %v2612
      %v2614 = vrot.slane %v2547, %v2613
      %2616 = vbcast.lane.b32.xlu0 %v2614, 256
      %v2617 = vpop.permute.xlu0 %2616
      %v2618 = vlaneseq
      %v2619 = vshrl.u32 %v2618, 7
      %v2620 = vsub.s32 2, %v2619
      %v2621 = vrot.slane %v2547, %v2620
      %2623 = vbcast.lane.b32.xlu0 %v2621, 256
      %v2624 = vpop.permute.xlu0 %2623
      %v2625 = vlaneseq
      %v2626 = vshrl.u32 %v2625, 7
      %v2627 = vsub.s32 3, %v2626
      %v2628 = vrot.slane %v2547, %v2627
      %2630 = vbcast.lane.b32.xlu0 %v2628, 256
      %v2631 = vpop.permute.xlu0 %2630
      %v2632 = vlaneseq
      %v2633 = vshrl.u32 %v2632, 7
      %v2634 = vsub.s32 4, %v2633
      %v2635 = vrot.slane %v2547, %v2634
      %2637 = vbcast.lane.b32.xlu0 %v2635, 256
      %v2638 = vpop.permute.xlu0 %2637
      %v2639 = vlaneseq
      %v2640 = vshrl.u32 %v2639, 7
      %v2641 = vsub.s32 5, %v2640
      %v2642 = vrot.slane %v2547, %v2641
      %2644 = vbcast.lane.b32.xlu0 %v2642, 256
      %v2645 = vpop.permute.xlu0 %2644
      %v2646 = vlaneseq
      %v2647 = vshrl.u32 %v2646, 7
      %v2648 = vsub.s32 6, %v2647
      %v2649 = vrot.slane %v2547, %v2648
      %2651 = vbcast.lane.b32.xlu0 %v2649, 256
      %v2652 = vpop.permute.xlu0 %2651
      %v2653 = vlaneseq
      %v2654 = vshrl.u32 %v2653, 7
      %v2655 = vsub.s32 7, %v2654
      %v2656 = vrot.slane %v2547, %v2655
      %2658 = vbcast.lane.b32.xlu0 %v2656, 256
      %v2659 = vpop.permute.xlu0 %2658
      %v2660 = vmul.f32 %v2554, %v2343
      %v2661 = vmul.f32 %v2561, %v2344
      %v2662 = vmul.f32 %v2568, %v2345
      %v2663 = vmul.f32 %v2575, %v2346
      %v2664 = vmul.f32 %v2582, %v2347
      %v2665 = vmul.f32 %v2589, %v2348
      %v2666 = vmul.f32 %v2596, %v2349
      %v2667 = vmul.f32 %v2603, %v2350
      %v2668 = vmul.f32 %v2610, %v2351
      %v2669 = vmul.f32 %v2617, %v2352
      %v2670 = vmul.f32 %v2624, %v2353
      %v2671 = vmul.f32 %v2631, %v2354
      %v2672 = vmul.f32 %v2638, %v2355
      %v2673 = vmul.f32 %v2645, %v2356
      %v2674 = vmul.f32 %v2652, %v2357
      %v2675 = vmul.f32 %v2659, %v2358
      %v2676 = vsel %vm823, %v2660, 0.0
      %v2677 = vsel %vm823, %v2661, 0.0
      %v2678 = vadd.f32 %v2676, %v2677
      %v2679 = vsel %vm823, %v2662, 0.0
      %v2680 = vadd.f32 %v2678, %v2679
      %v2681 = vsel %vm823, %v2663, 0.0
      %v2682 = vadd.f32 %v2680, %v2681
      %v2683 = vsel %vm823, %v2664, 0.0
      %v2684 = vadd.f32 %v2682, %v2683
      %v2685 = vsel %vm823, %v2665, 0.0
      %v2686 = vadd.f32 %v2684, %v2685
      %v2687 = vsel %vm823, %v2666, 0.0
      %v2688 = vadd.f32 %v2686, %v2687
      %v2689 = vsel %vm823, %v2667, 0.0
      %v2690 = vadd.f32 %v2688, %v2689
      %v2691 = vsel %vm823, %v2668, 0.0
      %v2692 = vadd.f32 %v2690, %v2691
      %v2693 = vsel %vm823, %v2669, 0.0
      %v2694 = vadd.f32 %v2692, %v2693
      %v2695 = vsel %vm823, %v2670, 0.0
      %v2696 = vadd.f32 %v2694, %v2695
      %v2697 = vsel %vm823, %v2671, 0.0
      %v2698 = vadd.f32 %v2696, %v2697
      %v2699 = vsel %vm823, %v2672, 0.0
      %v2700 = vadd.f32 %v2698, %v2699
      %v2701 = vsel %vm823, %v2673, 0.0
      %v2702 = vadd.f32 %v2700, %v2701
      %v2703 = vsel %vm823, %v2674, 0.0
      %v2704 = vadd.f32 %v2702, %v2703
      %v2705 = vsel %vm823, %v2675, 0.0
      %v2706 = vadd.f32 %v2704, %v2705
      %2723 = vrot.lane.b32.xlu0 %v2359, 64
      %v2724 = vpop.permute.xlu0 %2723
      %2725 = vrot.lane.b32.xlu0 %v2360, 64
      %v2726 = vpop.permute.xlu0 %2725
      %2727 = vrot.lane.b32.xlu0 %v2361, 64
      %v2728 = vpop.permute.xlu0 %2727
      %2729 = vrot.lane.b32.xlu0 %v2362, 64
      %v2730 = vpop.permute.xlu0 %2729
      %2731 = vrot.lane.b32.xlu0 %v2363, 64
      %v2732 = vpop.permute.xlu0 %2731
      %2733 = vrot.lane.b32.xlu0 %v2364, 64
      %v2734 = vpop.permute.xlu0 %2733
      %2735 = vrot.lane.b32.xlu0 %v2365, 64
      %v2736 = vpop.permute.xlu0 %2735
      %2737 = vrot.lane.b32.xlu0 %v2366, 64
      %v2738 = vpop.permute.xlu0 %2737
      %2739 = vrot.lane.b32.xlu0 %v2367, 64
      %v2740 = vpop.permute.xlu0 %2739
      %2741 = vrot.lane.b32.xlu0 %v2368, 64
      %v2742 = vpop.permute.xlu0 %2741
      %2743 = vrot.lane.b32.xlu0 %v2369, 64
      %v2744 = vpop.permute.xlu0 %2743
      %2745 = vrot.lane.b32.xlu0 %v2370, 64
      %v2746 = vpop.permute.xlu0 %2745
      %2747 = vrot.lane.b32.xlu0 %v2371, 64
      %v2748 = vpop.permute.xlu0 %2747
      %2749 = vrot.lane.b32.xlu0 %v2372, 64
      %v2750 = vpop.permute.xlu0 %2749
      %2751 = vrot.lane.b32.xlu0 %v2373, 64
      %v2752 = vpop.permute.xlu0 %2751
      %2753 = vrot.lane.b32.xlu0 %v2374, 64
      %v2754 = vpop.permute.xlu0 %2753
      %v2771 = vsel %vm823, %v2724, 0.0
      %2772 = vadd.xlane.f32.xlu0 %v2771
      %v2773 = vpop.xlane.xlu0 %2772
      %v2774 = vsel %vm823, %v2726, 0.0
      %2775 = vadd.xlane.f32.xlu0 %v2774
      %v2776 = vpop.xlane.xlu0 %2775
      %v2777 = vsel %vm823, %v2728, 0.0
      %2778 = vadd.xlane.f32.xlu0 %v2777
      %v2779 = vpop.xlane.xlu0 %2778
      %v2780 = vsel %vm823, %v2730, 0.0
      %2781 = vadd.xlane.f32.xlu0 %v2780
      %v2782 = vpop.xlane.xlu0 %2781
      %v2783 = vsel %vm823, %v2732, 0.0
      %2784 = vadd.xlane.f32.xlu0 %v2783
      %v2785 = vpop.xlane.xlu0 %2784
      %v2786 = vsel %vm823, %v2734, 0.0
      %2787 = vadd.xlane.f32.xlu0 %v2786
      %v2788 = vpop.xlane.xlu0 %2787
      %v2789 = vsel %vm823, %v2736, 0.0
      %2790 = vadd.xlane.f32.xlu0 %v2789
      %v2791 = vpop.xlane.xlu0 %2790
      %v2792 = vsel %vm823, %v2738, 0.0
      %2793 = vadd.xlane.f32.xlu0 %v2792
      %v2794 = vpop.xlane.xlu0 %2793
      %v2795 = vsel %vm823, %v2740, 0.0
      %2796 = vadd.xlane.f32.xlu0 %v2795
      %v2797 = vpop.xlane.xlu0 %2796
      %v2798 = vsel %vm823, %v2742, 0.0
      %2799 = vadd.xlane.f32.xlu0 %v2798
      %v2800 = vpop.xlane.xlu0 %2799
      %v2801 = vsel %vm823, %v2744, 0.0
      %2802 = vadd.xlane.f32.xlu0 %v2801
      %v2803 = vpop.xlane.xlu0 %2802
      %v2804 = vsel %vm823, %v2746, 0.0
      %2805 = vadd.xlane.f32.xlu0 %v2804
      %v2806 = vpop.xlane.xlu0 %2805
      %v2807 = vsel %vm823, %v2748, 0.0
      %2808 = vadd.xlane.f32.xlu0 %v2807
      %v2809 = vpop.xlane.xlu0 %2808
      %v2810 = vsel %vm823, %v2750, 0.0
      %2811 = vadd.xlane.f32.xlu0 %v2810
      %v2812 = vpop.xlane.xlu0 %2811
      %v2813 = vsel %vm823, %v2752, 0.0
      %2814 = vadd.xlane.f32.xlu0 %v2813
      %v2815 = vpop.xlane.xlu0 %2814
      %v2816 = vsel %vm823, %v2754, 0.0
      %2817 = vadd.xlane.f32.xlu0 %v2816
      %v2818 = vpop.xlane.xlu0 %2817
      %v2835 = vlaneseq
      %v2836 = vshrl.u32 %v2835, 7
      %v2837 = vsub.s32 %v292, %v2836
      %v2838 = vrot.slane %v2773, %v2837
      %v2839 = vlaneseq
      %v2840 = vshrl.u32 %v2839, 7
      %v2841 = vsub.s32 %v292, %v2840
      %v2842 = vrot.slane %v2776, %v2841
      %v2843 = vlaneseq
      %v2844 = vshrl.u32 %v2843, 7
      %v2845 = vsub.s32 %v292, %v2844
      %v2846 = vrot.slane %v2779, %v2845
      %v2847 = vlaneseq
      %v2848 = vshrl.u32 %v2847, 7
      %v2849 = vsub.s32 %v292, %v2848
      %v2850 = vrot.slane %v2782, %v2849
      %v2851 = vlaneseq
      %v2852 = vshrl.u32 %v2851, 7
      %v2853 = vsub.s32 %v292, %v2852
      %v2854 = vrot.slane %v2785, %v2853
      %v2855 = vlaneseq
      %v2856 = vshrl.u32 %v2855, 7
      %v2857 = vsub.s32 %v292, %v2856
      %v2858 = vrot.slane %v2788, %v2857
      %v2859 = vlaneseq
      %v2860 = vshrl.u32 %v2859, 7
      %v2861 = vsub.s32 %v292, %v2860
      %v2862 = vrot.slane %v2791, %v2861
      %v2863 = vlaneseq
      %v2864 = vshrl.u32 %v2863, 7
      %v2865 = vsub.s32 %v292, %v2864
      %v2866 = vrot.slane %v2794, %v2865
      %v2867 = vlaneseq
      %v2868 = vshrl.u32 %v2867, 7
      %v2869 = vsub.s32 %v292, %v2868
      %v2870 = vrot.slane %v2797, %v2869
      %v2871 = vlaneseq
      %v2872 = vshrl.u32 %v2871, 7
      %v2873 = vsub.s32 %v292, %v2872
      %v2874 = vrot.slane %v2800, %v2873
      %v2875 = vlaneseq
      %v2876 = vshrl.u32 %v2875, 7
      %v2877 = vsub.s32 %v292, %v2876
      %v2878 = vrot.slane %v2803, %v2877
      %v2879 = vlaneseq
      %v2880 = vshrl.u32 %v2879, 7
      %v2881 = vsub.s32 %v292, %v2880
      %v2882 = vrot.slane %v2806, %v2881
      %v2883 = vlaneseq
      %v2884 = vshrl.u32 %v2883, 7
      %v2885 = vsub.s32 %v292, %v2884
      %v2886 = vrot.slane %v2809, %v2885
      %v2887 = vlaneseq
      %v2888 = vshrl.u32 %v2887, 7
      %v2889 = vsub.s32 %v292, %v2888
      %v2890 = vrot.slane %v2812, %v2889
      %v2891 = vlaneseq
      %v2892 = vshrl.u32 %v2891, 7
      %v2893 = vsub.s32 %v292, %v2892
      %v2894 = vrot.slane %v2815, %v2893
      %v2895 = vlaneseq
      %v2896 = vshrl.u32 %v2895, 7
      %v2897 = vsub.s32 %v292, %v2896
      %v2898 = vrot.slane %v2818, %v2897
      %v2899 = vsel %vm956, %v2842, %v2838
      %v2900 = vsel %vm958, %v2846, %v2899
      %v2901 = vsel %vm960, %v2850, %v2900
      %v2902 = vsel %vm962, %v2854, %v2901
      %v2903 = vsel %vm964, %v2858, %v2902
      %v2904 = vsel %vm966, %v2862, %v2903
      %v2905 = vsel %vm968, %v2866, %v2904
      %v2906 = vsel %vm956, %v2874, %v2870
      %v2907 = vsel %vm958, %v2878, %v2906
      %v2908 = vsel %vm960, %v2882, %v2907
      %v2909 = vsel %vm962, %v2886, %v2908
      %v2910 = vsel %vm964, %v2890, %v2909
      %v2911 = vsel %vm966, %v2894, %v2910
      %v2912 = vsel %vm968, %v2898, %v2911
      %v2915 = vsel %vm874, %v2905, -1e+30
      %v2916 = vsel %vm875, %v2912, -1e+30
      %v2917 = vsel %vm981, %v2915, -inf
      %v2918 = vsel %vm981, %v2916, -inf
      %v2919 = vmax.f32 %v2917, %v2918
      %v2920 = vrot.slane %v2919, 4
      %v2921 = vmax.f32 %v2919, %v2920
      %v2922 = vrot.slane %v2921, 2
      %v2923 = vmax.f32 %v2921, %v2922
      %v2924 = vrot.slane %v2923, 1
      %v2925 = vmax.f32 %v2923, %v2924
      %v2926 = vsub.f32 %v2915, %v2925
      %v2927 = vsub.f32 %v2916, %v2925
      %v2928 = vmul.f32 %v2926, 1.442695
      %v2929 = vpow.pop %v2928
      %v2930 = vmul.f32 %v2927, 1.442695
      %v2931 = vpow.pop %v2930
      %v2932 = vsel %vm981, %v2929, 0.0
      %v2933 = vsel %vm981, %v2931, 0.0
      %v2934 = vadd.f32 %v2932, %v2933
      %v2935 = vrot.slane %v2934, 4
      %v2936 = vadd.f32 %v2934, %v2935
      %v2937 = vrot.slane %v2936, 2
      %v2938 = vadd.f32 %v2936, %v2937
      %v2939 = vrot.slane %v2938, 1
      %v2940 = vadd.f32 %v2938, %v2939
      %v2941 = vrcp.pop %v2940
      %v2942 = vmul.f32 %v2929, %v2941
      %v2943 = vmul.f32 %v2931, %v2941
      %v2944 = vlaneseq
      %v2945 = vshrl.u32 %v2944, 7
      %v2946 = vsub.s32 0, %v2945
      %v2947 = vrot.slane %v2942, %v2946
      %2949 = vbcast.lane.b32.xlu0 %v2947, 256
      %v2950 = vpop.permute.xlu0 %2949
      %v2951 = vlaneseq
      %v2952 = vshrl.u32 %v2951, 7
      %v2953 = vsub.s32 1, %v2952
      %v2954 = vrot.slane %v2942, %v2953
      %2956 = vbcast.lane.b32.xlu0 %v2954, 256
      %v2957 = vpop.permute.xlu0 %2956
      %v2958 = vlaneseq
      %v2959 = vshrl.u32 %v2958, 7
      %v2960 = vsub.s32 2, %v2959
      %v2961 = vrot.slane %v2942, %v2960
      %2963 = vbcast.lane.b32.xlu0 %v2961, 256
      %v2964 = vpop.permute.xlu0 %2963
      %v2965 = vlaneseq
      %v2966 = vshrl.u32 %v2965, 7
      %v2967 = vsub.s32 3, %v2966
      %v2968 = vrot.slane %v2942, %v2967
      %2970 = vbcast.lane.b32.xlu0 %v2968, 256
      %v2971 = vpop.permute.xlu0 %2970
      %v2972 = vlaneseq
      %v2973 = vshrl.u32 %v2972, 7
      %v2974 = vsub.s32 4, %v2973
      %v2975 = vrot.slane %v2942, %v2974
      %2977 = vbcast.lane.b32.xlu0 %v2975, 256
      %v2978 = vpop.permute.xlu0 %2977
      %v2979 = vlaneseq
      %v2980 = vshrl.u32 %v2979, 7
      %v2981 = vsub.s32 5, %v2980
      %v2982 = vrot.slane %v2942, %v2981
      %2984 = vbcast.lane.b32.xlu0 %v2982, 256
      %v2985 = vpop.permute.xlu0 %2984
      %v2986 = vlaneseq
      %v2987 = vshrl.u32 %v2986, 7
      %v2988 = vsub.s32 6, %v2987
      %v2989 = vrot.slane %v2942, %v2988
      %2991 = vbcast.lane.b32.xlu0 %v2989, 256
      %v2992 = vpop.permute.xlu0 %2991
      %v2993 = vlaneseq
      %v2994 = vshrl.u32 %v2993, 7
      %v2995 = vsub.s32 7, %v2994
      %v2996 = vrot.slane %v2942, %v2995
      %2998 = vbcast.lane.b32.xlu0 %v2996, 256
      %v2999 = vpop.permute.xlu0 %2998
      %v3000 = vlaneseq
      %v3001 = vshrl.u32 %v3000, 7
      %v3002 = vsub.s32 0, %v3001
      %v3003 = vrot.slane %v2943, %v3002
      %3005 = vbcast.lane.b32.xlu0 %v3003, 256
      %v3006 = vpop.permute.xlu0 %3005
      %v3007 = vlaneseq
      %v3008 = vshrl.u32 %v3007, 7
      %v3009 = vsub.s32 1, %v3008
      %v3010 = vrot.slane %v2943, %v3009
      %3012 = vbcast.lane.b32.xlu0 %v3010, 256
      %v3013 = vpop.permute.xlu0 %3012
      %v3014 = vlaneseq
      %v3015 = vshrl.u32 %v3014, 7
      %v3016 = vsub.s32 2, %v3015
      %v3017 = vrot.slane %v2943, %v3016
      %3019 = vbcast.lane.b32.xlu0 %v3017, 256
      %v3020 = vpop.permute.xlu0 %3019
      %v3021 = vlaneseq
      %v3022 = vshrl.u32 %v3021, 7
      %v3023 = vsub.s32 3, %v3022
      %v3024 = vrot.slane %v2943, %v3023
      %3026 = vbcast.lane.b32.xlu0 %v3024, 256
      %v3027 = vpop.permute.xlu0 %3026
      %v3028 = vlaneseq
      %v3029 = vshrl.u32 %v3028, 7
      %v3030 = vsub.s32 4, %v3029
      %v3031 = vrot.slane %v2943, %v3030
      %3033 = vbcast.lane.b32.xlu0 %v3031, 256
      %v3034 = vpop.permute.xlu0 %3033
      %v3035 = vlaneseq
      %v3036 = vshrl.u32 %v3035, 7
      %v3037 = vsub.s32 5, %v3036
      %v3038 = vrot.slane %v2943, %v3037
      %3040 = vbcast.lane.b32.xlu0 %v3038, 256
      %v3041 = vpop.permute.xlu0 %3040
      %v3042 = vlaneseq
      %v3043 = vshrl.u32 %v3042, 7
      %v3044 = vsub.s32 6, %v3043
      %v3045 = vrot.slane %v2943, %v3044
      %3047 = vbcast.lane.b32.xlu0 %v3045, 256
      %v3048 = vpop.permute.xlu0 %3047
      %v3049 = vlaneseq
      %v3050 = vshrl.u32 %v3049, 7
      %v3051 = vsub.s32 7, %v3050
      %v3052 = vrot.slane %v2943, %v3051
      %3054 = vbcast.lane.b32.xlu0 %v3052, 256
      %v3055 = vpop.permute.xlu0 %3054
      %v3056 = vmul.f32 %v2950, %v2343
      %v3057 = vmul.f32 %v2957, %v2344
      %v3058 = vmul.f32 %v2964, %v2345
      %v3059 = vmul.f32 %v2971, %v2346
      %v3060 = vmul.f32 %v2978, %v2347
      %v3061 = vmul.f32 %v2985, %v2348
      %v3062 = vmul.f32 %v2992, %v2349
      %v3063 = vmul.f32 %v2999, %v2350
      %v3064 = vmul.f32 %v3006, %v2351
      %v3065 = vmul.f32 %v3013, %v2352
      %v3066 = vmul.f32 %v3020, %v2353
      %v3067 = vmul.f32 %v3027, %v2354
      %v3068 = vmul.f32 %v3034, %v2355
      %v3069 = vmul.f32 %v3041, %v2356
      %v3070 = vmul.f32 %v3048, %v2357
      %v3071 = vmul.f32 %v3055, %v2358
      %v3072 = vsel %vm1533, %v3056, 0.0
      %v3073 = vsel %vm1533, %v3057, 0.0
      %v3074 = vadd.f32 %v3072, %v3073
      %v3075 = vsel %vm1533, %v3058, 0.0
      %v3076 = vadd.f32 %v3074, %v3075
      %v3077 = vsel %vm1533, %v3059, 0.0
      %v3078 = vadd.f32 %v3076, %v3077
      %v3079 = vsel %vm1533, %v3060, 0.0
      %v3080 = vadd.f32 %v3078, %v3079
      %v3081 = vsel %vm1533, %v3061, 0.0
      %v3082 = vadd.f32 %v3080, %v3081
      %v3083 = vsel %vm1533, %v3062, 0.0
      %v3084 = vadd.f32 %v3082, %v3083
      %v3085 = vsel %vm1533, %v3063, 0.0
      %v3086 = vadd.f32 %v3084, %v3085
      %v3087 = vsel %vm1533, %v3064, 0.0
      %v3088 = vadd.f32 %v3086, %v3087
      %v3089 = vsel %vm1533, %v3065, 0.0
      %v3090 = vadd.f32 %v3088, %v3089
      %v3091 = vsel %vm1533, %v3066, 0.0
      %v3092 = vadd.f32 %v3090, %v3091
      %v3093 = vsel %vm1533, %v3067, 0.0
      %v3094 = vadd.f32 %v3092, %v3093
      %v3095 = vsel %vm1533, %v3068, 0.0
      %v3096 = vadd.f32 %v3094, %v3095
      %v3097 = vsel %vm1533, %v3069, 0.0
      %v3098 = vadd.f32 %v3096, %v3097
      %v3099 = vsel %vm1533, %v3070, 0.0
      %v3100 = vadd.f32 %v3098, %v3099
      %v3101 = vsel %vm1533, %v3071, 0.0
      %v3102 = vadd.f32 %v3100, %v3101
      %v3103 = vsel %vm823, %v2706, %v3102
      %v3104 = vpack.c.bf16 %v3103, %v3103
      %s3105 = scalar_lea.vmem [#allocation13], 64
      %v3106 = vld [vmem:[%s3105] sm:$0xf]
      %v3107 = vld [vmem:[%s3105 + $0x4] sm:$0xf]
      %v3108 = vld [vmem:[%s3105 + $0x8] sm:$0xf]
      %v3109 = vld [vmem:[%s3105 + $0xc] sm:$0xf]
      %v3110 = vld [vmem:[%s3105 + $0x10] sm:$0xf]
      %v3111 = vld [vmem:[%s3105 + $0x14] sm:$0xf]
      %v3112 = vld [vmem:[%s3105 + $0x18] sm:$0xf]
      %v3113 = vld [vmem:[%s3105 + $0x1c] sm:$0xf]
      %v3114 = vld [vmem:[%s3105 + $0x20] sm:$0xf]
      %v3115 = vld [vmem:[%s3105 + $0x24] sm:$0xf]
      %v3116 = vld [vmem:[%s3105 + $0x28] sm:$0xf]
      %v3117 = vld [vmem:[%s3105 + $0x2c] sm:$0xf]
      %v3118 = vld [vmem:[%s3105 + $0x30] sm:$0xf]
      %v3119 = vld [vmem:[%s3105 + $0x34] sm:$0xf]
      %v3120 = vld [vmem:[%s3105 + $0x38] sm:$0xf]
      %v3121 = vld [vmem:[%s3105 + $0x3c] sm:$0xf]
      %v3138 = vunpack.c.l.b16 %v3106
      %v3139 = vunpack.c.l.b16 %v3107
      %v3140 = vunpack.c.l.b16 %v3108
      %v3141 = vunpack.c.l.b16 %v3109
      %v3142 = vunpack.c.l.b16 %v3110
      %v3143 = vunpack.c.l.b16 %v3111
      %v3144 = vunpack.c.l.b16 %v3112
      %v3145 = vunpack.c.l.b16 %v3113
      %v3146 = vunpack.c.l.b16 %v3114
      %v3147 = vunpack.c.l.b16 %v3115
      %v3148 = vunpack.c.l.b16 %v3116
      %v3149 = vunpack.c.l.b16 %v3117
      %v3150 = vunpack.c.l.b16 %v3118
      %v3151 = vunpack.c.l.b16 %v3119
      %v3152 = vunpack.c.l.b16 %v3120
      %v3153 = vunpack.c.l.b16 %v3121
      %v3154 = vpack.c.b16 %v3139, %v3138
      %v3155 = vpack.c.b16 %v3141, %v3140
      %v3156 = vpack.c.b16 %v3143, %v3142
      %v3157 = vpack.c.b16 %v3145, %v3144
      %v3158 = vpack.c.b16 %v3147, %v3146
      %v3159 = vpack.c.b16 %v3149, %v3148
      %v3160 = vpack.c.b16 %v3151, %v3150
      %v3161 = vpack.c.b16 %v3153, %v3152
      %3170 = vmatprep.subr.bf16.mxu0 0
      %3171 = vmatpush1.bf16.msra.mxu0 %v3161
      %3172 = vmatprep.subr.bf16.mxu0 0
      %3173 = vmatpush1.bf16.msra.mxu0 %v3160
      %3174 = vmatprep.subr.bf16.mxu0 0
      %3175 = vmatpush1.bf16.msra.mxu0 %v3159
      %3176 = vmatprep.subr.bf16.mxu0 0
      %3177 = vmatpush1.bf16.msra.mxu0 %v3158
      %3178 = vmatprep.subr.bf16.mxu0 0
      %3179 = vmatpush1.bf16.msra.mxu0 %v3157
      %3180 = vmatprep.subr.bf16.mxu0 0
      %3181 = vmatpush1.bf16.msra.mxu0 %v3156
      %3182 = vmatprep.subr.bf16.mxu0 0
      %3183 = vmatpush1.bf16.msra.mxu0 %v3155
      %3184 = vmatprep.subr.bf16.mxu0 0
      %3185 = vmatpush1.bf16.msra.mxu0 %v3154
      %3186 = vmatprep.subr.bf16.mxu0 0
      %3187 = vmatpush2.bf16.msra.mxu0 0
      %3188 = vmatprep.subr.bf16.mxu0 0
      %3189 = vmatpush2.bf16.msra.mxu0 0
      %3190 = vmatprep.subr.bf16.mxu0 0
      %3191 = vmatpush2.bf16.msra.mxu0 0
      %3192 = vmatprep.subr.bf16.mxu0 0
      %3193 = vmatpush2.bf16.msra.mxu0 0
      %3194 = vmatprep.subr.bf16.mxu0 0
      %3195 = vmatpush2.bf16.msra.mxu0 0
      %3196 = vmatprep.subr.bf16.mxu0 0
      %3197 = vmatpush2.bf16.msra.mxu0 0
      %3198 = vmatprep.subr.bf16.mxu0 0
      %3199 = vmatpush2.bf16.msra.mxu0 0
      %3200 = vmatprep.subr.bf16.mxu0 0
      %3201 = vmatpush2.bf16.msra.mxu0 0
      %3202 = vmatprep.mubr.bf16.mxu0 0
      %3203 = vmatmul.mubr.bf16.gmra.mxu0 %v3104
      %v3204 = vpop.f32.mrf.mxu0
      %v3205 = vadd.f32 0.0, %v3204
      %v3206 = vpop.f32.mrf.mxu0
      %v3207 = vpop.f32.mrf.mxu0
      %v3208 = vpop.f32.mrf.mxu0
      %3209 = vdwg.mxu0
      %v3210 = vadd.f32 %v2045, %v3205
      %s3211 = scalar_lea.vmem [#allocation19], 1
      %v3212 = vld [vmem:[%s3211] sm:$0x1]
      %s3213 = scalar_lea.vmem [#allocation21], 1
      %v3214 = vld [vmem:[%s3213] sm:$0x1]
      %3215 = vadd.xlane.f32.xlu0 %v3210
      %v3216 = vpop.xlane.xlu0 %3215
      %v3217 = vmul.f32 %v3216, %v501
      %v3218 = vsub.f32 %v3210, %v3217
      %v3219 = vmul.f32 %v3218, %v3218
      %3220 = vadd.xlane.f32.xlu0 %v3219
      %v3221 = vpop.xlane.xlu0 %3220
      %v3222 = vmul.f32 %v3221, %v501
      %v3223 = vadd.f32 %v3222, 1e-05
      %v3224 = vrsqrt.pop %v3223
      %v3225 = vmul.f32 %v3218, %v3224
      %v3227 = vlaneseq
      %v3228 = vshrl.u32 %v3227, 7
      %v3229 = vsub.s32 0, %v3228
      %v3230 = vrot.slane %v3212, %v3229
      %v3232 = vmul.f32 %v3225, %v3230
      %v3234 = vlaneseq
      %v3235 = vshrl.u32 %v3234, 7
      %v3236 = vsub.s32 0, %v3235
      %v3237 = vrot.slane %v3214, %v3236
      %v3239 = vadd.f32 %v3232, %v3237
      %v3240 = vpack.c.bf16 %v3239, %v3239
      %s3241 = scalar_lea.vmem [#allocation15], 128
      %v3242 = vld [vmem:[%s3241] sm:$0xff]
      %v3243 = vld [vmem:[%s3241 + $0x8] sm:$0xff]
      %v3244 = vld [vmem:[%s3241 + $0x10] sm:$0xff]
      %v3245 = vld [vmem:[%s3241 + $0x18] sm:$0xff]
      %v3246 = vld [vmem:[%s3241 + $0x20] sm:$0xff]
      %v3247 = vld [vmem:[%s3241 + $0x28] sm:$0xff]
      %v3248 = vld [vmem:[%s3241 + $0x30] sm:$0xff]
      %v3249 = vld [vmem:[%s3241 + $0x38] sm:$0xff]
      %v3250 = vld [vmem:[%s3241 + $0x40] sm:$0xff]
      %v3251 = vld [vmem:[%s3241 + $0x48] sm:$0xff]
      %v3252 = vld [vmem:[%s3241 + $0x50] sm:$0xff]
      %v3253 = vld [vmem:[%s3241 + $0x58] sm:$0xff]
      %v3254 = vld [vmem:[%s3241 + $0x60] sm:$0xff]
      %v3255 = vld [vmem:[%s3241 + $0x68] sm:$0xff]
      %v3256 = vld [vmem:[%s3241 + $0x70] sm:$0xff]
      %v3257 = vld [vmem:[%s3241 + $0x78] sm:$0xff]
      %s3258 = scalar_lea.vmem %s11, 2
      %v3259 = vld [vmem:[%s3258] sm:$0x3]
      %v3261 = vlaneseq
      %v3262 = vshrl.u32 %v3261, 7
      %v3263 = vsub.s32 0, %v3262
      %v3264 = vrot.slane %v3259, %v3263
      %v3265 = vlaneseq
      %v3266 = vshrl.u32 %v3265, 7
      %v3267 = vsub.s32 1, %v3266
      %v3268 = vrot.slane %v3259, %v3267
      %v3287 = vunpack.c.l.b16 %v3242
      %v3288 = vunpack.c.h.b16 %v3242
      %v3289 = vunpack.c.l.b16 %v3243
      %v3290 = vunpack.c.h.b16 %v3243
      %v3291 = vunpack.c.l.b16 %v3244
      %v3292 = vunpack.c.h.b16 %v3244
      %v3293 = vunpack.c.l.b16 %v3245
      %v3294 = vunpack.c.h.b16 %v3245
      %v3295 = vunpack.c.l.b16 %v3246
      %v3296 = vunpack.c.h.b16 %v3246
      %v3297 = vunpack.c.l.b16 %v3247
      %v3298 = vunpack.c.h.b16 %v3247
      %v3299 = vunpack.c.l.b16 %v3248
      %v3300 = vunpack.c.h.b16 %v3248
      %v3301 = vunpack.c.l.b16 %v3249
      %v3302 = vunpack.c.h.b16 %v3249
      %v3303 = vunpack.c.l.b16 %v3250
      %v3304 = vunpack.c.h.b16 %v3250
      %v3305 = vunpack.c.l.b16 %v3251
      %v3306 = vunpack.c.h.b16 %v3251
      %v3307 = vunpack.c.l.b16 %v3252
      %v3308 = vunpack.c.h.b16 %v3252
      %v3309 = vunpack.c.l.b16 %v3253
      %v3310 = vunpack.c.h.b16 %v3253
      %v3311 = vunpack.c.l.b16 %v3254
      %v3312 = vunpack.c.h.b16 %v3254
      %v3313 = vunpack.c.l.b16 %v3255
      %v3314 = vunpack.c.h.b16 %v3255
      %v3315 = vunpack.c.l.b16 %v3256
      %v3316 = vunpack.c.h.b16 %v3256
      %v3317 = vunpack.c.l.b16 %v3257
      %v3318 = vunpack.c.h.b16 %v3257
      %v3319 = vpack.c.b16 %v3289, %v3287
      %v3320 = vpack.c.b16 %v3290, %v3288
      %v3321 = vpack.c.b16 %v3293, %v3291
      %v3322 = vpack.c.b16 %v3294, %v3292
      %v3323 = vpack.c.b16 %v3297, %v3295
      %v3324 = vpack.c.b16 %v3298, %v3296
      %v3325 = vpack.c.b16 %v3301, %v3299
      %v3326 = vpack.c.b16 %v3302, %v3300
      %v3327 = vpack.c.b16 %v3305, %v3303
      %v3328 = vpack.c.b16 %v3306, %v3304
      %v3329 = vpack.c.b16 %v3309, %v3307
      %v3330 = vpack.c.b16 %v3310, %v3308
      %v3331 = vpack.c.b16 %v3313, %v3311
      %v3332 = vpack.c.b16 %v3314, %v3312
      %v3333 = vpack.c.b16 %v3317, %v3315
      %v3334 = vpack.c.b16 %v3318, %v3316
      %3351 = vmatprep.subr.bf16.mxu0 %v3334
      %3352 = vmatpush1.bf16.msra.mxu0 %v3333
      %3353 = vmatprep.subr.bf16.mxu0 %v3332
      %3354 = vmatpush1.bf16.msra.mxu0 %v3331
      %3355 = vmatprep.subr.bf16.mxu0 %v3330
      %3356 = vmatpush1.bf16.msra.mxu0 %v3329
      %3357 = vmatprep.subr.bf16.mxu0 %v3328
      %3358 = vmatpush1.bf16.msra.mxu0 %v3327
      %3359 = vmatprep.subr.bf16.mxu0 %v3326
      %3360 = vmatpush1.bf16.msra.mxu0 %v3325
      %3361 = vmatprep.subr.bf16.mxu0 %v3324
      %3362 = vmatpush1.bf16.msra.mxu0 %v3323
      %3363 = vmatprep.subr.bf16.mxu0 %v3322
      %3364 = vmatpush1.bf16.msra.mxu0 %v3321
      %3365 = vmatprep.subr.bf16.mxu0 %v3320
      %3366 = vmatpush1.bf16.msra.mxu0 %v3319
      %3367 = vmatprep.subr.bf16.mxu0 0
      %3368 = vmatpush2.bf16.msra.mxu0 0
      %3369 = vmatprep.subr.bf16.mxu0 0
      %3370 = vmatpush2.bf16.msra.mxu0 0
      %3371 = vmatprep.subr.bf16.mxu0 0
      %3372 = vmatpush2.bf16.msra.mxu0 0
      %3373 = vmatprep.subr.bf16.mxu0 0
      %3374 = vmatpush2.bf16.msra.mxu0 0
      %3375 = vmatprep.subr.bf16.mxu0 0
      %3376 = vmatpush2.bf16.msra.mxu0 0
      %3377 = vmatprep.subr.bf16.mxu0 0
      %3378 = vmatpush2.bf16.msra.mxu0 0
      %3379 = vmatprep.subr.bf16.mxu0 0
      %3380 = vmatpush2.bf16.msra.mxu0 0
      %3381 = vmatprep.subr.bf16.mxu0 0
      %3382 = vmatpush2.bf16.msra.mxu0 0
      %3383 = vmatprep.mubr.bf16.mxu0 0
      %3384 = vmatmul.mubr.bf16.gmra.mxu0 %v3240
      %v3385 = vpop.f32.mrf.mxu0
      %v3386 = vadd.f32 %v3264, %v3385
      %v3387 = vpop.f32.mrf.mxu0
      %v3388 = vadd.f32 %v3268, %v3387
      %v3389 = vpop.f32.mrf.mxu0
      %v3390 = vpop.f32.mrf.mxu0
      %3391 = vdwg.mxu0
      %v3392 = vmul.f32 %v3386, %v3386
      %v3393 = vmul.f32 %v3388, %v3388
      %v3394 = vmul.f32 %v3386, %v3392
      %v3395 = vmul.f32 %v3388, %v3393
      %v3396 = vmul.f32 %v3394, 0.044715
      %v3397 = vmul.f32 %v3395, 0.044715
      %v3398 = vadd.f32 %v3386, %v3396
      %v3399 = vadd.f32 %v3388, %v3397
      %v3400 = vmul.f32 %v3398, 0.7978846
      %v3401 = vmul.f32 %v3399, 0.7978846
      %v3402 = vtanh.pop %v3400
      %v3403 = vtanh.pop %v3401
      %v3404 = vadd.f32 %v3402, 1.0
      %v3405 = vadd.f32 %v3403, 1.0
      %v3406 = vmul.f32 %v3404, 0.5
      %v3407 = vmul.f32 %v3405, 0.5
      %v3408 = vmul.f32 %v3386, %v3406
      %v3409 = vmul.f32 %v3388, %v3407
      %v3410 = vpack.c.bf16 %v3408, %v3408
      %v3411 = vpack.c.bf16 %v3409, %v3409
      %s3412 = scalar_lea.vmem [#allocation16], 128
      %v3413 = vld [vmem:[%s3412] sm:$0xf]
      %v3414 = vld [vmem:[%s3412 + $0x4] sm:$0xf]
      %v3415 = vld [vmem:[%s3412 + $0x8] sm:$0xf]
      %v3416 = vld [vmem:[%s3412 + $0xc] sm:$0xf]
      %v3417 = vld [vmem:[%s3412 + $0x10] sm:$0xf]
      %v3418 = vld [vmem:[%s3412 + $0x14] sm:$0xf]
      %v3419 = vld [vmem:[%s3412 + $0x18] sm:$0xf]
      %v3420 = vld [vmem:[%s3412 + $0x1c] sm:$0xf]
      %v3421 = vld [vmem:[%s3412 + $0x20] sm:$0xf]
      %v3422 = vld [vmem:[%s3412 + $0x24] sm:$0xf]
      %v3423 = vld [vmem:[%s3412 + $0x28] sm:$0xf]
      %v3424 = vld [vmem:[%s3412 + $0x2c] sm:$0xf]
      %v3425 = vld [vmem:[%s3412 + $0x30] sm:$0xf]
      %v3426 = vld [vmem:[%s3412 + $0x34] sm:$0xf]
      %v3427 = vld [vmem:[%s3412 + $0x38] sm:$0xf]
      %v3428 = vld [vmem:[%s3412 + $0x3c] sm:$0xf]
      %v3429 = vld [vmem:[%s3412 + $0x40] sm:$0xf]
      %v3430 = vld [vmem:[%s3412 + $0x44] sm:$0xf]
      %v3431 = vld [vmem:[%s3412 + $0x48] sm:$0xf]
      %v3432 = vld [vmem:[%s3412 + $0x4c] sm:$0xf]
      %v3433 = vld [vmem:[%s3412 + $0x50] sm:$0xf]
      %v3434 = vld [vmem:[%s3412 + $0x54] sm:$0xf]
      %v3435 = vld [vmem:[%s3412 + $0x58] sm:$0xf]
      %v3436 = vld [vmem:[%s3412 + $0x5c] sm:$0xf]
      %v3437 = vld [vmem:[%s3412 + $0x60] sm:$0xf]
      %v3438 = vld [vmem:[%s3412 + $0x64] sm:$0xf]
      %v3439 = vld [vmem:[%s3412 + $0x68] sm:$0xf]
      %v3440 = vld [vmem:[%s3412 + $0x6c] sm:$0xf]
      %v3441 = vld [vmem:[%s3412 + $0x70] sm:$0xf]
      %v3442 = vld [vmem:[%s3412 + $0x74] sm:$0xf]
      %v3443 = vld [vmem:[%s3412 + $0x78] sm:$0xf]
      %v3444 = vld [vmem:[%s3412 + $0x7c] sm:$0xf]
      %v3477 = vunpack.c.l.b16 %v3413
      %v3478 = vunpack.c.l.b16 %v3414
      %v3479 = vunpack.c.l.b16 %v3415
      %v3480 = vunpack.c.l.b16 %v3416
      %v3481 = vunpack.c.l.b16 %v3417
      %v3482 = vunpack.c.l.b16 %v3418
      %v3483 = vunpack.c.l.b16 %v3419
      %v3484 = vunpack.c.l.b16 %v3420
      %v3485 = vunpack.c.l.b16 %v3421
      %v3486 = vunpack.c.l.b16 %v3422
      %v3487 = vunpack.c.l.b16 %v3423
      %v3488 = vunpack.c.l.b16 %v3424
      %v3489 = vunpack.c.l.b16 %v3425
      %v3490 = vunpack.c.l.b16 %v3426
      %v3491 = vunpack.c.l.b16 %v3427
      %v3492 = vunpack.c.l.b16 %v3428
      %v3493 = vunpack.c.l.b16 %v3429
      %v3494 = vunpack.c.l.b16 %v3430
      %v3495 = vunpack.c.l.b16 %v3431
      %v3496 = vunpack.c.l.b16 %v3432
      %v3497 = vunpack.c.l.b16 %v3433
      %v3498 = vunpack.c.l.b16 %v3434
      %v3499 = vunpack.c.l.b16 %v3435
      %v3500 = vunpack.c.l.b16 %v3436
      %v3501 = vunpack.c.l.b16 %v3437
      %v3502 = vunpack.c.l.b16 %v3438
      %v3503 = vunpack.c.l.b16 %v3439
      %v3504 = vunpack.c.l.b16 %v3440
      %v3505 = vunpack.c.l.b16 %v3441
      %v3506 = vunpack.c.l.b16 %v3442
      %v3507 = vunpack.c.l.b16 %v3443
      %v3508 = vunpack.c.l.b16 %v3444
      %v3509 = vpack.c.b16 %v3478, %v3477
      %v3510 = vpack.c.b16 %v3480, %v3479
      %v3511 = vpack.c.b16 %v3482, %v3481
      %v3512 = vpack.c.b16 %v3484, %v3483
      %v3513 = vpack.c.b16 %v3486, %v3485
      %v3514 = vpack.c.b16 %v3488, %v3487
      %v3515 = vpack.c.b16 %v3490, %v3489
      %v3516 = vpack.c.b16 %v3492, %v3491
      %v3517 = vpack.c.b16 %v3494, %v3493
      %v3518 = vpack.c.b16 %v3496, %v3495
      %v3519 = vpack.c.b16 %v3498, %v3497
      %v3520 = vpack.c.b16 %v3500, %v3499
      %v3521 = vpack.c.b16 %v3502, %v3501
      %v3522 = vpack.c.b16 %v3504, %v3503
      %v3523 = vpack.c.b16 %v3506, %v3505
      %v3524 = vpack.c.b16 %v3508, %v3507
      %3541 = vmatprep.subr.bf16.mxu0 0
      %3542 = vmatpush1.bf16.msra.mxu0 %v3516
      %3543 = vmatprep.subr.bf16.mxu0 0
      %3544 = vmatpush1.bf16.msra.mxu0 %v3515
      %3545 = vmatprep.subr.bf16.mxu0 0
      %3546 = vmatpush1.bf16.msra.mxu0 %v3514
      %3547 = vmatprep.subr.bf16.mxu0 0
      %3548 = vmatpush1.bf16.msra.mxu0 %v3513
      %3549 = vmatprep.subr.bf16.mxu0 0
      %3550 = vmatpush1.bf16.msra.mxu0 %v3512
      %3551 = vmatprep.subr.bf16.mxu0 0
      %3552 = vmatpush1.bf16.msra.mxu0 %v3511
      %3553 = vmatprep.subr.bf16.mxu0 0
      %3554 = vmatpush1.bf16.msra.mxu0 %v3510
      %3555 = vmatprep.subr.bf16.mxu0 0
      %3556 = vmatpush1.bf16.msra.mxu0 %v3509
      %3557 = vmatprep.subr.bf16.mxu0 0
      %3558 = vmatpush2.bf16.msra.mxu0 %v3524
      %3559 = vmatprep.subr.bf16.mxu0 0
      %3560 = vmatpush2.bf16.msra.mxu0 %v3523
      %3561 = vmatprep.subr.bf16.mxu0 0
      %3562 = vmatpush2.bf16.msra.mxu0 %v3522
      %3563 = vmatprep.subr.bf16.mxu0 0
      %3564 = vmatpush2.bf16.msra.mxu0 %v3521
      %3565 = vmatprep.subr.bf16.mxu0 0
      %3566 = vmatpush2.bf16.msra.mxu0 %v3520
      %3567 = vmatprep.subr.bf16.mxu0 0
      %3568 = vmatpush2.bf16.msra.mxu0 %v3519
      %3569 = vmatprep.subr.bf16.mxu0 0
      %3570 = vmatpush2.bf16.msra.mxu0 %v3518
      %3571 = vmatprep.subr.bf16.mxu0 0
      %3572 = vmatpush2.bf16.msra.mxu0 %v3517
      %3573 = vmatprep.mubr.bf16.mxu0 %v3411
      %3574 = vmatmul.mubr.bf16.gmra.mxu0 %v3410
      %v3575 = vpop.f32.mrf.mxu0
      %v3576 = vadd.f32 0.0, %v3575
      %v3577 = vpop.f32.mrf.mxu0
      %v3578 = vpop.f32.mrf.mxu0
      %v3579 = vpop.f32.mrf.mxu0
      %3580 = vdwg.mxu0
      %v3581 = vadd.f32 %v3210, %v3576
      %s3582 = scalar_lea.vmem [#allocation18], 1
      %v3583 = vld [vmem:[%s3582] sm:$0x1]
      %v3585 = vlaneseq
      %v3586 = vshrl.u32 %v3585, 7
      %v3587 = vsub.s32 0, %v3586
      %v3588 = vrot.slane %v3583, %v3587
      %v3590 = vadd.f32 %v3581, %v3588
      %s3591 = sadd.s32 %s302, 1
      %p3592 = scmp.ge.s32.totalorder %s3591, %s222
      // Predicated region
      $region133: #{_decode_batch.1} parent=129 // pred_check
        %p3593 = pneg %p3592
      $region134: #{_decode_batch.1} parent=129 // pred_check_branch
        %3595 = sbr.rel (%p3593) target = $region136
      $region135: #{_decode_batch.1} parent=129 // pred_region
        %v3596 = vld [vmem:[#allocation22] sm:$0x1]
        %v3597 = vld [vmem:[#allocation24] sm:$0x1]
        %3598 = vadd.xlane.f32.xlu0 %v3590
        %v3599 = vpop.xlane.xlu0 %3598
        %v3600 = vmul.f32 %v3599, %v501
        %v3601 = vsub.f32 %v3590, %v3600
        %v3602 = vmul.f32 %v3601, %v3601
        %3603 = vadd.xlane.f32.xlu0 %v3602
        %v3604 = vpop.xlane.xlu0 %3603
        %v3605 = vmul.f32 %v3604, %v501
        %v3606 = vadd.f32 %v3605, 1e-05
        %v3607 = vrsqrt.pop %v3606
        %v3608 = vmul.f32 %v3601, %v3607
        %v3610 = vlaneseq
        %v3611 = vshrl.u32 %v3610, 7
        %v3612 = vsub.s32 0, %v3611
        %v3613 = vrot.slane %v3596, %v3612
        %v3615 = vmul.f32 %v3608, %v3613
        %v3617 = vlaneseq
        %v3618 = vshrl.u32 %v3617, 7
        %v3619 = vsub.s32 0, %v3618
        %v3620 = vrot.slane %v3597, %v3619
        %v3622 = vadd.f32 %v3615, %v3620
        %v3623 = vpack.c.bf16 %v3622, %v3622
        %v3624 = vld [vmem:[#allocation25] sm:$0xff]
        %v3625 = vld [vmem:[#allocation25 + $0x8] sm:$0xff]
        %v3626 = vld [vmem:[#allocation25 + $0x10] sm:$0xff]
        %v3627 = vld [vmem:[#allocation25 + $0x18] sm:$0xff]
        %v3628 = vld [vmem:[#allocation25 + $0x20] sm:$0xff]
        %v3629 = vld [vmem:[#allocation25 + $0x28] sm:$0xff]
        %v3630 = vld [vmem:[#allocation25 + $0x30] sm:$0xff]
        %v3631 = vld [vmem:[#allocation25 + $0x38] sm:$0xff]
        %v3632 = vld [vmem:[#allocation25 + $0x40] sm:$0xff]
        %v3633 = vld [vmem:[#allocation25 + $0x48] sm:$0xff]
        %v3634 = vld [vmem:[#allocation25 + $0x50] sm:$0xff]
        %v3635 = vld [vmem:[#allocation25 + $0x58] sm:$0xff]
        %v3636 = vld [vmem:[#allocation25 + $0x60] sm:$0xff]
        %v3637 = vld [vmem:[#allocation25 + $0x68] sm:$0xff]
        %v3638 = vld [vmem:[#allocation25 + $0x70] sm:$0xff]
        %v3639 = vld [vmem:[#allocation25 + $0x78] sm:$0xff]
        %s3640 = smul.u32 %s302, 2
        %s3641 = smul.addr %s3640, 8
        %s3642 = scalar_lea.vmem [#allocation7], %s3641
        %v3643 = vld [vmem:[%s3642] sm:$0xff]
        %v3644 = vld [vmem:[%s3642 + $0x8] sm:$0xff]
        %v3661 = vunpack.c.l.b16 %v3624
        %v3662 = vunpack.c.h.b16 %v3624
        %v3663 = vunpack.c.l.b16 %v3625
        %v3664 = vunpack.c.h.b16 %v3625
        %v3665 = vunpack.c.l.b16 %v3626
        %v3666 = vunpack.c.h.b16 %v3626
        %v3667 = vunpack.c.l.b16 %v3627
        %v3668 = vunpack.c.h.b16 %v3627
        %v3669 = vunpack.c.l.b16 %v3628
        %v3670 = vunpack.c.h.b16 %v3628
        %v3671 = vunpack.c.l.b16 %v3629
        %v3672 = vunpack.c.h.b16 %v3629
        %v3673 = vunpack.c.l.b16 %v3630
        %v3674 = vunpack.c.h.b16 %v3630
        %v3675 = vunpack.c.l.b16 %v3631
        %v3676 = vunpack.c.h.b16 %v3631
        %v3677 = vunpack.c.l.b16 %v3632
        %v3678 = vunpack.c.h.b16 %v3632
        %v3679 = vunpack.c.l.b16 %v3633
        %v3680 = vunpack.c.h.b16 %v3633
        %v3681 = vunpack.c.l.b16 %v3634
        %v3682 = vunpack.c.h.b16 %v3634
        %v3683 = vunpack.c.l.b16 %v3635
        %v3684 = vunpack.c.h.b16 %v3635
        %v3685 = vunpack.c.l.b16 %v3636
        %v3686 = vunpack.c.h.b16 %v3636
        %v3687 = vunpack.c.l.b16 %v3637
        %v3688 = vunpack.c.h.b16 %v3637
        %v3689 = vunpack.c.l.b16 %v3638
        %v3690 = vunpack.c.h.b16 %v3638
        %v3691 = vunpack.c.l.b16 %v3639
        %v3692 = vunpack.c.h.b16 %v3639
        %v3693 = vpack.c.b16 %v3663, %v3661
        %v3694 = vpack.c.b16 %v3664, %v3662
        %v3695 = vpack.c.b16 %v3667, %v3665
        %v3696 = vpack.c.b16 %v3668, %v3666
        %v3697 = vpack.c.b16 %v3671, %v3669
        %v3698 = vpack.c.b16 %v3672, %v3670
        %v3699 = vpack.c.b16 %v3675, %v3673
        %v3700 = vpack.c.b16 %v3676, %v3674
        %v3701 = vpack.c.b16 %v3679, %v3677
        %v3702 = vpack.c.b16 %v3680, %v3678
        %v3703 = vpack.c.b16 %v3683, %v3681
        %v3704 = vpack.c.b16 %v3684, %v3682
        %v3705 = vpack.c.b16 %v3687, %v3685
        %v3706 = vpack.c.b16 %v3688, %v3686
        %v3707 = vpack.c.b16 %v3691, %v3689
        %v3708 = vpack.c.b16 %v3692, %v3690
        %3725 = vmatprep.subr.bf16.mxu0 %v3708
        %3726 = vmatpush1.bf16.msra.mxu0 %v3707
        %3727 = vmatprep.subr.bf16.mxu0 %v3706
        %3728 = vmatpush1.bf16.msra.mxu0 %v3705
        %3729 = vmatprep.subr.bf16.mxu0 %v3704
        %3730 = vmatpush1.bf16.msra.mxu0 %v3703
        %3731 = vmatprep.subr.bf16.mxu0 %v3702
        %3732 = vmatpush1.bf16.msra.mxu0 %v3701
        %3733 = vmatprep.subr.bf16.mxu0 %v3700
        %3734 = vmatpush1.bf16.msra.mxu0 %v3699
        %3735 = vmatprep.subr.bf16.mxu0 %v3698
        %3736 = vmatpush1.bf16.msra.mxu0 %v3697
        %3737 = vmatprep.subr.bf16.mxu0 %v3696
        %3738 = vmatpush1.bf16.msra.mxu0 %v3695
        %3739 = vmatprep.subr.bf16.mxu0 %v3694
        %3740 = vmatpush1.bf16.msra.mxu0 %v3693
        %3741 = vmatprep.subr.bf16.mxu0 0
        %3742 = vmatpush2.bf16.msra.mxu0 0
        %3743 = vmatprep.subr.bf16.mxu0 0
        %3744 = vmatpush2.bf16.msra.mxu0 0
        %3745 = vmatprep.subr.bf16.mxu0 0
        %3746 = vmatpush2.bf16.msra.mxu0 0
        %3747 = vmatprep.subr.bf16.mxu0 0
        %3748 = vmatpush2.bf16.msra.mxu0 0
        %3749 = vmatprep.subr.bf16.mxu0 0
        %3750 = vmatpush2.bf16.msra.mxu0 0
        %3751 = vmatprep.subr.bf16.mxu0 0
        %3752 = vmatpush2.bf16.msra.mxu0 0
        %3753 = vmatprep.subr.bf16.mxu0 0
        %3754 = vmatpush2.bf16.msra.mxu0 0
        %3755 = vmatprep.subr.bf16.mxu0 0
        %3756 = vmatpush2.bf16.msra.mxu0 0
        %3757 = vmatprep.mubr.bf16.mxu0 0
        %3758 = vmatmul.mubr.bf16.gmra.mxu0 %v3623
        %v3759 = vpop.f32.mrf.mxu0
        %v3760 = vadd.f32 %v3643, %v3759
        %v3761 = vpop.f32.mrf.mxu0
        %v3762 = vadd.f32 %v3644, %v3761
        %v3763 = vpop.f32.mrf.mxu0
        %v3764 = vpop.f32.mrf.mxu0
        %3765 = vdwg.mxu0
        %v3766 = vmax.f32 %v3760, %v3762
        %3767 = vmax.xlane.f32.xlu0 %v3766
        %v3768 = vpop.xlane.xlu0 %3767
        %vm3769 = vcmp.ge.f32.partialorder %v3760, %v3768
        %vm3770 = vcmp.ge.f32.partialorder %v3762, %v3768
        %v3771 = vsel %vm3769, %v294, -1.0
        %v3772 = vsel %vm3770, %v295, -1.0
        %v3773 = vmax.f32 %v3771, %v3772
        %3774 = vmax.xlane.f32.xlu0 %v3773
        %v3775 = vpop.xlane.xlu0 %3774
        %v3776 = vcvt.f32.s32.to.zero.pseudo %v3775
        %vm3777 = vcmask 7168
        %3778 = vst.msk [vmem:[#allocation4] sm:$0xff] %vm3777, %v3776
      $region136: #{_decode_batch.1} parent=129 // pred_fallthru
        _
      %v3779 = vld [vmem:[#allocation4] sm:$0xff]
      %v3780 = vstv %s3591
      %vm3781 = vcmp.eq.s32.totalorder %v292, %v3780
      %v3782 = vsel %vm3781, %v299, 0
      %vm3783 = vcmask 130048
      %v3784 = vsel %vm3783, %v3782, 0
      %v3785 = vand.u32 %v3784, 65535
      %v3786 = vshrl.u32 %v3784, 16
      %v3787 = vcvt.s32.f32 %v3785
      %v3788 = vcvt.s32.f32 %v3786
      %3789 = vadd.xlane.f32.xlu0 %v3787
      %v3790 = vpop.xlane.xlu0 %3789
      %3791 = vadd.xlane.f32.xlu0 %v3788
      %v3792 = vpop.xlane.xlu0 %3791
      %v3793 = vcvt.f32.s32 %v3790
      %v3794 = vcvt.f32.s32 %v3792
      %v3795 = vshll.u32 %v3794, 16
      %v3796 = vadd.s32 %v3795, %v3793
      %vm3797 = vcmp.lt.s32.totalorder %v3780, %v300
      %v3798 = vsel %vm3797, %v3796, %v3779
    $region130: #{_decode_batch.1} parent=1 // loop_footer
      %s306 = sadd.s32 1, %s302
    $region131: #{_decode_batch.1} parent=1 // loop_footer_branch
      %301 = sbr.rel target = $region127
    $region132: #{_decode_batch.1} parent=1 // loop_exit
      _
    %vm3799 = vcmp.eq.s32.totalorder %v292, 15
    %3800 = vset.pattern.permute.xlu0 0
    %3801 = vperm.xlu0 %3800, %v307
    %v3802 = vpop.permute.xlu0 %3801
    %v3803 = vsel %vm3799, %v3802, %v308
    %vm3804 = vcmask 130048
    %3805 = vst.msk [vmem:[#allocation27] sm:$0xff] %vm3804, %v3803
    // Predicated region
    $region137: #{_decode_batch.1} parent=1 // pred_check
      _
    $region138: #{_decode_batch.1} parent=1 // pred_check_branch
      %3807 = sbr.rel (0) target = $region140
    $region139: #{_decode_batch.1} parent=1 // pred_region
      %s3809 = ssub.s32 128, 128
      %3810 = vsyncadd [#allocation9], %s3809
      %s3812 = sshll.u32 [#allocation27], 4
      %s3813 = int_to_ptr.vmem [resolvable:$true] %s3812
      %3815 = dma.vmem_to_hbm [thread:$0]  %s3813, 128, %s19, [#allocation9]
    $region140: #{_decode_batch.1} parent=1 // pred_fallthru
      _
    // Predicated region
    $region141: #{_decode_batch.1} parent=1 // pred_check
      _
    $region142: #{_decode_batch.1} parent=1 // pred_check_branch
      %3817 = sbr.rel (0) target = $region144
    $region143: #{_decode_batch.1} parent=1 // pred_region
      %3818 = dma.done [#allocation9], 128
    $region144: #{_decode_batch.1} parent=1 // pred_fallthru
      _
    %3819 = vsyncpa [#allocation8], 1
    %3820 = vsyncpa [#allocation11], 1
    %3821 = vsyncpa [#allocation14], 1
    %3822 = vsyncpa [#allocation17], 1
    %3823 = vsyncpa [#allocation20], 1
    %3824 = vsyncpa [#allocation23], 1
    %3825 = vsyncpa [#allocation26], 1
    %3826 = vsyncpa [#allocation9], 1

</llo_original>
